<compile_context>
chip_gen: v6e
topology: v6e:2x2x1
jax: 0.10.0
libtpu: 0.0.40
codegen_flags: <defaults>
</compile_context>

<pallas_src>
import functools

import jax
import jax.numpy as jnp
import numpy as np
from jax import lax
from jax.experimental import pallas as pl
from jax.experimental.pallas import tpu as pltpu

LRELU_SLOPE = 0.2


def _lrelu(v):
    return jnp.where(v >= 0, v, LRELU_SLOPE * v)


# -----------------------------------------------------------------------------
# Fused kernel (one grid step == one batch sample), channels-last.
#   w_ref   : (1, D)    f32   latent row (shared across batch, per the module)
#   w1_ref  : (D, 4C)   bf16  [w1s.T | w1h.T | (fc_w*w_lrmul).T]
#   b1_ref  : (1, 4C)   f32   [0 | 0 | fc_b*b_lrmul]
#   w2_ref  : (C, 2C)   bf16  [w2s.T | w2h.T]
#   nw_ref  : (1, C)    f32   ApplyNoise.weight
#   x_ref   : (1, HW, C) f32  activation block (channels-last)
#   rnd_ref : (1, HW, 1) f32  the torch.randn(N,1,H,W) noise (pre-generated)
#   o_ref   : (1, HW, C) f32
# -----------------------------------------------------------------------------
def fused_epilogue_kernel(w_ref, w1_ref, b1_ref, w2_ref, nw_ref, x_ref, rnd_ref,
                          o_ref, *, C, use_pixel_norm, use_instance_norm,
                          use_styles, eps):
    D = w_ref.shape[1]

    # ---- latent-derived parameters, row-oriented ((1, C) lane rows) ----------
    w8 = jnp.broadcast_to(w_ref[...], (8, D)).astype(jnp.bfloat16)        # (8, D)
    h1 = jnp.dot(w8, w1_ref[...], preferred_element_type=jnp.float32)     # (8, 4C)
    h1 = _lrelu(h1 + b1_ref[...])                # bias broadcasts over the 8 rows

    s0 = h1[0:1, 2 * C:3 * C]                    # ApplyStyle style[:, 0]  (1, C)
    s1 = h1[0:1, 3 * C:4 * C]                    # ApplyStyle style[:, 1]  (1, C)

    # Second conv1x1 of the ApplyNoise scale / shift chains (no activation).
    hs = h1[:, 0:C].astype(jnp.bfloat16)         # (8, C)
    hh = h1[:, C:2 * C].astype(jnp.bfloat16)
    scale = jnp.dot(hs, w2_ref[:, 0:C],
                    preferred_element_type=jnp.float32)[0:1]              # (1, C)
    shift = jnp.dot(hh, w2_ref[:, C:2 * C],
                    preferred_element_type=jnp.float32)[0:1]              # (1, C)

    # Fold ApplyNoise.weight into the latent-derived scale once per channel.
    snw = scale * nw_ref[...]                                             # (1, C)

    # ---- per-pixel epilogue: HW on sublanes, C=512 lane-dense on lanes -------
    x = x_ref[...]                               # (1, HW, C)
    rnd = rnd_ref[...]                           # (1, HW, 1)

    # ApplyNoise: x + scale(w)*weight*randn + shift(w)
    x = x + snw[None] * rnd + shift[None]

    # LeakyReLU(0.2)
    x = _lrelu(x)

    if use_pixel_norm:
        # PixelNorm: normalize over channels (minor axis -> lane reduction)
        x = x * lax.rsqrt(jnp.mean(x * x, axis=2, keepdims=True) + eps)

    if use_instance_norm:
        # InstanceNorm: center + normalize over spatial (sublane reduction),
        # per sample (this grid step owns the whole sample's HW).
        x = x - jnp.mean(x, axis=1, keepdims=True)
        x = x * lax.rsqrt(jnp.mean(x * x, axis=1, keepdims=True) + eps)

    if use_styles:
        # ApplyStyle: x * (style[:,0] + 1) + style[:,1]
        x = x * (s0[None] + 1.0) + s1[None]

    o_ref[...] = x


# -----------------------------------------------------------------------------
# Wrapper (NCHW in, NCHW out; one small transpose each way for channels-last)
# -----------------------------------------------------------------------------
def layer_epilogue(x_nchw, w_t, rnd, params, *, use_pixel_norm=True,
                   use_instance_norm=True, use_styles=True, eps=1e-8):
    N, C, H, W = x_nchw.shape
    HW = H * W
    D = int(w_t.size)
    # ApplyNoise hardcodes w_t.view(1, 512, 1, 1): channels == dlatent == 512.
    assert C == 512 and D == 512, "LayerEpilogue requires channels == dlatent == 512"

    # Concatenate + transpose + cast weights once (tiny XLA ops, fused under jit).
    w1T = jnp.concatenate(
        [params["w1s"].T, params["w1h"].T, (params["fc_w"] * params["w_lrmul"]).T],
        axis=1).astype(jnp.bfloat16)                                   # (D, 4C)
    b1 = jnp.concatenate(
        [jnp.zeros((2 * C,), jnp.float32),
         (params["fc_b"] * params["b_lrmul"]).astype(jnp.float32)]
    ).reshape(1, 4 * C)                                                # (1, 4C)
    w2T = jnp.concatenate([params["w2s"].T, params["w2h"].T],
                          axis=1).astype(jnp.bfloat16)                 # (C, 2C)

    w_row = w_t.reshape(1, D).astype(jnp.float32)
    nw_row = params["noise_weight"].reshape(1, C).astype(jnp.float32)

    # Channels-last so C=512 sits on the lane (minor) axis.
    x_cl = jnp.transpose(x_nchw.reshape(N, C, HW), (0, 2, 1))          # (N, HW, C)
    rnd_cl = rnd.reshape(N, HW, 1).astype(jnp.float32)

    kernel = functools.partial(
        fused_epilogue_kernel, C=C, use_pixel_norm=use_pixel_norm,
        use_instance_norm=use_instance_norm, use_styles=use_styles, eps=eps)

    const2d = lambda n: (0, 0)
    out_cl = pl.pallas_call(
        kernel,
        grid=(N,),
        in_specs=[
            pl.BlockSpec((1, D), const2d),                 # latent row
            pl.BlockSpec((D, 4 * C), const2d),             # layer-1 weights (resident)
            pl.BlockSpec((1, 4 * C), const2d),             # layer-1 bias
            pl.BlockSpec((C, 2 * C), const2d),             # layer-2 weights (resident)
            pl.BlockSpec((1, C), const2d),                 # ApplyNoise.weight
            pl.BlockSpec((1, HW, C), lambda n: (n, 0, 0)),  # x (channels-last)
            pl.BlockSpec((1, HW, 1), lambda n: (n, 0, 0)),  # pre-generated randn
        ],
        out_specs=pl.BlockSpec((1, HW, C), lambda n: (n, 0, 0)),
        out_shape=jax.ShapeDtypeStruct((N, HW, C), jnp.float32),
        compiler_params=pltpu.CompilerParams(
            dimension_semantics=("parallel",),             # megacore split on v7x
            vmem_limit_bytes=32 * 1024 * 1024),            # valid on v5e/v6e/v7x
    )(w_row, w1T, b1, w2T, nw_row, x_cl, rnd_cl)

    return jnp.transpose(out_cl, (0, 2, 1)).reshape(N, C, H, W)


# -----------------------------------------------------------------------------
# Pure-JAX reference (mirrors the PyTorch forward in NCHW).  Latent-path matmuls
# use bf16 operands with f32 accumulation, matching the kernel's precision.
# -----------------------------------------------------------------------------
def layer_epilogue_reference(x, w_t, rnd, params, *, use_pixel_norm=True,
                             use_instance_norm=True, use_styles=True, eps=1e-8):
    N, C, H, W = x.shape
    bf = jnp.bfloat16
    w_row = w_t.reshape(1, -1)

    def mm(a, b):
        return jnp.dot(a.astype(bf), b.astype(bf),
                       preferred_element_type=jnp.float32)

    # ApplyNoise.scale / .shift: Conv1x1 -> LeakyReLU -> Conv1x1 applied to w_t
    h = _lrelu(mm(w_row, params["w1s"].T))
    scale = mm(h, params["w2s"].T).reshape(1, C, 1, 1)
    h = _lrelu(mm(w_row, params["w1h"].T))
    shift = mm(h, params["w2h"].T).reshape(1, C, 1, 1)

    noise = params["noise_weight"].reshape(1, C, 1, 1) * rnd.reshape(N, 1, H, W)
    noise = scale * noise + shift
    x = x + noise
    x = _lrelu(x)
    if use_pixel_norm:
        x = x * lax.rsqrt(jnp.mean(x * x, axis=1, keepdims=True) + eps)
    if use_instance_norm:
        x = x - jnp.mean(x, axis=(2, 3), keepdims=True)
        x = x * lax.rsqrt(jnp.mean(x * x, axis=(2, 3), keepdims=True) + eps)
    if use_styles:
        # FC (ApplyStyle.linear) applies LeakyReLU after the linear, per module.
        style = _lrelu(mm(w_row, (params["fc_w"] * params["w_lrmul"]).T)
                       + params["fc_b"] * params["b_lrmul"])
        style = style.reshape(1, 2, C, 1, 1)
        x = x * (style[:, 0] + 1.0) + style[:, 1]
    return x


if __name__ == "__main__":
    C = 512            # forced by ApplyNoise's hardcoded w_t.view(1, 512, 1, 1)
    D = 512            # dlatent_size
    N, H, W = 2, 4, 4
    use_wscale = True
    lrmul = 1.0

    key = jax.random.PRNGKey(0)
    kx, kw, kr, k1, k2, k3, k4, k5, knw = jax.random.split(key, 9)

    # deterministic synthetic parameter init (shapes per module __init__)
    conv_std = (2.0 / C) ** 0.5
    he_std = 1.0 * D ** (-0.5)                     # FC gain = 1.0 in ApplyStyle
    if use_wscale:
        init_std, w_lrmul = 1.0 / lrmul, he_std * lrmul
    else:
        init_std, w_lrmul = he_std / lrmul, lrmul

    params = dict(
        # module init is torch.zeros(channels); use a small non-zero value here so
        # the scale(w_t) branch of ApplyNoise is actually exercised numerically.
        noise_weight=jax.random.normal(knw, (C,), jnp.float32) * 0.1,
        w1s=jax.random.normal(k1, (C, C), jnp.float32) * conv_std,
        w2s=jax.random.normal(k2, (C, C), jnp.float32) * conv_std,
        w1h=jax.random.normal(k3, (C, C), jnp.float32) * conv_std,
        w2h=jax.random.normal(k4, (C, C), jnp.float32) * conv_std,
        fc_w=jax.random.normal(k5, (2 * C, D), jnp.float32) * init_std,
        fc_b=jnp.zeros((2 * C,), jnp.float32),
        w_lrmul=w_lrmul,
        b_lrmul=lrmul,
    )

    x = jax.random.normal(kx, (N, C, H, W), jnp.float32)
    w_t = jax.random.normal(kw, (1, D), jnp.float32)
    # torch.randn(N, 1, H, W) inside forward -> pre-generated and passed in
    rnd = jax.random.normal(kr, (N, H, W), jnp.float32)

    fwd = jax.jit(layer_epilogue)
    out = jax.block_until_ready(fwd(x, w_t, rnd, params))
    ref = jax.block_until_ready(layer_epilogue_reference(x, w_t, rnd, params))

    assert out.shape == x.shape
    np.testing.assert_allclose(np.asarray(out), np.asarray(ref),
                               rtol=1e-3, atol=1e-3)
    print("KERNEL_OK")
</pallas_src>

<mosaic_0001>
module attributes {stable_mosaic.version = 11 : i64} {
  func.func @fused_epilogue_kernel(%arg0: i32, %arg1: memref<1x512xf32, #tpu.memory_space<vmem>>, %arg2: memref<512x2048xbf16, #tpu.memory_space<vmem>>, %arg3: memref<1x2048xf32, #tpu.memory_space<vmem>>, %arg4: memref<512x1024xbf16, #tpu.memory_space<vmem>>, %arg5: memref<1x512xf32, #tpu.memory_space<vmem>>, %arg6: memref<1x16x512xf32, #tpu.memory_space<vmem>>, %arg7: memref<1x16x1xf32, #tpu.memory_space<vmem>>, %arg8: memref<1x16x512xf32, #tpu.memory_space<vmem>>) attributes {dimension_semantics = [#tpu.dimension_semantics<parallel>], iteration_bounds = array<i64: 2>, scalar_prefetch = 0 : i64, scratch_operands = 0 : i64, tpu.core_type = #tpu.core_type<tc>, window_params = [{pipeline_mode = #tpu.pipeline_mode<synchronous>, transform_indices = @transform_0, window_bounds = array<i64: 1, 512>}, {pipeline_mode = #tpu.pipeline_mode<synchronous>, transform_indices = @transform_1, window_bounds = array<i64: 512, 2048>}, {pipeline_mode = #tpu.pipeline_mode<synchronous>, transform_indices = @transform_2, window_bounds = array<i64: 1, 2048>}, {pipeline_mode = #tpu.pipeline_mode<synchronous>, transform_indices = @transform_3, window_bounds = array<i64: 512, 1024>}, {pipeline_mode = #tpu.pipeline_mode<synchronous>, transform_indices = @transform_4, window_bounds = array<i64: 1, 512>}, {transform_indices = @transform_5, window_bounds = array<i64: 1, 16, 512>}, {transform_indices = @transform_6, window_bounds = array<i64: 1, 16, 1>}, {transform_indices = @transform_7, window_bounds = array<i64: 1, 16, 512>}]} {
    %c0 = arith.constant 0 : index
    %c0_0 = arith.constant 0 : index
    %0 = vector.load %arg1[%c0, %c0_0] : memref<1x512xf32, #tpu.memory_space<vmem>>, vector<1x512xf32>
    %1 = vector.shape_cast %0 : vector<1x512xf32> to vector<1x512xf32>
    %2 = vector.broadcast %1 : vector<1x512xf32> to vector<8x512xf32>
    %3 = arith.truncf %2 : vector<8x512xf32> to vector<8x512xbf16>
    %c0_1 = arith.constant 0 : index
    %c0_2 = arith.constant 0 : index
    %4 = vector.load %arg2[%c0_1, %c0_2] : memref<512x2048xbf16, #tpu.memory_space<vmem>>, vector<512x2048xbf16>
    %cst = arith.constant dense<0.000000e+00> : vector<8x2048xf32>
    %5 = tpu.matmul %3, %4, %cst {dimension_numbers = #tpu.dot_dimension_numbers<[1], [0], [0], [1], [0, 0, 1, 1], [], []>} : vector<8x512xbf16>, vector<512x2048xbf16>, vector<8x2048xf32> -> vector<8x2048xf32>
    %c0_3 = arith.constant 0 : index
    %c0_4 = arith.constant 0 : index
    %6 = vector.load %arg3[%c0_3, %c0_4] : memref<1x2048xf32, #tpu.memory_space<vmem>>, vector<1x2048xf32>
    %7 = vector.broadcast %6 : vector<1x2048xf32> to vector<8x2048xf32>
    %8 = arith.addf %5, %7 : vector<8x2048xf32>
    %cst_5 = arith.constant 0.000000e+00 : f32
    %9 = vector.broadcast %cst_5 : f32 to vector<8x2048xf32>
    %10 = arith.cmpf oge, %8, %9 : vector<8x2048xf32>
    %cst_6 = arith.constant 2.000000e-01 : f32
    %11 = vector.broadcast %cst_6 : f32 to vector<8x2048xf32>
    %12 = arith.mulf %11, %8 : vector<8x2048xf32>
    %13 = arith.select %10, %8, %12 : vector<8x2048xi1>, vector<8x2048xf32>
    %14 = vector.extract_strided_slice %13 {offsets = [0, 1024], sizes = [1, 512], strides = [1, 1]} : vector<8x2048xf32> to vector<1x512xf32>
    %15 = vector.extract_strided_slice %13 {offsets = [0, 1536], sizes = [1, 512], strides = [1, 1]} : vector<8x2048xf32> to vector<1x512xf32>
    %16 = vector.extract_strided_slice %13 {offsets = [0, 0], sizes = [8, 512], strides = [1, 1]} : vector<8x2048xf32> to vector<8x512xf32>
    %17 = arith.truncf %16 : vector<8x512xf32> to vector<8x512xbf16>
    %18 = vector.extract_strided_slice %13 {offsets = [0, 512], sizes = [8, 512], strides = [1, 1]} : vector<8x2048xf32> to vector<8x512xf32>
    %19 = arith.truncf %18 : vector<8x512xf32> to vector<8x512xbf16>
    %c0_7 = arith.constant 0 : index
    %c0_8 = arith.constant 0 : index
    %20 = vector.load %arg4[%c0_7, %c0_8] : memref<512x1024xbf16, #tpu.memory_space<vmem>>, vector<512x512xbf16>
    %cst_9 = arith.constant dense<0.000000e+00> : vector<8x512xf32>
    %21 = tpu.matmul %17, %20, %cst_9 {dimension_numbers = #tpu.dot_dimension_numbers<[1], [0], [0], [1], [0, 0, 1, 1], [], []>} : vector<8x512xbf16>, vector<512x512xbf16>, vector<8x512xf32> -> vector<8x512xf32>
    %22 = vector.extract_strided_slice %21 {offsets = [0, 0], sizes = [1, 512], strides = [1, 1]} : vector<8x512xf32> to vector<1x512xf32>
    %c0_10 = arith.constant 0 : index
    %c512 = arith.constant 512 : index
    %23 = vector.load %arg4[%c0_10, %c512] : memref<512x1024xbf16, #tpu.memory_space<vmem>>, vector<512x512xbf16>
    %cst_11 = arith.constant dense<0.000000e+00> : vector<8x512xf32>
    %24 = tpu.matmul %19, %23, %cst_11 {dimension_numbers = #tpu.dot_dimension_numbers<[1], [0], [0], [1], [0, 0, 1, 1], [], []>} : vector<8x512xbf16>, vector<512x512xbf16>, vector<8x512xf32> -> vector<8x512xf32>
    %25 = vector.extract_strided_slice %24 {offsets = [0, 0], sizes = [1, 512], strides = [1, 1]} : vector<8x512xf32> to vector<1x512xf32>
    %c0_12 = arith.constant 0 : index
    %c0_13 = arith.constant 0 : index
    %26 = vector.load %arg5[%c0_12, %c0_13] : memref<1x512xf32, #tpu.memory_space<vmem>>, vector<1x512xf32>
    %27 = arith.mulf %22, %26 : vector<1x512xf32>
    %c0_14 = arith.constant 0 : index
    %c0_15 = arith.constant 0 : index
    %c0_16 = arith.constant 0 : index
    %28 = vector.load %arg6[%c0_14, %c0_15, %c0_16] : memref<1x16x512xf32, #tpu.memory_space<vmem>>, vector<1x16x512xf32>
    %c0_17 = arith.constant 0 : index
    %c0_18 = arith.constant 0 : index
    %c0_19 = arith.constant 0 : index
    %29 = vector.load %arg7[%c0_17, %c0_18, %c0_19] : memref<1x16x1xf32, #tpu.memory_space<vmem>>, vector<1x16x1xf32>
    %30 = vector.shape_cast %27 : vector<1x512xf32> to vector<1x1x512xf32>
    %31 = vector.broadcast %30 : vector<1x1x512xf32> to vector<1x16x512xf32>
    %32 = vector.broadcast %29 : vector<1x16x1xf32> to vector<1x16x512xf32>
    %33 = arith.mulf %31, %32 : vector<1x16x512xf32>
    %34 = arith.addf %28, %33 : vector<1x16x512xf32>
    %35 = vector.shape_cast %25 : vector<1x512xf32> to vector<1x1x512xf32>
    %36 = vector.broadcast %35 : vector<1x1x512xf32> to vector<1x16x512xf32>
    %37 = arith.addf %34, %36 : vector<1x16x512xf32>
    %cst_20 = arith.constant 0.000000e+00 : f32
    %38 = vector.broadcast %cst_20 : f32 to vector<1x16x512xf32>
    %39 = arith.cmpf oge, %37, %38 : vector<1x16x512xf32>
    %cst_21 = arith.constant 2.000000e-01 : f32
    %40 = vector.broadcast %cst_21 : f32 to vector<1x16x512xf32>
    %41 = arith.mulf %40, %37 : vector<1x16x512xf32>
    %42 = arith.select %39, %37, %41 : vector<1x16x512xi1>, vector<1x16x512xf32>
    %43 = arith.mulf %42, %42 : vector<1x16x512xf32>
    %cst_22 = arith.constant dense<0.000000e+00> : vector<1x16xf32>
    %44 = vector.multi_reduction <add>, %43, %cst_22 [2] : vector<1x16x512xf32> to vector<1x16xf32>
    %45 = vector.shape_cast %44 : vector<1x16xf32> to vector<1x16x1xf32>
    %cst_23 = arith.constant 5.120000e+02 : f32
    %46 = vector.broadcast %cst_23 : f32 to vector<1x16x1xf32>
    %47 = arith.divf %45, %46 : vector<1x16x1xf32>
    %cst_24 = arith.constant 9.99999993E-9 : f32
    %48 = vector.broadcast %cst_24 : f32 to vector<1x16x1xf32>
    %49 = arith.addf %47, %48 : vector<1x16x1xf32>
    %50 = math.rsqrt %49 : vector<1x16x1xf32>
    %51 = vector.broadcast %50 : vector<1x16x1xf32> to vector<1x16x512xf32>
    %52 = arith.mulf %42, %51 : vector<1x16x512xf32>
    %cst_25 = arith.constant dense<0.000000e+00> : vector<1x512xf32>
    %53 = vector.multi_reduction <add>, %52, %cst_25 [1] : vector<1x16x512xf32> to vector<1x512xf32>
    %54 = vector.shape_cast %53 : vector<1x512xf32> to vector<1x1x512xf32>
    %cst_26 = arith.constant 1.600000e+01 : f32
    %55 = vector.broadcast %cst_26 : f32 to vector<1x1x512xf32>
    %56 = arith.divf %54, %55 : vector<1x1x512xf32>
    %57 = vector.broadcast %56 : vector<1x1x512xf32> to vector<1x16x512xf32>
    %58 = arith.subf %52, %57 : vector<1x16x512xf32>
    %59 = arith.mulf %58, %58 : vector<1x16x512xf32>
    %cst_27 = arith.constant dense<0.000000e+00> : vector<1x512xf32>
    %60 = vector.multi_reduction <add>, %59, %cst_27 [1] : vector<1x16x512xf32> to vector<1x512xf32>
    %61 = vector.shape_cast %60 : vector<1x512xf32> to vector<1x1x512xf32>
    %cst_28 = arith.constant 1.600000e+01 : f32
    %62 = vector.broadcast %cst_28 : f32 to vector<1x1x512xf32>
    %63 = arith.divf %61, %62 : vector<1x1x512xf32>
    %cst_29 = arith.constant 9.99999993E-9 : f32
    %64 = vector.broadcast %cst_29 : f32 to vector<1x1x512xf32>
    %65 = arith.addf %63, %64 : vector<1x1x512xf32>
    %66 = math.rsqrt %65 : vector<1x1x512xf32>
    %67 = vector.broadcast %66 : vector<1x1x512xf32> to vector<1x16x512xf32>
    %68 = arith.mulf %58, %67 : vector<1x16x512xf32>
    %69 = vector.shape_cast %14 : vector<1x512xf32> to vector<1x1x512xf32>
    %cst_30 = arith.constant 1.000000e+00 : f32
    %70 = vector.broadcast %cst_30 : f32 to vector<1x1x512xf32>
    %71 = arith.addf %69, %70 : vector<1x1x512xf32>
    %72 = vector.broadcast %71 : vector<1x1x512xf32> to vector<1x16x512xf32>
    %73 = arith.mulf %68, %72 : vector<1x16x512xf32>
    %74 = vector.shape_cast %15 : vector<1x512xf32> to vector<1x1x512xf32>
    %75 = vector.broadcast %74 : vector<1x1x512xf32> to vector<1x16x512xf32>
    %76 = arith.addf %73, %75 : vector<1x16x512xf32>
    %c0_31 = arith.constant 0 : index
    %c0_32 = arith.constant 0 : index
    %c0_33 = arith.constant 0 : index
    %77 = vector.load %arg8[%c0_31, %c0_32, %c0_33] : memref<1x16x512xf32, #tpu.memory_space<vmem>>, vector<1x16x512xf32>
    tpu.vector_store %arg8[%c0_31, %c0_32, %c0_33], %76 {strides = array<i32>} : memref<1x16x512xf32, #tpu.memory_space<vmem>>, vector<1x16x512xf32>,
    return
  }
  func.func @transform_0(%arg0: i32) -> (i32, i32) {
    %c0_i32 = arith.constant 0 : i32
    %c0_i32_0 = arith.constant 0 : i32
    %c0_i32_1 = arith.constant 0 : i32
    return %c0_i32, %c0_i32_0 : i32, i32
  }
  func.func @transform_1(%arg0: i32) -> (i32, i32) {
    %c0_i32 = arith.constant 0 : i32
    %c0_i32_0 = arith.constant 0 : i32
    %c0_i32_1 = arith.constant 0 : i32
    return %c0_i32, %c0_i32_0 : i32, i32
  }
  func.func @transform_2(%arg0: i32) -> (i32, i32) {
    %c0_i32 = arith.constant 0 : i32
    %c0_i32_0 = arith.constant 0 : i32
    %c0_i32_1 = arith.constant 0 : i32
    return %c0_i32, %c0_i32_0 : i32, i32
  }
  func.func @transform_3(%arg0: i32) -> (i32, i32) {
    %c0_i32 = arith.constant 0 : i32
    %c0_i32_0 = arith.constant 0 : i32
    %c0_i32_1 = arith.constant 0 : i32
    return %c0_i32, %c0_i32_0 : i32, i32
  }
  func.func @transform_4(%arg0: i32) -> (i32, i32) {
    %c0_i32 = arith.constant 0 : i32
    %c0_i32_0 = arith.constant 0 : i32
    %c0_i32_1 = arith.constant 0 : i32
    return %c0_i32, %c0_i32_0 : i32, i32
  }
  func.func @transform_5(%arg0: i32) -> (i32, i32, i32) {
    %c0_i32 = arith.constant 0 : i32
    %c0_i32_0 = arith.constant 0 : i32
    %c0_i32_1 = arith.constant 0 : i32
    return %arg0, %c0_i32, %c0_i32_0 : i32, i32, i32
  }
  func.func @transform_6(%arg0: i32) -> (i32, i32, i32) {
    %c0_i32 = arith.constant 0 : i32
    %c0_i32_0 = arith.constant 0 : i32
    %c0_i32_1 = arith.constant 0 : i32
    return %arg0, %c0_i32, %c0_i32_0 : i32, i32, i32
  }
  func.func @transform_7(%arg0: i32) -> (i32, i32, i32) {
    %c0_i32 = arith.constant 0 : i32
    %c0_i32_0 = arith.constant 0 : i32
    %c0_i32_1 = arith.constant 0 : i32
    return %arg0, %c0_i32, %c0_i32_0 : i32, i32, i32
  }
}

</mosaic_0001>

<llo_original>
// kernel: layer_epilogue.1
$region0: #{layer_epilogue.1}
  #allocation0 [shape = 'u32[]', space=smem, size = 0x4, offset = 0x4, fixed_abs, tag = 'smem constant byte address 0x4 - core index']
  #allocation1 [shape = 'u32[144,128]{1,0:T(1,128)}', space=vmem, size = 0x12000, scoped, tag = 'internal scratch']
  %s0 = inlined_call_operand.vmem [shape: f32[1,512], index: 0, kind: input, shape index: {}]
  %s1 = inlined_call_operand.vmem [shape: bf16[512,2048], index: 1, kind: input, shape index: {}]
  %s2 = inlined_call_operand.vmem [shape: f32[1,2048], index: 2, kind: input, shape index: {}]
  %s3 = inlined_call_operand.vmem [shape: bf16[512,1024], index: 3, kind: input, shape index: {}]
  %s4 = inlined_call_operand.vmem [shape: f32[1,512], index: 4, kind: input, shape index: {}]
  %s5 = inlined_call_operand.vmem [shape: f32[2,16,512], index: 5, kind: input, shape index: {}]
  %s6 = inlined_call_operand.vmem [shape: f32[2,16,1], index: 6, kind: input, shape index: {}]
  %s7 = inlined_call_operand.vmem [shape: f32[2,16,512], index: 7, kind: output, shape index: {}]
  %s8 = sld [smem:[#allocation0]]
  $region61: #{layer_epilogue.1} parent=0
    _
  %s10 = ssub.s32 1, %s8
  %s11 = scalar_select 0, %s10, %s8
  loop: start=0, step=1, limit=4
  $region2: #{layer_epilogue.1} parent=0 // loop_pre_header
    _
  $region3: #{layer_epilogue.1} parent=0 // loop_header
    %s13 = sphi 0, %s17
    %p14 = scmp.ge.s32.totalorder %s13, 4
    %s21 = sphi 0, %s21
    %s23 = sphi 0, %s21
    %s24 = sphi 0, %s23
    %s38 = sphi 0, %s24
    %s42 = sphi 0, %s42
    %s44 = sphi 0, %s42
    %s45 = sphi 0, %s44
    %s59 = sphi 0, %s45
    %s63 = sphi 0, %s63
    %s65 = sphi 0, %s63
    %s66 = sphi 0, %s65
    %s80 = sphi 0, %s66
    %s84 = sphi 0, %s84
    %s86 = sphi 0, %s84
    %s87 = sphi 0, %s86
    %s101 = sphi 0, %s87
    %s105 = sphi 0, %s105
    %s107 = sphi 0, %s105
    %s108 = sphi 0, %s107
    %s122 = sphi 0, %s108
    %s128 = sphi 0, %s130
    %s131 = sphi 0, %s128
    %s132 = sphi 0, %s131
    %s148 = sphi 0, %s132
    %s154 = sphi 0, %s156
    %s157 = sphi 0, %s154
    %s158 = sphi 0, %s157
    %s174 = sphi 0, %s158
    %s180 = sphi 0, %s182
    %s183 = sphi 0, %s180
    %s184 = sphi 0, %s183
    %s200 = sphi 0, %s184
  $region4: #{layer_epilogue.1} parent=0 // loop_header_branch
    %16 = sbr.rel (%p14) target = $region8
  $region5: #{layer_epilogue.1} parent=0 // loop_body
    %s18 = ssub.s32 %s13, 1
    %s19 = ssub.s32 %s13, 2
    %s20 = sadd.s32 %s13, 1
    %s22 = sadd.s32 %s21, 1
    %p25 = scmp.eq.s32.totalorder %s13, 1
    %p26 = scmp.ne.s32.totalorder %s21, %s23
    %p27 = scmp.eq.s32.totalorder %s13, 0
    %p28 = por %p26, %p27
    %p29 = scmp.ne.s32.totalorder %s21, %s23
    %p30 = scmp.eq.s32.totalorder %s18, 1
    %p31 = por %p29, %p30
    %p32 = scmp.ne.s32.totalorder %s23, %s24
    %p33 = scmp.eq.s32.totalorder %s18, 0
    %p34 = por %p32, %p33
    %p35 = scmp.ne.s32.totalorder %s23, %s24
    %p36 = scmp.eq.s32.totalorder %s19, 1
    %p37 = por %p35, %p36
    %p39 = scmp.ne.s32.totalorder %s24, %s38
    %p40 = scmp.eq.s32.totalorder %s19, 0
    %p41 = por %p39, %p40
    %s43 = sadd.s32 %s42, 1
    %p46 = scmp.eq.s32.totalorder %s13, 1
    %p47 = scmp.ne.s32.totalorder %s42, %s44
    %p48 = scmp.eq.s32.totalorder %s13, 0
    %p49 = por %p47, %p48
    %p50 = scmp.ne.s32.totalorder %s42, %s44
    %p51 = scmp.eq.s32.totalorder %s18, 1
    %p52 = por %p50, %p51
    %p53 = scmp.ne.s32.totalorder %s44, %s45
    %p54 = scmp.eq.s32.totalorder %s18, 0
    %p55 = por %p53, %p54
    %p56 = scmp.ne.s32.totalorder %s44, %s45
    %p57 = scmp.eq.s32.totalorder %s19, 1
    %p58 = por %p56, %p57
    %p60 = scmp.ne.s32.totalorder %s45, %s59
    %p61 = scmp.eq.s32.totalorder %s19, 0
    %p62 = por %p60, %p61
    %s64 = sadd.s32 %s63, 1
    %p67 = scmp.eq.s32.totalorder %s13, 1
    %p68 = scmp.ne.s32.totalorder %s63, %s65
    %p69 = scmp.eq.s32.totalorder %s13, 0
    %p70 = por %p68, %p69
    %p71 = scmp.ne.s32.totalorder %s63, %s65
    %p72 = scmp.eq.s32.totalorder %s18, 1
    %p73 = por %p71, %p72
    %p74 = scmp.ne.s32.totalorder %s65, %s66
    %p75 = scmp.eq.s32.totalorder %s18, 0
    %p76 = por %p74, %p75
    %p77 = scmp.ne.s32.totalorder %s65, %s66
    %p78 = scmp.eq.s32.totalorder %s19, 1
    %p79 = por %p77, %p78
    %p81 = scmp.ne.s32.totalorder %s66, %s80
    %p82 = scmp.eq.s32.totalorder %s19, 0
    %p83 = por %p81, %p82
    %s85 = sadd.s32 %s84, 1
    %p88 = scmp.eq.s32.totalorder %s13, 1
    %p89 = scmp.ne.s32.totalorder %s84, %s86
    %p90 = scmp.eq.s32.totalorder %s13, 0
    %p91 = por %p89, %p90
    %p92 = scmp.ne.s32.totalorder %s84, %s86
    %p93 = scmp.eq.s32.totalorder %s18, 1
    %p94 = por %p92, %p93
    %p95 = scmp.ne.s32.totalorder %s86, %s87
    %p96 = scmp.eq.s32.totalorder %s18, 0
    %p97 = por %p95, %p96
    %p98 = scmp.ne.s32.totalorder %s86, %s87
    %p99 = scmp.eq.s32.totalorder %s19, 1
    %p100 = por %p98, %p99
    %p102 = scmp.ne.s32.totalorder %s87, %s101
    %p103 = scmp.eq.s32.totalorder %s19, 0
    %p104 = por %p102, %p103
    %s106 = sadd.s32 %s105, 1
    %p109 = scmp.eq.s32.totalorder %s13, 1
    %p110 = scmp.ne.s32.totalorder %s105, %s107
    %p111 = scmp.eq.s32.totalorder %s13, 0
    %p112 = por %p110, %p111
    %p113 = scmp.ne.s32.totalorder %s105, %s107
    %p114 = scmp.eq.s32.totalorder %s18, 1
    %p115 = por %p113, %p114
    %p116 = scmp.ne.s32.totalorder %s107, %s108
    %p117 = scmp.eq.s32.totalorder %s18, 0
    %p118 = por %p116, %p117
    %p119 = scmp.ne.s32.totalorder %s107, %s108
    %p120 = scmp.eq.s32.totalorder %s19, 1
    %p121 = por %p119, %p120
    %p123 = scmp.ne.s32.totalorder %s108, %s122
    %p124 = scmp.eq.s32.totalorder %s19, 0
    %p125 = por %p123, %p124
    %s126 = ssub.s32 %s13, %s20
    %p127 = scmp.eq.s32.totalorder %s126, 0
    %s129 = sadd.s32 %s128, 1
    %s130 = scalar_select %p127, %s128, %s129
    %p133 = pneg %p127
    %p134 = scmp.eq.s32.totalorder %s13, 1
    %p135 = por %p133, %p134
    %p136 = scmp.ne.s32.totalorder %s128, %s131
    %p137 = scmp.eq.s32.totalorder %s13, 0
    %p138 = por %p136, %p137
    %p139 = scmp.ne.s32.totalorder %s128, %s131
    %p140 = scmp.eq.s32.totalorder %s18, 1
    %p141 = por %p139, %p140
    %p142 = scmp.ne.s32.totalorder %s131, %s132
    %p143 = scmp.eq.s32.totalorder %s18, 0
    %p144 = por %p142, %p143
    %p145 = scmp.ne.s32.totalorder %s131, %s132
    %p146 = scmp.eq.s32.totalorder %s19, 1
    %p147 = por %p145, %p146
    %p149 = scmp.ne.s32.totalorder %s132, %s148
    %p150 = scmp.eq.s32.totalorder %s19, 0
    %p151 = por %p149, %p150
    %s152 = ssub.s32 %s13, %s20
    %p153 = scmp.eq.s32.totalorder %s152, 0
    %s155 = sadd.s32 %s154, 1
    %s156 = scalar_select %p153, %s154, %s155
    %p159 = pneg %p153
    %p160 = scmp.eq.s32.totalorder %s13, 1
    %p161 = por %p159, %p160
    %p162 = scmp.ne.s32.totalorder %s154, %s157
    %p163 = scmp.eq.s32.totalorder %s13, 0
    %p164 = por %p162, %p163
    %p165 = scmp.ne.s32.totalorder %s154, %s157
    %p166 = scmp.eq.s32.totalorder %s18, 1
    %p167 = por %p165, %p166
    %p168 = scmp.ne.s32.totalorder %s157, %s158
    %p169 = scmp.eq.s32.totalorder %s18, 0
    %p170 = por %p168, %p169
    %p171 = scmp.ne.s32.totalorder %s157, %s158
    %p172 = scmp.eq.s32.totalorder %s19, 1
    %p173 = por %p171, %p172
    %p175 = scmp.ne.s32.totalorder %s158, %s174
    %p176 = scmp.eq.s32.totalorder %s19, 0
    %p177 = por %p175, %p176
    %s178 = ssub.s32 %s13, %s20
    %p179 = scmp.eq.s32.totalorder %s178, 0
    %s181 = sadd.s32 %s180, 1
    %s182 = scalar_select %p179, %s180, %s181
    %p185 = pneg %p179
    %p186 = scmp.eq.s32.totalorder %s13, 1
    %p187 = por %p185, %p186
    %p188 = scmp.ne.s32.totalorder %s180, %s183
    %p189 = scmp.eq.s32.totalorder %s13, 0
    %p190 = por %p188, %p189
    %p191 = scmp.ne.s32.totalorder %s180, %s183
    %p192 = scmp.eq.s32.totalorder %s18, 1
    %p193 = por %p191, %p192
    %p194 = scmp.ne.s32.totalorder %s183, %s184
    %p195 = scmp.eq.s32.totalorder %s18, 0
    %p196 = por %p194, %p195
    %p197 = scmp.ne.s32.totalorder %s183, %s184
    %p198 = scmp.eq.s32.totalorder %s19, 1
    %p199 = por %p197, %p198
    %p201 = scmp.ne.s32.totalorder %s184, %s200
    %p202 = scmp.eq.s32.totalorder %s19, 0
    %p203 = por %p201, %p202
    %p204 = scmp.le.s32.totalorder 1, %s13
    %p205 = scmp.lt.s32.totalorder %s13, 3
    %p206 = pnand %p204, %p205
    %p207 = pneg %p206
    // Predicated region
    $region9: #{layer_epilogue.1} parent=5 // pred_check
      _
    $region10: #{layer_epilogue.1} parent=5 // pred_check_branch
      %209 = sbr.rel (%p206) target = $region12
    $region11: #{layer_epilogue.1} parent=5 // pred_region
      %s210 = ssub.s32 %s13, 1
      // Predicated region
      $region13: #{layer_epilogue.1} parent=11 // pred_check
        %p211 = pneg %p34
      $region14: #{layer_epilogue.1} parent=11 // pred_check_branch
        %213 = sbr.rel (%p211) target = $region16
      $region15: #{layer_epilogue.1} parent=11 // pred_region
        _
      $region16: #{layer_epilogue.1} parent=11 // pred_fallthru
        _
      // Predicated region
      $region17: #{layer_epilogue.1} parent=11 // pred_check
        %p214 = pneg %p55
      $region18: #{layer_epilogue.1} parent=11 // pred_check_branch
        %216 = sbr.rel (%p214) target = $region20
      $region19: #{layer_epilogue.1} parent=11 // pred_region
        _
      $region20: #{layer_epilogue.1} parent=11 // pred_fallthru
        _
      // Predicated region
      $region21: #{layer_epilogue.1} parent=11 // pred_check
        %p217 = pneg %p76
      $region22: #{layer_epilogue.1} parent=11 // pred_check_branch
        %219 = sbr.rel (%p217) target = $region24
      $region23: #{layer_epilogue.1} parent=11 // pred_region
        _
      $region24: #{layer_epilogue.1} parent=11 // pred_fallthru
        _
      // Predicated region
      $region25: #{layer_epilogue.1} parent=11 // pred_check
        %p220 = pneg %p97
      $region26: #{layer_epilogue.1} parent=11 // pred_check_branch
        %222 = sbr.rel (%p220) target = $region28
      $region27: #{layer_epilogue.1} parent=11 // pred_region
        _
      $region28: #{layer_epilogue.1} parent=11 // pred_fallthru
        _
      // Predicated region
      $region29: #{layer_epilogue.1} parent=11 // pred_check
        %p223 = pneg %p118
      $region30: #{layer_epilogue.1} parent=11 // pred_check_branch
        %225 = sbr.rel (%p223) target = $region32
      $region31: #{layer_epilogue.1} parent=11 // pred_region
        _
      $region32: #{layer_epilogue.1} parent=11 // pred_fallthru
        _
    $region12: #{layer_epilogue.1} parent=5 // pred_fallthru
      _
    %p226 = scmp.lt.s32.totalorder %s13, 2
    // Predicated region
    $region33: #{layer_epilogue.1} parent=5 // pred_check
      %p227 = pneg %p226
    $region34: #{layer_epilogue.1} parent=5 // pred_check_branch
      %229 = sbr.rel (%p227) target = $region36
    $region35: #{layer_epilogue.1} parent=5 // pred_region
      // Predicated region
      $region37: #{layer_epilogue.1} parent=35 // pred_check
        %p230 = pneg %p138
      $region38: #{layer_epilogue.1} parent=35 // pred_check_branch
        %232 = sbr.rel (%p230) target = $region40
      $region39: #{layer_epilogue.1} parent=35 // pred_region
        %p233 = scmp.lt.s32.totalorder %s13, 1
        %s234 = scalar_select %p233, %s13, 1
        %s235 = smul.addr %s234, 8
        %s236 = smul.addr %s235, 8
        %s237 = scalar_lea.vmem %s5, %s236
      $region40: #{layer_epilogue.1} parent=35 // pred_fallthru
        _
      // Predicated region
      $region41: #{layer_epilogue.1} parent=35 // pred_check
        %p238 = pneg %p164
      $region42: #{layer_epilogue.1} parent=35 // pred_check_branch
        %240 = sbr.rel (%p238) target = $region44
      $region43: #{layer_epilogue.1} parent=35 // pred_region
        %p241 = scmp.lt.s32.totalorder %s13, 1
        %s242 = scalar_select %p241, %s13, 1
        %s243 = smul.addr %s242, 2
        %s244 = smul.addr %s243, 8
        %s245 = scalar_lea.vmem %s6, %s244
      $region44: #{layer_epilogue.1} parent=35 // pred_fallthru
        _
    $region36: #{layer_epilogue.1} parent=5 // pred_fallthru
      _
    %p246 = scmp.le.s32.totalorder 1, %s13
    %p247 = scmp.lt.s32.totalorder %s13, 3
    %p248 = pnand %p246, %p247
    %p249 = pneg %p248
    // Predicated region
    $region45: #{layer_epilogue.1} parent=5 // pred_check
      _
    $region46: #{layer_epilogue.1} parent=5 // pred_check_branch
      %251 = sbr.rel (%p248) target = $region48
    $region47: #{layer_epilogue.1} parent=5 // pred_region
      %s252 = ssub.s32 %s13, 1
      %p253 = pneg %p34
      %p254 = pneg %p31
      %p255 = pneg %p55
      %p256 = pneg %p52
      %p257 = pneg %p76
      %p258 = pneg %p73
      %p259 = pneg %p97
      %p260 = pneg %p94
      %p261 = pneg %p118
      %p262 = pneg %p115
      %p263 = scmp.lt.s32.totalorder %s18, 1
      %s264 = scalar_select %p263, %s18, 1
      %s265 = smul.addr %s264, 8
      %s266 = smul.addr %s265, 8
      %s267 = scalar_lea.vmem %s5, %s266
      %p268 = pneg %p144
      %p269 = pneg %p141
      %p270 = scmp.lt.s32.totalorder %s18, 1
      %s271 = scalar_select %p270, %s18, 1
      %s272 = smul.addr %s271, 2
      %s273 = smul.addr %s272, 8
      %s274 = scalar_lea.vmem %s6, %s273
      %p275 = pneg %p170
      %p276 = pneg %p167
      %p277 = pneg %p196
      %p278 = pneg %p193
      %p279 = scmp.lt.s32.totalorder %s18, 1
      %s280 = scalar_select %p279, %s18, 1
      %s281 = smul.addr %s280, 8
      %s282 = smul.addr %s281, 8
      %s283 = scalar_lea.vmem %s7, %s282
      %p284 = scmp.lt.s32.totalorder %s18, 1
      %s285 = scalar_select %p284, %s18, 1
      %s286 = smul.addr %s285, 8
      %s287 = smul.addr %s286, 8
      %s288 = scalar_lea.vmem %s5, %s287
      %p289 = scmp.lt.s32.totalorder %s18, 1
      %s290 = scalar_select %p289, %s18, 1
      %s291 = smul.addr %s290, 2
      %s292 = smul.addr %s291, 8
      %s293 = scalar_lea.vmem %s6, %s292
      %p294 = scmp.lt.s32.totalorder %s18, 1
      %s295 = scalar_select %p294, %s18, 1
      %s296 = smul.addr %s295, 8
      %s297 = smul.addr %s296, 8
      %s298 = scalar_lea.vmem %s7, %s297
      %v299 = vld [vmem:[%s0] sm:$0xf]
      %v301 = vlaneseq
      %v302 = vshrl.u32 %v301, 7
      %v303 = vsub.s32 0, %v302
      %v304 = vrot.slane %v299, %v303
      %v305 = vlaneseq
      %v306 = vshrl.u32 %v305, 7
      %v307 = vsub.s32 1, %v306
      %v308 = vrot.slane %v299, %v307
      %v309 = vlaneseq
      %v310 = vshrl.u32 %v309, 7
      %v311 = vsub.s32 2, %v310
      %v312 = vrot.slane %v299, %v311
      %v313 = vlaneseq
      %v314 = vshrl.u32 %v313, 7
      %v315 = vsub.s32 3, %v314
      %v316 = vrot.slane %v299, %v315
      %v321 = vpack.c.bf16 %v304, %v304
      %v322 = vpack.c.bf16 %v308, %v308
      %v323 = vpack.c.bf16 %v312, %v312
      %v324 = vpack.c.bf16 %v316, %v316
      %v325 = vld [vmem:[%s1] sm:$0xff]
      %v326 = vld [vmem:[%s1 + $0x8] sm:$0xff]
      %v327 = vld [vmem:[%s1 + $0x10] sm:$0xff]
      %v328 = vld [vmem:[%s1 + $0x18] sm:$0xff]
      %v329 = vld [vmem:[%s1 + $0x20] sm:$0xff]
      %v330 = vld [vmem:[%s1 + $0x28] sm:$0xff]
      %v331 = vld [vmem:[%s1 + $0x30] sm:$0xff]
      %v332 = vld [vmem:[%s1 + $0x38] sm:$0xff]
      %v333 = vld [vmem:[%s1 + $0x40] sm:$0xff]
      %v334 = vld [vmem:[%s1 + $0x48] sm:$0xff]
      %v335 = vld [vmem:[%s1 + $0x50] sm:$0xff]
      %v336 = vld [vmem:[%s1 + $0x58] sm:$0xff]
      %v337 = vld [vmem:[%s1 + $0x60] sm:$0xff]
      %v338 = vld [vmem:[%s1 + $0x68] sm:$0xff]
      %v339 = vld [vmem:[%s1 + $0x70] sm:$0xff]
      %v340 = vld [vmem:[%s1 + $0x78] sm:$0xff]
      %v341 = vld [vmem:[%s1 + $0x80] sm:$0xff]
      %v342 = vld [vmem:[%s1 + $0x88] sm:$0xff]
      %v343 = vld [vmem:[%s1 + $0x90] sm:$0xff]
      %v344 = vld [vmem:[%s1 + $0x98] sm:$0xff]
      %v345 = vld [vmem:[%s1 + $0xa0] sm:$0xff]
      %v346 = vld [vmem:[%s1 + $0xa8] sm:$0xff]
      %v347 = vld [vmem:[%s1 + $0xb0] sm:$0xff]
      %v348 = vld [vmem:[%s1 + $0xb8] sm:$0xff]
      %v349 = vld [vmem:[%s1 + $0xc0] sm:$0xff]
      %v350 = vld [vmem:[%s1 + $0xc8] sm:$0xff]
      %v351 = vld [vmem:[%s1 + $0xd0] sm:$0xff]
      %v352 = vld [vmem:[%s1 + $0xd8] sm:$0xff]
      %v353 = vld [vmem:[%s1 + $0xe0] sm:$0xff]
      %v354 = vld [vmem:[%s1 + $0xe8] sm:$0xff]
      %v355 = vld [vmem:[%s1 + $0xf0] sm:$0xff]
      %v356 = vld [vmem:[%s1 + $0xf8] sm:$0xff]
      %v357 = vld [vmem:[%s1 + $0x100] sm:$0xff]
      %v358 = vld [vmem:[%s1 + $0x108] sm:$0xff]
      %v359 = vld [vmem:[%s1 + $0x110] sm:$0xff]
      %v360 = vld [vmem:[%s1 + $0x118] sm:$0xff]
      %v361 = vld [vmem:[%s1 + $0x120] sm:$0xff]
      %v362 = vld [vmem:[%s1 + $0x128] sm:$0xff]
      %v363 = vld [vmem:[%s1 + $0x130] sm:$0xff]
      %v364 = vld [vmem:[%s1 + $0x138] sm:$0xff]
      %v365 = vld [vmem:[%s1 + $0x140] sm:$0xff]
      %v366 = vld [vmem:[%s1 + $0x148] sm:$0xff]
      %v367 = vld [vmem:[%s1 + $0x150] sm:$0xff]
      %v368 = vld [vmem:[%s1 + $0x158] sm:$0xff]
      %v369 = vld [vmem:[%s1 + $0x160] sm:$0xff]
      %v370 = vld [vmem:[%s1 + $0x168] sm:$0xff]
      %v371 = vld [vmem:[%s1 + $0x170] sm:$0xff]
      %v372 = vld [vmem:[%s1 + $0x178] sm:$0xff]
      %v373 = vld [vmem:[%s1 + $0x180] sm:$0xff]
      %v374 = vld [vmem:[%s1 + $0x188] sm:$0xff]
      %v375 = vld [vmem:[%s1 + $0x190] sm:$0xff]
      %v376 = vld [vmem:[%s1 + $0x198] sm:$0xff]
      %v377 = vld [vmem:[%s1 + $0x1a0] sm:$0xff]
      %v378 = vld [vmem:[%s1 + $0x1a8] sm:$0xff]
      %v379 = vld [vmem:[%s1 + $0x1b0] sm:$0xff]
      %v380 = vld [vmem:[%s1 + $0x1b8] sm:$0xff]
      %v381 = vld [vmem:[%s1 + $0x1c0] sm:$0xff]
      %v382 = vld [vmem:[%s1 + $0x1c8] sm:$0xff]
      %v383 = vld [vmem:[%s1 + $0x1d0] sm:$0xff]
      %v384 = vld [vmem:[%s1 + $0x1d8] sm:$0xff]
      %v385 = vld [vmem:[%s1 + $0x1e0] sm:$0xff]
      %v386 = vld [vmem:[%s1 + $0x1e8] sm:$0xff]
      %v387 = vld [vmem:[%s1 + $0x1f0] sm:$0xff]
      %v388 = vld [vmem:[%s1 + $0x1f8] sm:$0xff]
      %v389 = vld [vmem:[%s1 + $0x200] sm:$0xff]
      %v390 = vld [vmem:[%s1 + $0x208] sm:$0xff]
      %v391 = vld [vmem:[%s1 + $0x210] sm:$0xff]
      %v392 = vld [vmem:[%s1 + $0x218] sm:$0xff]
      %v393 = vld [vmem:[%s1 + $0x220] sm:$0xff]
      %v394 = vld [vmem:[%s1 + $0x228] sm:$0xff]
      %v395 = vld [vmem:[%s1 + $0x230] sm:$0xff]
      %v396 = vld [vmem:[%s1 + $0x238] sm:$0xff]
      %v397 = vld [vmem:[%s1 + $0x240] sm:$0xff]
      %v398 = vld [vmem:[%s1 + $0x248] sm:$0xff]
      %v399 = vld [vmem:[%s1 + $0x250] sm:$0xff]
      %v400 = vld [vmem:[%s1 + $0x258] sm:$0xff]
      %v401 = vld [vmem:[%s1 + $0x260] sm:$0xff]
      %v402 = vld [vmem:[%s1 + $0x268] sm:$0xff]
      %v403 = vld [vmem:[%s1 + $0x270] sm:$0xff]
      %v404 = vld [vmem:[%s1 + $0x278] sm:$0xff]
      %v405 = vld [vmem:[%s1 + $0x280] sm:$0xff]
      %v406 = vld [vmem:[%s1 + $0x288] sm:$0xff]
      %v407 = vld [vmem:[%s1 + $0x290] sm:$0xff]
      %v408 = vld [vmem:[%s1 + $0x298] sm:$0xff]
      %v409 = vld [vmem:[%s1 + $0x2a0] sm:$0xff]
      %v410 = vld [vmem:[%s1 + $0x2a8] sm:$0xff]
      %v411 = vld [vmem:[%s1 + $0x2b0] sm:$0xff]
      %v412 = vld [vmem:[%s1 + $0x2b8] sm:$0xff]
      %v413 = vld [vmem:[%s1 + $0x2c0] sm:$0xff]
      %v414 = vld [vmem:[%s1 + $0x2c8] sm:$0xff]
      %v415 = vld [vmem:[%s1 + $0x2d0] sm:$0xff]
      %v416 = vld [vmem:[%s1 + $0x2d8] sm:$0xff]
      %v417 = vld [vmem:[%s1 + $0x2e0] sm:$0xff]
      %v418 = vld [vmem:[%s1 + $0x2e8] sm:$0xff]
      %v419 = vld [vmem:[%s1 + $0x2f0] sm:$0xff]
      %v420 = vld [vmem:[%s1 + $0x2f8] sm:$0xff]
      %v421 = vld [vmem:[%s1 + $0x300] sm:$0xff]
      %v422 = vld [vmem:[%s1 + $0x308] sm:$0xff]
      %v423 = vld [vmem:[%s1 + $0x310] sm:$0xff]
      %v424 = vld [vmem:[%s1 + $0x318] sm:$0xff]
      %v425 = vld [vmem:[%s1 + $0x320] sm:$0xff]
      %v426 = vld [vmem:[%s1 + $0x328] sm:$0xff]
      %v427 = vld [vmem:[%s1 + $0x330] sm:$0xff]
      %v428 = vld [vmem:[%s1 + $0x338] sm:$0xff]
      %v429 = vld [vmem:[%s1 + $0x340] sm:$0xff]
      %v430 = vld [vmem:[%s1 + $0x348] sm:$0xff]
      %v431 = vld [vmem:[%s1 + $0x350] sm:$0xff]
      %v432 = vld [vmem:[%s1 + $0x358] sm:$0xff]
      %v433 = vld [vmem:[%s1 + $0x360] sm:$0xff]
      %v434 = vld [vmem:[%s1 + $0x368] sm:$0xff]
      %v435 = vld [vmem:[%s1 + $0x370] sm:$0xff]
      %v436 = vld [vmem:[%s1 + $0x378] sm:$0xff]
      %v437 = vld [vmem:[%s1 + $0x380] sm:$0xff]
      %v438 = vld [vmem:[%s1 + $0x388] sm:$0xff]
      %v439 = vld [vmem:[%s1 + $0x390] sm:$0xff]
      %v440 = vld [vmem:[%s1 + $0x398] sm:$0xff]
      %v441 = vld [vmem:[%s1 + $0x3a0] sm:$0xff]
      %v442 = vld [vmem:[%s1 + $0x3a8] sm:$0xff]
      %v443 = vld [vmem:[%s1 + $0x3b0] sm:$0xff]
      %v444 = vld [vmem:[%s1 + $0x3b8] sm:$0xff]
      %v445 = vld [vmem:[%s1 + $0x3c0] sm:$0xff]
      %v446 = vld [vmem:[%s1 + $0x3c8] sm:$0xff]
      %v447 = vld [vmem:[%s1 + $0x3d0] sm:$0xff]
      %v448 = vld [vmem:[%s1 + $0x3d8] sm:$0xff]
      %v449 = vld [vmem:[%s1 + $0x3e0] sm:$0xff]
      %v450 = vld [vmem:[%s1 + $0x3e8] sm:$0xff]
      %v451 = vld [vmem:[%s1 + $0x3f0] sm:$0xff]
      %v452 = vld [vmem:[%s1 + $0x3f8] sm:$0xff]
      %v453 = vld [vmem:[%s1 + $0x400] sm:$0xff]
      %v454 = vld [vmem:[%s1 + $0x408] sm:$0xff]
      %v455 = vld [vmem:[%s1 + $0x410] sm:$0xff]
      %v456 = vld [vmem:[%s1 + $0x418] sm:$0xff]
      %v457 = vld [vmem:[%s1 + $0x420] sm:$0xff]
      %v458 = vld [vmem:[%s1 + $0x428] sm:$0xff]
      %v459 = vld [vmem:[%s1 + $0x430] sm:$0xff]
      %v460 = vld [vmem:[%s1 + $0x438] sm:$0xff]
      %v461 = vld [vmem:[%s1 + $0x440] sm:$0xff]
      %v462 = vld [vmem:[%s1 + $0x448] sm:$0xff]
      %v463 = vld [vmem:[%s1 + $0x450] sm:$0xff]
      %v464 = vld [vmem:[%s1 + $0x458] sm:$0xff]
      %v465 = vld [vmem:[%s1 + $0x460] sm:$0xff]
      %v466 = vld [vmem:[%s1 + $0x468] sm:$0xff]
      %v467 = vld [vmem:[%s1 + $0x470] sm:$0xff]
      %v468 = vld [vmem:[%s1 + $0x478] sm:$0xff]
      %v469 = vld [vmem:[%s1 + $0x480] sm:$0xff]
      %v470 = vld [vmem:[%s1 + $0x488] sm:$0xff]
      %v471 = vld [vmem:[%s1 + $0x490] sm:$0xff]
      %v472 = vld [vmem:[%s1 + $0x498] sm:$0xff]
      %v473 = vld [vmem:[%s1 + $0x4a0] sm:$0xff]
      %v474 = vld [vmem:[%s1 + $0x4a8] sm:$0xff]
      %v475 = vld [vmem:[%s1 + $0x4b0] sm:$0xff]
      %v476 = vld [vmem:[%s1 + $0x4b8] sm:$0xff]
      %v477 = vld [vmem:[%s1 + $0x4c0] sm:$0xff]
      %v478 = vld [vmem:[%s1 + $0x4c8] sm:$0xff]
      %v479 = vld [vmem:[%s1 + $0x4d0] sm:$0xff]
      %v480 = vld [vmem:[%s1 + $0x4d8] sm:$0xff]
      %v481 = vld [vmem:[%s1 + $0x4e0] sm:$0xff]
      %v482 = vld [vmem:[%s1 + $0x4e8] sm:$0xff]
      %v483 = vld [vmem:[%s1 + $0x4f0] sm:$0xff]
      %v484 = vld [vmem:[%s1 + $0x4f8] sm:$0xff]
      %v485 = vld [vmem:[%s1 + $0x500] sm:$0xff]
      %v486 = vld [vmem:[%s1 + $0x508] sm:$0xff]
      %v487 = vld [vmem:[%s1 + $0x510] sm:$0xff]
      %v488 = vld [vmem:[%s1 + $0x518] sm:$0xff]
      %v489 = vld [vmem:[%s1 + $0x520] sm:$0xff]
      %v490 = vld [vmem:[%s1 + $0x528] sm:$0xff]
      %v491 = vld [vmem:[%s1 + $0x530] sm:$0xff]
      %v492 = vld [vmem:[%s1 + $0x538] sm:$0xff]
      %v493 = vld [vmem:[%s1 + $0x540] sm:$0xff]
      %v494 = vld [vmem:[%s1 + $0x548] sm:$0xff]
      %v495 = vld [vmem:[%s1 + $0x550] sm:$0xff]
      %v496 = vld [vmem:[%s1 + $0x558] sm:$0xff]
      %v497 = vld [vmem:[%s1 + $0x560] sm:$0xff]
      %v498 = vld [vmem:[%s1 + $0x568] sm:$0xff]
      %v499 = vld [vmem:[%s1 + $0x570] sm:$0xff]
      %v500 = vld [vmem:[%s1 + $0x578] sm:$0xff]
      %v501 = vld [vmem:[%s1 + $0x580] sm:$0xff]
      %v502 = vld [vmem:[%s1 + $0x588] sm:$0xff]
      %v503 = vld [vmem:[%s1 + $0x590] sm:$0xff]
      %v504 = vld [vmem:[%s1 + $0x598] sm:$0xff]
      %v505 = vld [vmem:[%s1 + $0x5a0] sm:$0xff]
      %v506 = vld [vmem:[%s1 + $0x5a8] sm:$0xff]
      %v507 = vld [vmem:[%s1 + $0x5b0] sm:$0xff]
      %v508 = vld [vmem:[%s1 + $0x5b8] sm:$0xff]
      %v509 = vld [vmem:[%s1 + $0x5c0] sm:$0xff]
      %v510 = vld [vmem:[%s1 + $0x5c8] sm:$0xff]
      %v511 = vld [vmem:[%s1 + $0x5d0] sm:$0xff]
      %v512 = vld [vmem:[%s1 + $0x5d8] sm:$0xff]
      %v513 = vld [vmem:[%s1 + $0x5e0] sm:$0xff]
      %v514 = vld [vmem:[%s1 + $0x5e8] sm:$0xff]
      %v515 = vld [vmem:[%s1 + $0x5f0] sm:$0xff]
      %v516 = vld [vmem:[%s1 + $0x5f8] sm:$0xff]
      %v517 = vld [vmem:[%s1 + $0x600] sm:$0xff]
      %v518 = vld [vmem:[%s1 + $0x608] sm:$0xff]
      %v519 = vld [vmem:[%s1 + $0x610] sm:$0xff]
      %v520 = vld [vmem:[%s1 + $0x618] sm:$0xff]
      %v521 = vld [vmem:[%s1 + $0x620] sm:$0xff]
      %v522 = vld [vmem:[%s1 + $0x628] sm:$0xff]
      %v523 = vld [vmem:[%s1 + $0x630] sm:$0xff]
      %v524 = vld [vmem:[%s1 + $0x638] sm:$0xff]
      %v525 = vld [vmem:[%s1 + $0x640] sm:$0xff]
      %v526 = vld [vmem:[%s1 + $0x648] sm:$0xff]
      %v527 = vld [vmem:[%s1 + $0x650] sm:$0xff]
      %v528 = vld [vmem:[%s1 + $0x658] sm:$0xff]
      %v529 = vld [vmem:[%s1 + $0x660] sm:$0xff]
      %v530 = vld [vmem:[%s1 + $0x668] sm:$0xff]
      %v531 = vld [vmem:[%s1 + $0x670] sm:$0xff]
      %v532 = vld [vmem:[%s1 + $0x678] sm:$0xff]
      %v533 = vld [vmem:[%s1 + $0x680] sm:$0xff]
      %v534 = vld [vmem:[%s1 + $0x688] sm:$0xff]
      %v535 = vld [vmem:[%s1 + $0x690] sm:$0xff]
      %v536 = vld [vmem:[%s1 + $0x698] sm:$0xff]
      %v537 = vld [vmem:[%s1 + $0x6a0] sm:$0xff]
      %v538 = vld [vmem:[%s1 + $0x6a8] sm:$0xff]
      %v539 = vld [vmem:[%s1 + $0x6b0] sm:$0xff]
      %v540 = vld [vmem:[%s1 + $0x6b8] sm:$0xff]
      %v541 = vld [vmem:[%s1 + $0x6c0] sm:$0xff]
      %v542 = vld [vmem:[%s1 + $0x6c8] sm:$0xff]
      %v543 = vld [vmem:[%s1 + $0x6d0] sm:$0xff]
      %v544 = vld [vmem:[%s1 + $0x6d8] sm:$0xff]
      %v545 = vld [vmem:[%s1 + $0x6e0] sm:$0xff]
      %v546 = vld [vmem:[%s1 + $0x6e8] sm:$0xff]
      %v547 = vld [vmem:[%s1 + $0x6f0] sm:$0xff]
      %v548 = vld [vmem:[%s1 + $0x6f8] sm:$0xff]
      %v549 = vld [vmem:[%s1 + $0x700] sm:$0xff]
      %v550 = vld [vmem:[%s1 + $0x708] sm:$0xff]
      %v551 = vld [vmem:[%s1 + $0x710] sm:$0xff]
      %v552 = vld [vmem:[%s1 + $0x718] sm:$0xff]
      %v553 = vld [vmem:[%s1 + $0x720] sm:$0xff]
      %v554 = vld [vmem:[%s1 + $0x728] sm:$0xff]
      %v555 = vld [vmem:[%s1 + $0x730] sm:$0xff]
      %v556 = vld [vmem:[%s1 + $0x738] sm:$0xff]
      %v557 = vld [vmem:[%s1 + $0x740] sm:$0xff]
      %v558 = vld [vmem:[%s1 + $0x748] sm:$0xff]
      %v559 = vld [vmem:[%s1 + $0x750] sm:$0xff]
      %v560 = vld [vmem:[%s1 + $0x758] sm:$0xff]
      %v561 = vld [vmem:[%s1 + $0x760] sm:$0xff]
      %v562 = vld [vmem:[%s1 + $0x768] sm:$0xff]
      %v563 = vld [vmem:[%s1 + $0x770] sm:$0xff]
      %v564 = vld [vmem:[%s1 + $0x778] sm:$0xff]
      %v565 = vld [vmem:[%s1 + $0x780] sm:$0xff]
      %v566 = vld [vmem:[%s1 + $0x788] sm:$0xff]
      %v567 = vld [vmem:[%s1 + $0x790] sm:$0xff]
      %v568 = vld [vmem:[%s1 + $0x798] sm:$0xff]
      %v569 = vld [vmem:[%s1 + $0x7a0] sm:$0xff]
      %v570 = vld [vmem:[%s1 + $0x7a8] sm:$0xff]
      %v571 = vld [vmem:[%s1 + $0x7b0] sm:$0xff]
      %v572 = vld [vmem:[%s1 + $0x7b8] sm:$0xff]
      %v573 = vld [vmem:[%s1 + $0x7c0] sm:$0xff]
      %v574 = vld [vmem:[%s1 + $0x7c8] sm:$0xff]
      %v575 = vld [vmem:[%s1 + $0x7d0] sm:$0xff]
      %v576 = vld [vmem:[%s1 + $0x7d8] sm:$0xff]
      %v577 = vld [vmem:[%s1 + $0x7e0] sm:$0xff]
      %v578 = vld [vmem:[%s1 + $0x7e8] sm:$0xff]
      %v579 = vld [vmem:[%s1 + $0x7f0] sm:$0xff]
      %v580 = vld [vmem:[%s1 + $0x7f8] sm:$0xff]
      %v581 = vld [vmem:[%s1 + $0x800] sm:$0xff]
      %v582 = vld [vmem:[%s1 + $0x808] sm:$0xff]
      %v583 = vld [vmem:[%s1 + $0x810] sm:$0xff]
      %v584 = vld [vmem:[%s1 + $0x818] sm:$0xff]
      %v585 = vld [vmem:[%s1 + $0x820] sm:$0xff]
      %v586 = vld [vmem:[%s1 + $0x828] sm:$0xff]
      %v587 = vld [vmem:[%s1 + $0x830] sm:$0xff]
      %v588 = vld [vmem:[%s1 + $0x838] sm:$0xff]
      %v589 = vld [vmem:[%s1 + $0x840] sm:$0xff]
      %v590 = vld [vmem:[%s1 + $0x848] sm:$0xff]
      %v591 = vld [vmem:[%s1 + $0x850] sm:$0xff]
      %v592 = vld [vmem:[%s1 + $0x858] sm:$0xff]
      %v593 = vld [vmem:[%s1 + $0x860] sm:$0xff]
      %v594 = vld [vmem:[%s1 + $0x868] sm:$0xff]
      %v595 = vld [vmem:[%s1 + $0x870] sm:$0xff]
      %v596 = vld [vmem:[%s1 + $0x878] sm:$0xff]
      %v597 = vld [vmem:[%s1 + $0x880] sm:$0xff]
      %v598 = vld [vmem:[%s1 + $0x888] sm:$0xff]
      %v599 = vld [vmem:[%s1 + $0x890] sm:$0xff]
      %v600 = vld [vmem:[%s1 + $0x898] sm:$0xff]
      %v601 = vld [vmem:[%s1 + $0x8a0] sm:$0xff]
      %v602 = vld [vmem:[%s1 + $0x8a8] sm:$0xff]
      %v603 = vld [vmem:[%s1 + $0x8b0] sm:$0xff]
      %v604 = vld [vmem:[%s1 + $0x8b8] sm:$0xff]
      %v605 = vld [vmem:[%s1 + $0x8c0] sm:$0xff]
      %v606 = vld [vmem:[%s1 + $0x8c8] sm:$0xff]
      %v607 = vld [vmem:[%s1 + $0x8d0] sm:$0xff]
      %v608 = vld [vmem:[%s1 + $0x8d8] sm:$0xff]
      %v609 = vld [vmem:[%s1 + $0x8e0] sm:$0xff]
      %v610 = vld [vmem:[%s1 + $0x8e8] sm:$0xff]
      %v611 = vld [vmem:[%s1 + $0x8f0] sm:$0xff]
      %v612 = vld [vmem:[%s1 + $0x8f8] sm:$0xff]
      %v613 = vld [vmem:[%s1 + $0x900] sm:$0xff]
      %v614 = vld [vmem:[%s1 + $0x908] sm:$0xff]
      %v615 = vld [vmem:[%s1 + $0x910] sm:$0xff]
      %v616 = vld [vmem:[%s1 + $0x918] sm:$0xff]
      %v617 = vld [vmem:[%s1 + $0x920] sm:$0xff]
      %v618 = vld [vmem:[%s1 + $0x928] sm:$0xff]
      %v619 = vld [vmem:[%s1 + $0x930] sm:$0xff]
      %v620 = vld [vmem:[%s1 + $0x938] sm:$0xff]
      %v621 = vld [vmem:[%s1 + $0x940] sm:$0xff]
      %v622 = vld [vmem:[%s1 + $0x948] sm:$0xff]
      %v623 = vld [vmem:[%s1 + $0x950] sm:$0xff]
      %v624 = vld [vmem:[%s1 + $0x958] sm:$0xff]
      %v625 = vld [vmem:[%s1 + $0x960] sm:$0xff]
      %v626 = vld [vmem:[%s1 + $0x968] sm:$0xff]
      %v627 = vld [vmem:[%s1 + $0x970] sm:$0xff]
      %v628 = vld [vmem:[%s1 + $0x978] sm:$0xff]
      %v629 = vld [vmem:[%s1 + $0x980] sm:$0xff]
      %v630 = vld [vmem:[%s1 + $0x988] sm:$0xff]
      %v631 = vld [vmem:[%s1 + $0x990] sm:$0xff]
      %v632 = vld [vmem:[%s1 + $0x998] sm:$0xff]
      %v633 = vld [vmem:[%s1 + $0x9a0] sm:$0xff]
      %v634 = vld [vmem:[%s1 + $0x9a8] sm:$0xff]
      %v635 = vld [vmem:[%s1 + $0x9b0] sm:$0xff]
      %v636 = vld [vmem:[%s1 + $0x9b8] sm:$0xff]
      %v637 = vld [vmem:[%s1 + $0x9c0] sm:$0xff]
      %v638 = vld [vmem:[%s1 + $0x9c8] sm:$0xff]
      %v639 = vld [vmem:[%s1 + $0x9d0] sm:$0xff]
      %v640 = vld [vmem:[%s1 + $0x9d8] sm:$0xff]
      %v641 = vld [vmem:[%s1 + $0x9e0] sm:$0xff]
      %v642 = vld [vmem:[%s1 + $0x9e8] sm:$0xff]
      %v643 = vld [vmem:[%s1 + $0x9f0] sm:$0xff]
      %v644 = vld [vmem:[%s1 + $0x9f8] sm:$0xff]
      %v645 = vld [vmem:[%s1 + $0xa00] sm:$0xff]
      %v646 = vld [vmem:[%s1 + $0xa08] sm:$0xff]
      %v647 = vld [vmem:[%s1 + $0xa10] sm:$0xff]
      %v648 = vld [vmem:[%s1 + $0xa18] sm:$0xff]
      %v649 = vld [vmem:[%s1 + $0xa20] sm:$0xff]
      %v650 = vld [vmem:[%s1 + $0xa28] sm:$0xff]
      %v651 = vld [vmem:[%s1 + $0xa30] sm:$0xff]
      %v652 = vld [vmem:[%s1 + $0xa38] sm:$0xff]
      %v653 = vld [vmem:[%s1 + $0xa40] sm:$0xff]
      %v654 = vld [vmem:[%s1 + $0xa48] sm:$0xff]
      %v655 = vld [vmem:[%s1 + $0xa50] sm:$0xff]
      %v656 = vld [vmem:[%s1 + $0xa58] sm:$0xff]
      %v657 = vld [vmem:[%s1 + $0xa60] sm:$0xff]
      %v658 = vld [vmem:[%s1 + $0xa68] sm:$0xff]
      %v659 = vld [vmem:[%s1 + $0xa70] sm:$0xff]
      %v660 = vld [vmem:[%s1 + $0xa78] sm:$0xff]
      %v661 = vld [vmem:[%s1 + $0xa80] sm:$0xff]
      %v662 = vld [vmem:[%s1 + $0xa88] sm:$0xff]
      %v663 = vld [vmem:[%s1 + $0xa90] sm:$0xff]
      %v664 = vld [vmem:[%s1 + $0xa98] sm:$0xff]
      %v665 = vld [vmem:[%s1 + $0xaa0] sm:$0xff]
      %v666 = vld [vmem:[%s1 + $0xaa8] sm:$0xff]
      %v667 = vld [vmem:[%s1 + $0xab0] sm:$0xff]
      %v668 = vld [vmem:[%s1 + $0xab8] sm:$0xff]
      %v669 = vld [vmem:[%s1 + $0xac0] sm:$0xff]
      %v670 = vld [vmem:[%s1 + $0xac8] sm:$0xff]
      %v671 = vld [vmem:[%s1 + $0xad0] sm:$0xff]
      %v672 = vld [vmem:[%s1 + $0xad8] sm:$0xff]
      %v673 = vld [vmem:[%s1 + $0xae0] sm:$0xff]
      %v674 = vld [vmem:[%s1 + $0xae8] sm:$0xff]
      %v675 = vld [vmem:[%s1 + $0xaf0] sm:$0xff]
      %v676 = vld [vmem:[%s1 + $0xaf8] sm:$0xff]
      %v677 = vld [vmem:[%s1 + $0xb00] sm:$0xff]
      %v678 = vld [vmem:[%s1 + $0xb08] sm:$0xff]
      %v679 = vld [vmem:[%s1 + $0xb10] sm:$0xff]
      %v680 = vld [vmem:[%s1 + $0xb18] sm:$0xff]
      %v681 = vld [vmem:[%s1 + $0xb20] sm:$0xff]
      %v682 = vld [vmem:[%s1 + $0xb28] sm:$0xff]
      %v683 = vld [vmem:[%s1 + $0xb30] sm:$0xff]
      %v684 = vld [vmem:[%s1 + $0xb38] sm:$0xff]
      %v685 = vld [vmem:[%s1 + $0xb40] sm:$0xff]
      %v686 = vld [vmem:[%s1 + $0xb48] sm:$0xff]
      %v687 = vld [vmem:[%s1 + $0xb50] sm:$0xff]
      %v688 = vld [vmem:[%s1 + $0xb58] sm:$0xff]
      %v689 = vld [vmem:[%s1 + $0xb60] sm:$0xff]
      %v690 = vld [vmem:[%s1 + $0xb68] sm:$0xff]
      %v691 = vld [vmem:[%s1 + $0xb70] sm:$0xff]
      %v692 = vld [vmem:[%s1 + $0xb78] sm:$0xff]
      %v693 = vld [vmem:[%s1 + $0xb80] sm:$0xff]
      %v694 = vld [vmem:[%s1 + $0xb88] sm:$0xff]
      %v695 = vld [vmem:[%s1 + $0xb90] sm:$0xff]
      %v696 = vld [vmem:[%s1 + $0xb98] sm:$0xff]
      %v697 = vld [vmem:[%s1 + $0xba0] sm:$0xff]
      %v698 = vld [vmem:[%s1 + $0xba8] sm:$0xff]
      %v699 = vld [vmem:[%s1 + $0xbb0] sm:$0xff]
      %v700 = vld [vmem:[%s1 + $0xbb8] sm:$0xff]
      %v701 = vld [vmem:[%s1 + $0xbc0] sm:$0xff]
      %v702 = vld [vmem:[%s1 + $0xbc8] sm:$0xff]
      %v703 = vld [vmem:[%s1 + $0xbd0] sm:$0xff]
      %v704 = vld [vmem:[%s1 + $0xbd8] sm:$0xff]
      %v705 = vld [vmem:[%s1 + $0xbe0] sm:$0xff]
      %v706 = vld [vmem:[%s1 + $0xbe8] sm:$0xff]
      %v707 = vld [vmem:[%s1 + $0xbf0] sm:$0xff]
      %v708 = vld [vmem:[%s1 + $0xbf8] sm:$0xff]
      %v709 = vld [vmem:[%s1 + $0xc00] sm:$0xff]
      %v710 = vld [vmem:[%s1 + $0xc08] sm:$0xff]
      %v711 = vld [vmem:[%s1 + $0xc10] sm:$0xff]
      %v712 = vld [vmem:[%s1 + $0xc18] sm:$0xff]
      %v713 = vld [vmem:[%s1 + $0xc20] sm:$0xff]
      %v714 = vld [vmem:[%s1 + $0xc28] sm:$0xff]
      %v715 = vld [vmem:[%s1 + $0xc30] sm:$0xff]
      %v716 = vld [vmem:[%s1 + $0xc38] sm:$0xff]
      %v717 = vld [vmem:[%s1 + $0xc40] sm:$0xff]
      %v718 = vld [vmem:[%s1 + $0xc48] sm:$0xff]
      %v719 = vld [vmem:[%s1 + $0xc50] sm:$0xff]
      %v720 = vld [vmem:[%s1 + $0xc58] sm:$0xff]
      %v721 = vld [vmem:[%s1 + $0xc60] sm:$0xff]
      %v722 = vld [vmem:[%s1 + $0xc68] sm:$0xff]
      %v723 = vld [vmem:[%s1 + $0xc70] sm:$0xff]
      %v724 = vld [vmem:[%s1 + $0xc78] sm:$0xff]
      %v725 = vld [vmem:[%s1 + $0xc80] sm:$0xff]
      %v726 = vld [vmem:[%s1 + $0xc88] sm:$0xff]
      %v727 = vld [vmem:[%s1 + $0xc90] sm:$0xff]
      %v728 = vld [vmem:[%s1 + $0xc98] sm:$0xff]
      %v729 = vld [vmem:[%s1 + $0xca0] sm:$0xff]
      %v730 = vld [vmem:[%s1 + $0xca8] sm:$0xff]
      %v731 = vld [vmem:[%s1 + $0xcb0] sm:$0xff]
      %v732 = vld [vmem:[%s1 + $0xcb8] sm:$0xff]
      %v733 = vld [vmem:[%s1 + $0xcc0] sm:$0xff]
      %v734 = vld [vmem:[%s1 + $0xcc8] sm:$0xff]
      %v735 = vld [vmem:[%s1 + $0xcd0] sm:$0xff]
      %v736 = vld [vmem:[%s1 + $0xcd8] sm:$0xff]
      %v737 = vld [vmem:[%s1 + $0xce0] sm:$0xff]
      %v738 = vld [vmem:[%s1 + $0xce8] sm:$0xff]
      %v739 = vld [vmem:[%s1 + $0xcf0] sm:$0xff]
      %v740 = vld [vmem:[%s1 + $0xcf8] sm:$0xff]
      %v741 = vld [vmem:[%s1 + $0xd00] sm:$0xff]
      %v742 = vld [vmem:[%s1 + $0xd08] sm:$0xff]
      %v743 = vld [vmem:[%s1 + $0xd10] sm:$0xff]
      %v744 = vld [vmem:[%s1 + $0xd18] sm:$0xff]
      %v745 = vld [vmem:[%s1 + $0xd20] sm:$0xff]
      %v746 = vld [vmem:[%s1 + $0xd28] sm:$0xff]
      %v747 = vld [vmem:[%s1 + $0xd30] sm:$0xff]
      %v748 = vld [vmem:[%s1 + $0xd38] sm:$0xff]
      %v749 = vld [vmem:[%s1 + $0xd40] sm:$0xff]
      %v750 = vld [vmem:[%s1 + $0xd48] sm:$0xff]
      %v751 = vld [vmem:[%s1 + $0xd50] sm:$0xff]
      %v752 = vld [vmem:[%s1 + $0xd58] sm:$0xff]
      %v753 = vld [vmem:[%s1 + $0xd60] sm:$0xff]
      %v754 = vld [vmem:[%s1 + $0xd68] sm:$0xff]
      %v755 = vld [vmem:[%s1 + $0xd70] sm:$0xff]
      %v756 = vld [vmem:[%s1 + $0xd78] sm:$0xff]
      %v757 = vld [vmem:[%s1 + $0xd80] sm:$0xff]
      %v758 = vld [vmem:[%s1 + $0xd88] sm:$0xff]
      %v759 = vld [vmem:[%s1 + $0xd90] sm:$0xff]
      %v760 = vld [vmem:[%s1 + $0xd98] sm:$0xff]
      %v761 = vld [vmem:[%s1 + $0xda0] sm:$0xff]
      %v762 = vld [vmem:[%s1 + $0xda8] sm:$0xff]
      %v763 = vld [vmem:[%s1 + $0xdb0] sm:$0xff]
      %v764 = vld [vmem:[%s1 + $0xdb8] sm:$0xff]
      %v765 = vld [vmem:[%s1 + $0xdc0] sm:$0xff]
      %v766 = vld [vmem:[%s1 + $0xdc8] sm:$0xff]
      %v767 = vld [vmem:[%s1 + $0xdd0] sm:$0xff]
      %v768 = vld [vmem:[%s1 + $0xdd8] sm:$0xff]
      %v769 = vld [vmem:[%s1 + $0xde0] sm:$0xff]
      %v770 = vld [vmem:[%s1 + $0xde8] sm:$0xff]
      %v771 = vld [vmem:[%s1 + $0xdf0] sm:$0xff]
      %v772 = vld [vmem:[%s1 + $0xdf8] sm:$0xff]
      %v773 = vld [vmem:[%s1 + $0xe00] sm:$0xff]
      %v774 = vld [vmem:[%s1 + $0xe08] sm:$0xff]
      %v775 = vld [vmem:[%s1 + $0xe10] sm:$0xff]
      %v776 = vld [vmem:[%s1 + $0xe18] sm:$0xff]
      %v777 = vld [vmem:[%s1 + $0xe20] sm:$0xff]
      %v778 = vld [vmem:[%s1 + $0xe28] sm:$0xff]
      %v779 = vld [vmem:[%s1 + $0xe30] sm:$0xff]
      %v780 = vld [vmem:[%s1 + $0xe38] sm:$0xff]
      %v781 = vld [vmem:[%s1 + $0xe40] sm:$0xff]
      %v782 = vld [vmem:[%s1 + $0xe48] sm:$0xff]
      %v783 = vld [vmem:[%s1 + $0xe50] sm:$0xff]
      %v784 = vld [vmem:[%s1 + $0xe58] sm:$0xff]
      %v785 = vld [vmem:[%s1 + $0xe60] sm:$0xff]
      %v786 = vld [vmem:[%s1 + $0xe68] sm:$0xff]
      %v787 = vld [vmem:[%s1 + $0xe70] sm:$0xff]
      %v788 = vld [vmem:[%s1 + $0xe78] sm:$0xff]
      %v789 = vld [vmem:[%s1 + $0xe80] sm:$0xff]
      %v790 = vld [vmem:[%s1 + $0xe88] sm:$0xff]
      %v791 = vld [vmem:[%s1 + $0xe90] sm:$0xff]
      %v792 = vld [vmem:[%s1 + $0xe98] sm:$0xff]
      %v793 = vld [vmem:[%s1 + $0xea0] sm:$0xff]
      %v794 = vld [vmem:[%s1 + $0xea8] sm:$0xff]
      %v795 = vld [vmem:[%s1 + $0xeb0] sm:$0xff]
      %v796 = vld [vmem:[%s1 + $0xeb8] sm:$0xff]
      %v797 = vld [vmem:[%s1 + $0xec0] sm:$0xff]
      %v798 = vld [vmem:[%s1 + $0xec8] sm:$0xff]
      %v799 = vld [vmem:[%s1 + $0xed0] sm:$0xff]
      %v800 = vld [vmem:[%s1 + $0xed8] sm:$0xff]
      %v801 = vld [vmem:[%s1 + $0xee0] sm:$0xff]
      %v802 = vld [vmem:[%s1 + $0xee8] sm:$0xff]
      %v803 = vld [vmem:[%s1 + $0xef0] sm:$0xff]
      %v804 = vld [vmem:[%s1 + $0xef8] sm:$0xff]
      %v805 = vld [vmem:[%s1 + $0xf00] sm:$0xff]
      %v806 = vld [vmem:[%s1 + $0xf08] sm:$0xff]
      %v807 = vld [vmem:[%s1 + $0xf10] sm:$0xff]
      %v808 = vld [vmem:[%s1 + $0xf18] sm:$0xff]
      %v809 = vld [vmem:[%s1 + $0xf20] sm:$0xff]
      %v810 = vld [vmem:[%s1 + $0xf28] sm:$0xff]
      %v811 = vld [vmem:[%s1 + $0xf30] sm:$0xff]
      %v812 = vld [vmem:[%s1 + $0xf38] sm:$0xff]
      %v813 = vld [vmem:[%s1 + $0xf40] sm:$0xff]
      %v814 = vld [vmem:[%s1 + $0xf48] sm:$0xff]
      %v815 = vld [vmem:[%s1 + $0xf50] sm:$0xff]
      %v816 = vld [vmem:[%s1 + $0xf58] sm:$0xff]
      %v817 = vld [vmem:[%s1 + $0xf60] sm:$0xff]
      %v818 = vld [vmem:[%s1 + $0xf68] sm:$0xff]
      %v819 = vld [vmem:[%s1 + $0xf70] sm:$0xff]
      %v820 = vld [vmem:[%s1 + $0xf78] sm:$0xff]
      %v821 = vld [vmem:[%s1 + $0xf80] sm:$0xff]
      %v822 = vld [vmem:[%s1 + $0xf88] sm:$0xff]
      %v823 = vld [vmem:[%s1 + $0xf90] sm:$0xff]
      %v824 = vld [vmem:[%s1 + $0xf98] sm:$0xff]
      %v825 = vld [vmem:[%s1 + $0xfa0] sm:$0xff]
      %v826 = vld [vmem:[%s1 + $0xfa8] sm:$0xff]
      %v827 = vld [vmem:[%s1 + $0xfb0] sm:$0xff]
      %v828 = vld [vmem:[%s1 + $0xfb8] sm:$0xff]
      %v829 = vld [vmem:[%s1 + $0xfc0] sm:$0xff]
      %v830 = vld [vmem:[%s1 + $0xfc8] sm:$0xff]
      %v831 = vld [vmem:[%s1 + $0xfd0] sm:$0xff]
      %v832 = vld [vmem:[%s1 + $0xfd8] sm:$0xff]
      %v833 = vld [vmem:[%s1 + $0xfe0] sm:$0xff]
      %v834 = vld [vmem:[%s1 + $0xfe8] sm:$0xff]
      %v835 = vld [vmem:[%s1 + $0xff0] sm:$0xff]
      %v836 = vld [vmem:[%s1 + $0xff8] sm:$0xff]
      %v837 = vld [vmem:[%s2] sm:$0xff]
      %v838 = vld [vmem:[%s2 + $0x8] sm:$0xff]
      %v841 = vlaneseq
      %v842 = vshrl.u32 %v841, 7
      %v843 = vsub.s32 0, %v842
      %v844 = vrot.slane %v837, %v843
      %v845 = vlaneseq
      %v846 = vshrl.u32 %v845, 7
      %v847 = vsub.s32 1, %v846
      %v848 = vrot.slane %v837, %v847
      %v849 = vlaneseq
      %v850 = vshrl.u32 %v849, 7
      %v851 = vsub.s32 2, %v850
      %v852 = vrot.slane %v837, %v851
      %v853 = vlaneseq
      %v854 = vshrl.u32 %v853, 7
      %v855 = vsub.s32 3, %v854
      %v856 = vrot.slane %v837, %v855
      %v857 = vlaneseq
      %v858 = vshrl.u32 %v857, 7
      %v859 = vsub.s32 4, %v858
      %v860 = vrot.slane %v837, %v859
      %v861 = vlaneseq
      %v862 = vshrl.u32 %v861, 7
      %v863 = vsub.s32 5, %v862
      %v864 = vrot.slane %v837, %v863
      %v865 = vlaneseq
      %v866 = vshrl.u32 %v865, 7
      %v867 = vsub.s32 6, %v866
      %v868 = vrot.slane %v837, %v867
      %v869 = vlaneseq
      %v870 = vshrl.u32 %v869, 7
      %v871 = vsub.s32 7, %v870
      %v872 = vrot.slane %v837, %v871
      %v873 = vlaneseq
      %v874 = vshrl.u32 %v873, 7
      %v875 = vsub.s32 0, %v874
      %v876 = vrot.slane %v838, %v875
      %v877 = vlaneseq
      %v878 = vshrl.u32 %v877, 7
      %v879 = vsub.s32 1, %v878
      %v880 = vrot.slane %v838, %v879
      %v881 = vlaneseq
      %v882 = vshrl.u32 %v881, 7
      %v883 = vsub.s32 2, %v882
      %v884 = vrot.slane %v838, %v883
      %v885 = vlaneseq
      %v886 = vshrl.u32 %v885, 7
      %v887 = vsub.s32 3, %v886
      %v888 = vrot.slane %v838, %v887
      %v889 = vlaneseq
      %v890 = vshrl.u32 %v889, 7
      %v891 = vsub.s32 4, %v890
      %v892 = vrot.slane %v838, %v891
      %v893 = vlaneseq
      %v894 = vshrl.u32 %v893, 7
      %v895 = vsub.s32 5, %v894
      %v896 = vrot.slane %v838, %v895
      %v897 = vlaneseq
      %v898 = vshrl.u32 %v897, 7
      %v899 = vsub.s32 6, %v898
      %v900 = vrot.slane %v838, %v899
      %v901 = vlaneseq
      %v902 = vshrl.u32 %v901, 7
      %v903 = vsub.s32 7, %v902
      %v904 = vrot.slane %v838, %v903
      %v1433 = vunpack.c.l.b16 %v325
      %v1434 = vunpack.c.h.b16 %v325
      %v1435 = vunpack.c.l.b16 %v326
      %v1436 = vunpack.c.h.b16 %v326
      %v1437 = vunpack.c.l.b16 %v327
      %v1438 = vunpack.c.h.b16 %v327
      %v1439 = vunpack.c.l.b16 %v328
      %v1440 = vunpack.c.h.b16 %v328
      %v1441 = vunpack.c.l.b16 %v329
      %v1442 = vunpack.c.h.b16 %v329
      %v1443 = vunpack.c.l.b16 %v330
      %v1444 = vunpack.c.h.b16 %v330
      %v1445 = vunpack.c.l.b16 %v331
      %v1446 = vunpack.c.h.b16 %v331
      %v1447 = vunpack.c.l.b16 %v332
      %v1448 = vunpack.c.h.b16 %v332
      %v1449 = vunpack.c.l.b16 %v333
      %v1450 = vunpack.c.h.b16 %v333
      %v1451 = vunpack.c.l.b16 %v334
      %v1452 = vunpack.c.h.b16 %v334
      %v1453 = vunpack.c.l.b16 %v335
      %v1454 = vunpack.c.h.b16 %v335
      %v1455 = vunpack.c.l.b16 %v336
      %v1456 = vunpack.c.h.b16 %v336
      %v1457 = vunpack.c.l.b16 %v337
      %v1458 = vunpack.c.h.b16 %v337
      %v1459 = vunpack.c.l.b16 %v338
      %v1460 = vunpack.c.h.b16 %v338
      %v1461 = vunpack.c.l.b16 %v339
      %v1462 = vunpack.c.h.b16 %v339
      %v1463 = vunpack.c.l.b16 %v340
      %v1464 = vunpack.c.h.b16 %v340
      %v1465 = vunpack.c.l.b16 %v341
      %v1466 = vunpack.c.h.b16 %v341
      %v1467 = vunpack.c.l.b16 %v342
      %v1468 = vunpack.c.h.b16 %v342
      %v1469 = vunpack.c.l.b16 %v343
      %v1470 = vunpack.c.h.b16 %v343
      %v1471 = vunpack.c.l.b16 %v344
      %v1472 = vunpack.c.h.b16 %v344
      %v1473 = vunpack.c.l.b16 %v345
      %v1474 = vunpack.c.h.b16 %v345
      %v1475 = vunpack.c.l.b16 %v346
      %v1476 = vunpack.c.h.b16 %v346
      %v1477 = vunpack.c.l.b16 %v347
      %v1478 = vunpack.c.h.b16 %v347
      %v1479 = vunpack.c.l.b16 %v348
      %v1480 = vunpack.c.h.b16 %v348
      %v1481 = vunpack.c.l.b16 %v349
      %v1482 = vunpack.c.h.b16 %v349
      %v1483 = vunpack.c.l.b16 %v350
      %v1484 = vunpack.c.h.b16 %v350
      %v1485 = vunpack.c.l.b16 %v351
      %v1486 = vunpack.c.h.b16 %v351
      %v1487 = vunpack.c.l.b16 %v352
      %v1488 = vunpack.c.h.b16 %v352
      %v1489 = vunpack.c.l.b16 %v353
      %v1490 = vunpack.c.h.b16 %v353
      %v1491 = vunpack.c.l.b16 %v354
      %v1492 = vunpack.c.h.b16 %v354
      %v1493 = vunpack.c.l.b16 %v355
      %v1494 = vunpack.c.h.b16 %v355
      %v1495 = vunpack.c.l.b16 %v356
      %v1496 = vunpack.c.h.b16 %v356
      %v1497 = vunpack.c.l.b16 %v357
      %v1498 = vunpack.c.h.b16 %v357
      %v1499 = vunpack.c.l.b16 %v358
      %v1500 = vunpack.c.h.b16 %v358
      %v1501 = vunpack.c.l.b16 %v359
      %v1502 = vunpack.c.h.b16 %v359
      %v1503 = vunpack.c.l.b16 %v360
      %v1504 = vunpack.c.h.b16 %v360
      %v1505 = vunpack.c.l.b16 %v361
      %v1506 = vunpack.c.h.b16 %v361
      %v1507 = vunpack.c.l.b16 %v362
      %v1508 = vunpack.c.h.b16 %v362
      %v1509 = vunpack.c.l.b16 %v363
      %v1510 = vunpack.c.h.b16 %v363
      %v1511 = vunpack.c.l.b16 %v364
      %v1512 = vunpack.c.h.b16 %v364
      %v1513 = vunpack.c.l.b16 %v365
      %v1514 = vunpack.c.h.b16 %v365
      %v1515 = vunpack.c.l.b16 %v366
      %v1516 = vunpack.c.h.b16 %v366
      %v1517 = vunpack.c.l.b16 %v367
      %v1518 = vunpack.c.h.b16 %v367
      %v1519 = vunpack.c.l.b16 %v368
      %v1520 = vunpack.c.h.b16 %v368
      %v1521 = vunpack.c.l.b16 %v369
      %v1522 = vunpack.c.h.b16 %v369
      %v1523 = vunpack.c.l.b16 %v370
      %v1524 = vunpack.c.h.b16 %v370
      %v1525 = vunpack.c.l.b16 %v371
      %v1526 = vunpack.c.h.b16 %v371
      %v1527 = vunpack.c.l.b16 %v372
      %v1528 = vunpack.c.h.b16 %v372
      %v1529 = vunpack.c.l.b16 %v373
      %v1530 = vunpack.c.h.b16 %v373
      %v1531 = vunpack.c.l.b16 %v374
      %v1532 = vunpack.c.h.b16 %v374
      %v1533 = vunpack.c.l.b16 %v375
      %v1534 = vunpack.c.h.b16 %v375
      %v1535 = vunpack.c.l.b16 %v376
      %v1536 = vunpack.c.h.b16 %v376
      %v1537 = vunpack.c.l.b16 %v377
      %v1538 = vunpack.c.h.b16 %v377
      %v1539 = vunpack.c.l.b16 %v378
      %v1540 = vunpack.c.h.b16 %v378
      %v1541 = vunpack.c.l.b16 %v379
      %v1542 = vunpack.c.h.b16 %v379
      %v1543 = vunpack.c.l.b16 %v380
      %v1544 = vunpack.c.h.b16 %v380
      %v1545 = vunpack.c.l.b16 %v381
      %v1546 = vunpack.c.h.b16 %v381
      %v1547 = vunpack.c.l.b16 %v382
      %v1548 = vunpack.c.h.b16 %v382
      %v1549 = vunpack.c.l.b16 %v383
      %v1550 = vunpack.c.h.b16 %v383
      %v1551 = vunpack.c.l.b16 %v384
      %v1552 = vunpack.c.h.b16 %v384
      %v1553 = vunpack.c.l.b16 %v385
      %v1554 = vunpack.c.h.b16 %v385
      %v1555 = vunpack.c.l.b16 %v386
      %v1556 = vunpack.c.h.b16 %v386
      %v1557 = vunpack.c.l.b16 %v387
      %v1558 = vunpack.c.h.b16 %v387
      %v1559 = vunpack.c.l.b16 %v388
      %v1560 = vunpack.c.h.b16 %v388
      %v1561 = vunpack.c.l.b16 %v389
      %v1562 = vunpack.c.h.b16 %v389
      %v1563 = vunpack.c.l.b16 %v390
      %v1564 = vunpack.c.h.b16 %v390
      %v1565 = vunpack.c.l.b16 %v391
      %v1566 = vunpack.c.h.b16 %v391
      %v1567 = vunpack.c.l.b16 %v392
      %v1568 = vunpack.c.h.b16 %v392
      %v1569 = vunpack.c.l.b16 %v393
      %v1570 = vunpack.c.h.b16 %v393
      %v1571 = vunpack.c.l.b16 %v394
      %v1572 = vunpack.c.h.b16 %v394
      %v1573 = vunpack.c.l.b16 %v395
      %v1574 = vunpack.c.h.b16 %v395
      %v1575 = vunpack.c.l.b16 %v396
      %v1576 = vunpack.c.h.b16 %v396
      %v1577 = vunpack.c.l.b16 %v397
      %v1578 = vunpack.c.h.b16 %v397
      %v1579 = vunpack.c.l.b16 %v398
      %v1580 = vunpack.c.h.b16 %v398
      %v1581 = vunpack.c.l.b16 %v399
      %v1582 = vunpack.c.h.b16 %v399
      %v1583 = vunpack.c.l.b16 %v400
      %v1584 = vunpack.c.h.b16 %v400
      %v1585 = vunpack.c.l.b16 %v401
      %v1586 = vunpack.c.h.b16 %v401
      %v1587 = vunpack.c.l.b16 %v402
      %v1588 = vunpack.c.h.b16 %v402
      %v1589 = vunpack.c.l.b16 %v403
      %v1590 = vunpack.c.h.b16 %v403
      %v1591 = vunpack.c.l.b16 %v404
      %v1592 = vunpack.c.h.b16 %v404
      %v1593 = vunpack.c.l.b16 %v405
      %v1594 = vunpack.c.h.b16 %v405
      %v1595 = vunpack.c.l.b16 %v406
      %v1596 = vunpack.c.h.b16 %v406
      %v1597 = vunpack.c.l.b16 %v407
      %v1598 = vunpack.c.h.b16 %v407
      %v1599 = vunpack.c.l.b16 %v408
      %v1600 = vunpack.c.h.b16 %v408
      %v1601 = vunpack.c.l.b16 %v409
      %v1602 = vunpack.c.h.b16 %v409
      %v1603 = vunpack.c.l.b16 %v410
      %v1604 = vunpack.c.h.b16 %v410
      %v1605 = vunpack.c.l.b16 %v411
      %v1606 = vunpack.c.h.b16 %v411
      %v1607 = vunpack.c.l.b16 %v412
      %v1608 = vunpack.c.h.b16 %v412
      %v1609 = vunpack.c.l.b16 %v413
      %v1610 = vunpack.c.h.b16 %v413
      %v1611 = vunpack.c.l.b16 %v414
      %v1612 = vunpack.c.h.b16 %v414
      %v1613 = vunpack.c.l.b16 %v415
      %v1614 = vunpack.c.h.b16 %v415
      %v1615 = vunpack.c.l.b16 %v416
      %v1616 = vunpack.c.h.b16 %v416
      %v1617 = vunpack.c.l.b16 %v417
      %v1618 = vunpack.c.h.b16 %v417
      %v1619 = vunpack.c.l.b16 %v418
      %v1620 = vunpack.c.h.b16 %v418
      %v1621 = vunpack.c.l.b16 %v419
      %v1622 = vunpack.c.h.b16 %v419
      %v1623 = vunpack.c.l.b16 %v420
      %v1624 = vunpack.c.h.b16 %v420
      %v1625 = vunpack.c.l.b16 %v421
      %v1626 = vunpack.c.h.b16 %v421
      %v1627 = vunpack.c.l.b16 %v422
      %v1628 = vunpack.c.h.b16 %v422
      %v1629 = vunpack.c.l.b16 %v423
      %v1630 = vunpack.c.h.b16 %v423
      %v1631 = vunpack.c.l.b16 %v424
      %v1632 = vunpack.c.h.b16 %v424
      %v1633 = vunpack.c.l.b16 %v425
      %v1634 = vunpack.c.h.b16 %v425
      %v1635 = vunpack.c.l.b16 %v426
      %v1636 = vunpack.c.h.b16 %v426
      %v1637 = vunpack.c.l.b16 %v427
      %v1638 = vunpack.c.h.b16 %v427
      %v1639 = vunpack.c.l.b16 %v428
      %v1640 = vunpack.c.h.b16 %v428
      %v1641 = vunpack.c.l.b16 %v429
      %v1642 = vunpack.c.h.b16 %v429
      %v1643 = vunpack.c.l.b16 %v430
      %v1644 = vunpack.c.h.b16 %v430
      %v1645 = vunpack.c.l.b16 %v431
      %v1646 = vunpack.c.h.b16 %v431
      %v1647 = vunpack.c.l.b16 %v432
      %v1648 = vunpack.c.h.b16 %v432
      %v1649 = vunpack.c.l.b16 %v433
      %v1650 = vunpack.c.h.b16 %v433
      %v1651 = vunpack.c.l.b16 %v434
      %v1652 = vunpack.c.h.b16 %v434
      %v1653 = vunpack.c.l.b16 %v435
      %v1654 = vunpack.c.h.b16 %v435
      %v1655 = vunpack.c.l.b16 %v436
      %v1656 = vunpack.c.h.b16 %v436
      %v1657 = vunpack.c.l.b16 %v437
      %v1658 = vunpack.c.h.b16 %v437
      %v1659 = vunpack.c.l.b16 %v438
      %v1660 = vunpack.c.h.b16 %v438
      %v1661 = vunpack.c.l.b16 %v439
      %v1662 = vunpack.c.h.b16 %v439
      %v1663 = vunpack.c.l.b16 %v440
      %v1664 = vunpack.c.h.b16 %v440
      %v1665 = vunpack.c.l.b16 %v441
      %v1666 = vunpack.c.h.b16 %v441
      %v1667 = vunpack.c.l.b16 %v442
      %v1668 = vunpack.c.h.b16 %v442
      %v1669 = vunpack.c.l.b16 %v443
      %v1670 = vunpack.c.h.b16 %v443
      %v1671 = vunpack.c.l.b16 %v444
      %v1672 = vunpack.c.h.b16 %v444
      %v1673 = vunpack.c.l.b16 %v445
      %v1674 = vunpack.c.h.b16 %v445
      %v1675 = vunpack.c.l.b16 %v446
      %v1676 = vunpack.c.h.b16 %v446
      %v1677 = vunpack.c.l.b16 %v447
      %v1678 = vunpack.c.h.b16 %v447
      %v1679 = vunpack.c.l.b16 %v448
      %v1680 = vunpack.c.h.b16 %v448
      %v1681 = vunpack.c.l.b16 %v449
      %v1682 = vunpack.c.h.b16 %v449
      %v1683 = vunpack.c.l.b16 %v450
      %v1684 = vunpack.c.h.b16 %v450
      %v1685 = vunpack.c.l.b16 %v451
      %v1686 = vunpack.c.h.b16 %v451
      %v1687 = vunpack.c.l.b16 %v452
      %v1688 = vunpack.c.h.b16 %v452
      %v1689 = vunpack.c.l.b16 %v453
      %v1690 = vunpack.c.h.b16 %v453
      %v1691 = vunpack.c.l.b16 %v454
      %v1692 = vunpack.c.h.b16 %v454
      %v1693 = vunpack.c.l.b16 %v455
      %v1694 = vunpack.c.h.b16 %v455
      %v1695 = vunpack.c.l.b16 %v456
      %v1696 = vunpack.c.h.b16 %v456
      %v1697 = vunpack.c.l.b16 %v457
      %v1698 = vunpack.c.h.b16 %v457
      %v1699 = vunpack.c.l.b16 %v458
      %v1700 = vunpack.c.h.b16 %v458
      %v1701 = vunpack.c.l.b16 %v459
      %v1702 = vunpack.c.h.b16 %v459
      %v1703 = vunpack.c.l.b16 %v460
      %v1704 = vunpack.c.h.b16 %v460
      %v1705 = vunpack.c.l.b16 %v461
      %v1706 = vunpack.c.h.b16 %v461
      %v1707 = vunpack.c.l.b16 %v462
      %v1708 = vunpack.c.h.b16 %v462
      %v1709 = vunpack.c.l.b16 %v463
      %v1710 = vunpack.c.h.b16 %v463
      %v1711 = vunpack.c.l.b16 %v464
      %v1712 = vunpack.c.h.b16 %v464
      %v1713 = vunpack.c.l.b16 %v465
      %v1714 = vunpack.c.h.b16 %v465
      %v1715 = vunpack.c.l.b16 %v466
      %v1716 = vunpack.c.h.b16 %v466
      %v1717 = vunpack.c.l.b16 %v467
      %v1718 = vunpack.c.h.b16 %v467
      %v1719 = vunpack.c.l.b16 %v468
      %v1720 = vunpack.c.h.b16 %v468
      %v1721 = vunpack.c.l.b16 %v469
      %v1722 = vunpack.c.h.b16 %v469
      %v1723 = vunpack.c.l.b16 %v470
      %v1724 = vunpack.c.h.b16 %v470
      %v1725 = vunpack.c.l.b16 %v471
      %v1726 = vunpack.c.h.b16 %v471
      %v1727 = vunpack.c.l.b16 %v472
      %v1728 = vunpack.c.h.b16 %v472
      %v1729 = vunpack.c.l.b16 %v473
      %v1730 = vunpack.c.h.b16 %v473
      %v1731 = vunpack.c.l.b16 %v474
      %v1732 = vunpack.c.h.b16 %v474
      %v1733 = vunpack.c.l.b16 %v475
      %v1734 = vunpack.c.h.b16 %v475
      %v1735 = vunpack.c.l.b16 %v476
      %v1736 = vunpack.c.h.b16 %v476
      %v1737 = vunpack.c.l.b16 %v477
      %v1738 = vunpack.c.h.b16 %v477
      %v1739 = vunpack.c.l.b16 %v478
      %v1740 = vunpack.c.h.b16 %v478
      %v1741 = vunpack.c.l.b16 %v479
      %v1742 = vunpack.c.h.b16 %v479
      %v1743 = vunpack.c.l.b16 %v480
      %v1744 = vunpack.c.h.b16 %v480
      %v1745 = vunpack.c.l.b16 %v481
      %v1746 = vunpack.c.h.b16 %v481
      %v1747 = vunpack.c.l.b16 %v482
      %v1748 = vunpack.c.h.b16 %v482
      %v1749 = vunpack.c.l.b16 %v483
      %v1750 = vunpack.c.h.b16 %v483
      %v1751 = vunpack.c.l.b16 %v484
      %v1752 = vunpack.c.h.b16 %v484
      %v1753 = vunpack.c.l.b16 %v485
      %v1754 = vunpack.c.h.b16 %v485
      %v1755 = vunpack.c.l.b16 %v486
      %v1756 = vunpack.c.h.b16 %v486
      %v1757 = vunpack.c.l.b16 %v487
      %v1758 = vunpack.c.h.b16 %v487
      %v1759 = vunpack.c.l.b16 %v488
      %v1760 = vunpack.c.h.b16 %v488
      %v1761 = vunpack.c.l.b16 %v489
      %v1762 = vunpack.c.h.b16 %v489
      %v1763 = vunpack.c.l.b16 %v490
      %v1764 = vunpack.c.h.b16 %v490
      %v1765 = vunpack.c.l.b16 %v491
      %v1766 = vunpack.c.h.b16 %v491
      %v1767 = vunpack.c.l.b16 %v492
      %v1768 = vunpack.c.h.b16 %v492
      %v1769 = vunpack.c.l.b16 %v493
      %v1770 = vunpack.c.h.b16 %v493
      %v1771 = vunpack.c.l.b16 %v494
      %v1772 = vunpack.c.h.b16 %v494
      %v1773 = vunpack.c.l.b16 %v495
      %v1774 = vunpack.c.h.b16 %v495
      %v1775 = vunpack.c.l.b16 %v496
      %v1776 = vunpack.c.h.b16 %v496
      %v1777 = vunpack.c.l.b16 %v497
      %v1778 = vunpack.c.h.b16 %v497
      %v1779 = vunpack.c.l.b16 %v498
      %v1780 = vunpack.c.h.b16 %v498
      %v1781 = vunpack.c.l.b16 %v499
      %v1782 = vunpack.c.h.b16 %v499
      %v1783 = vunpack.c.l.b16 %v500
      %v1784 = vunpack.c.h.b16 %v500
      %v1785 = vunpack.c.l.b16 %v501
      %v1786 = vunpack.c.h.b16 %v501
      %v1787 = vunpack.c.l.b16 %v502
      %v1788 = vunpack.c.h.b16 %v502
      %v1789 = vunpack.c.l.b16 %v503
      %v1790 = vunpack.c.h.b16 %v503
      %v1791 = vunpack.c.l.b16 %v504
      %v1792 = vunpack.c.h.b16 %v504
      %v1793 = vunpack.c.l.b16 %v505
      %v1794 = vunpack.c.h.b16 %v505
      %v1795 = vunpack.c.l.b16 %v506
      %v1796 = vunpack.c.h.b16 %v506
      %v1797 = vunpack.c.l.b16 %v507
      %v1798 = vunpack.c.h.b16 %v507
      %v1799 = vunpack.c.l.b16 %v508
      %v1800 = vunpack.c.h.b16 %v508
      %v1801 = vunpack.c.l.b16 %v509
      %v1802 = vunpack.c.h.b16 %v509
      %v1803 = vunpack.c.l.b16 %v510
      %v1804 = vunpack.c.h.b16 %v510
      %v1805 = vunpack.c.l.b16 %v511
      %v1806 = vunpack.c.h.b16 %v511
      %v1807 = vunpack.c.l.b16 %v512
      %v1808 = vunpack.c.h.b16 %v512
      %v1809 = vunpack.c.l.b16 %v513
      %v1810 = vunpack.c.h.b16 %v513
      %v1811 = vunpack.c.l.b16 %v514
      %v1812 = vunpack.c.h.b16 %v514
      %v1813 = vunpack.c.l.b16 %v515
      %v1814 = vunpack.c.h.b16 %v515
      %v1815 = vunpack.c.l.b16 %v516
      %v1816 = vunpack.c.h.b16 %v516
      %v1817 = vunpack.c.l.b16 %v517
      %v1818 = vunpack.c.h.b16 %v517
      %v1819 = vunpack.c.l.b16 %v518
      %v1820 = vunpack.c.h.b16 %v518
      %v1821 = vunpack.c.l.b16 %v519
      %v1822 = vunpack.c.h.b16 %v519
      %v1823 = vunpack.c.l.b16 %v520
      %v1824 = vunpack.c.h.b16 %v520
      %v1825 = vunpack.c.l.b16 %v521
      %v1826 = vunpack.c.h.b16 %v521
      %v1827 = vunpack.c.l.b16 %v522
      %v1828 = vunpack.c.h.b16 %v522
      %v1829 = vunpack.c.l.b16 %v523
      %v1830 = vunpack.c.h.b16 %v523
      %v1831 = vunpack.c.l.b16 %v524
      %v1832 = vunpack.c.h.b16 %v524
      %v1833 = vunpack.c.l.b16 %v525
      %v1834 = vunpack.c.h.b16 %v525
      %v1835 = vunpack.c.l.b16 %v526
      %v1836 = vunpack.c.h.b16 %v526
      %v1837 = vunpack.c.l.b16 %v527
      %v1838 = vunpack.c.h.b16 %v527
      %v1839 = vunpack.c.l.b16 %v528
      %v1840 = vunpack.c.h.b16 %v528
      %v1841 = vunpack.c.l.b16 %v529
      %v1842 = vunpack.c.h.b16 %v529
      %v1843 = vunpack.c.l.b16 %v530
      %v1844 = vunpack.c.h.b16 %v530
      %v1845 = vunpack.c.l.b16 %v531
      %v1846 = vunpack.c.h.b16 %v531
      %v1847 = vunpack.c.l.b16 %v532
      %v1848 = vunpack.c.h.b16 %v532
      %v1849 = vunpack.c.l.b16 %v533
      %v1850 = vunpack.c.h.b16 %v533
      %v1851 = vunpack.c.l.b16 %v534
      %v1852 = vunpack.c.h.b16 %v534
      %v1853 = vunpack.c.l.b16 %v535
      %v1854 = vunpack.c.h.b16 %v535
      %v1855 = vunpack.c.l.b16 %v536
      %v1856 = vunpack.c.h.b16 %v536
      %v1857 = vunpack.c.l.b16 %v537
      %v1858 = vunpack.c.h.b16 %v537
      %v1859 = vunpack.c.l.b16 %v538
      %v1860 = vunpack.c.h.b16 %v538
      %v1861 = vunpack.c.l.b16 %v539
      %v1862 = vunpack.c.h.b16 %v539
      %v1863 = vunpack.c.l.b16 %v540
      %v1864 = vunpack.c.h.b16 %v540
      %v1865 = vunpack.c.l.b16 %v541
      %v1866 = vunpack.c.h.b16 %v541
      %v1867 = vunpack.c.l.b16 %v542
      %v1868 = vunpack.c.h.b16 %v542
      %v1869 = vunpack.c.l.b16 %v543
      %v1870 = vunpack.c.h.b16 %v543
      %v1871 = vunpack.c.l.b16 %v544
      %v1872 = vunpack.c.h.b16 %v544
      %v1873 = vunpack.c.l.b16 %v545
      %v1874 = vunpack.c.h.b16 %v545
      %v1875 = vunpack.c.l.b16 %v546
      %v1876 = vunpack.c.h.b16 %v546
      %v1877 = vunpack.c.l.b16 %v547
      %v1878 = vunpack.c.h.b16 %v547
      %v1879 = vunpack.c.l.b16 %v548
      %v1880 = vunpack.c.h.b16 %v548
      %v1881 = vunpack.c.l.b16 %v549
      %v1882 = vunpack.c.h.b16 %v549
      %v1883 = vunpack.c.l.b16 %v550
      %v1884 = vunpack.c.h.b16 %v550
      %v1885 = vunpack.c.l.b16 %v551
      %v1886 = vunpack.c.h.b16 %v551
      %v1887 = vunpack.c.l.b16 %v552
      %v1888 = vunpack.c.h.b16 %v552
      %v1889 = vunpack.c.l.b16 %v553
      %v1890 = vunpack.c.h.b16 %v553
      %v1891 = vunpack.c.l.b16 %v554
      %v1892 = vunpack.c.h.b16 %v554
      %v1893 = vunpack.c.l.b16 %v555
      %v1894 = vunpack.c.h.b16 %v555
      %v1895 = vunpack.c.l.b16 %v556
      %v1896 = vunpack.c.h.b16 %v556
      %v1897 = vunpack.c.l.b16 %v557
      %v1898 = vunpack.c.h.b16 %v557
      %v1899 = vunpack.c.l.b16 %v558
      %v1900 = vunpack.c.h.b16 %v558
      %v1901 = vunpack.c.l.b16 %v559
      %v1902 = vunpack.c.h.b16 %v559
      %v1903 = vunpack.c.l.b16 %v560
      %v1904 = vunpack.c.h.b16 %v560
      %v1905 = vunpack.c.l.b16 %v561
      %v1906 = vunpack.c.h.b16 %v561
      %v1907 = vunpack.c.l.b16 %v562
      %v1908 = vunpack.c.h.b16 %v562
      %v1909 = vunpack.c.l.b16 %v563
      %v1910 = vunpack.c.h.b16 %v563
      %v1911 = vunpack.c.l.b16 %v564
      %v1912 = vunpack.c.h.b16 %v564
      %v1913 = vunpack.c.l.b16 %v565
      %v1914 = vunpack.c.h.b16 %v565
      %v1915 = vunpack.c.l.b16 %v566
      %v1916 = vunpack.c.h.b16 %v566
      %v1917 = vunpack.c.l.b16 %v567
      %v1918 = vunpack.c.h.b16 %v567
      %v1919 = vunpack.c.l.b16 %v568
      %v1920 = vunpack.c.h.b16 %v568
      %v1921 = vunpack.c.l.b16 %v569
      %v1922 = vunpack.c.h.b16 %v569
      %v1923 = vunpack.c.l.b16 %v570
      %v1924 = vunpack.c.h.b16 %v570
      %v1925 = vunpack.c.l.b16 %v571
      %v1926 = vunpack.c.h.b16 %v571
      %v1927 = vunpack.c.l.b16 %v572
      %v1928 = vunpack.c.h.b16 %v572
      %v1929 = vunpack.c.l.b16 %v573
      %v1930 = vunpack.c.h.b16 %v573
      %v1931 = vunpack.c.l.b16 %v574
      %v1932 = vunpack.c.h.b16 %v574
      %v1933 = vunpack.c.l.b16 %v575
      %v1934 = vunpack.c.h.b16 %v575
      %v1935 = vunpack.c.l.b16 %v576
      %v1936 = vunpack.c.h.b16 %v576
      %v1937 = vunpack.c.l.b16 %v577
      %v1938 = vunpack.c.h.b16 %v577
      %v1939 = vunpack.c.l.b16 %v578
      %v1940 = vunpack.c.h.b16 %v578
      %v1941 = vunpack.c.l.b16 %v579
      %v1942 = vunpack.c.h.b16 %v579
      %v1943 = vunpack.c.l.b16 %v580
      %v1944 = vunpack.c.h.b16 %v580
      %v1945 = vunpack.c.l.b16 %v581
      %v1946 = vunpack.c.h.b16 %v581
      %v1947 = vunpack.c.l.b16 %v582
      %v1948 = vunpack.c.h.b16 %v582
      %v1949 = vunpack.c.l.b16 %v583
      %v1950 = vunpack.c.h.b16 %v583
      %v1951 = vunpack.c.l.b16 %v584
      %v1952 = vunpack.c.h.b16 %v584
      %v1953 = vunpack.c.l.b16 %v585
      %v1954 = vunpack.c.h.b16 %v585
      %v1955 = vunpack.c.l.b16 %v586
      %v1956 = vunpack.c.h.b16 %v586
      %v1957 = vunpack.c.l.b16 %v587
      %v1958 = vunpack.c.h.b16 %v587
      %v1959 = vunpack.c.l.b16 %v588
      %v1960 = vunpack.c.h.b16 %v588
      %v1961 = vunpack.c.l.b16 %v589
      %v1962 = vunpack.c.h.b16 %v589
      %v1963 = vunpack.c.l.b16 %v590
      %v1964 = vunpack.c.h.b16 %v590
      %v1965 = vunpack.c.l.b16 %v591
      %v1966 = vunpack.c.h.b16 %v591
      %v1967 = vunpack.c.l.b16 %v592
      %v1968 = vunpack.c.h.b16 %v592
      %v1969 = vunpack.c.l.b16 %v593
      %v1970 = vunpack.c.h.b16 %v593
      %v1971 = vunpack.c.l.b16 %v594
      %v1972 = vunpack.c.h.b16 %v594
      %v1973 = vunpack.c.l.b16 %v595
      %v1974 = vunpack.c.h.b16 %v595
      %v1975 = vunpack.c.l.b16 %v596
      %v1976 = vunpack.c.h.b16 %v596
      %v1977 = vunpack.c.l.b16 %v597
      %v1978 = vunpack.c.h.b16 %v597
      %v1979 = vunpack.c.l.b16 %v598
      %v1980 = vunpack.c.h.b16 %v598
      %v1981 = vunpack.c.l.b16 %v599
      %v1982 = vunpack.c.h.b16 %v599
      %v1983 = vunpack.c.l.b16 %v600
      %v1984 = vunpack.c.h.b16 %v600
      %v1985 = vunpack.c.l.b16 %v601
      %v1986 = vunpack.c.h.b16 %v601
      %v1987 = vunpack.c.l.b16 %v602
      %v1988 = vunpack.c.h.b16 %v602
      %v1989 = vunpack.c.l.b16 %v603
      %v1990 = vunpack.c.h.b16 %v603
      %v1991 = vunpack.c.l.b16 %v604
      %v1992 = vunpack.c.h.b16 %v604
      %v1993 = vunpack.c.l.b16 %v605
      %v1994 = vunpack.c.h.b16 %v605
      %v1995 = vunpack.c.l.b16 %v606
      %v1996 = vunpack.c.h.b16 %v606
      %v1997 = vunpack.c.l.b16 %v607
      %v1998 = vunpack.c.h.b16 %v607
      %v1999 = vunpack.c.l.b16 %v608
      %v2000 = vunpack.c.h.b16 %v608
      %v2001 = vunpack.c.l.b16 %v609
      %v2002 = vunpack.c.h.b16 %v609
      %v2003 = vunpack.c.l.b16 %v610
      %v2004 = vunpack.c.h.b16 %v610
      %v2005 = vunpack.c.l.b16 %v611
      %v2006 = vunpack.c.h.b16 %v611
      %v2007 = vunpack.c.l.b16 %v612
      %v2008 = vunpack.c.h.b16 %v612
      %v2009 = vunpack.c.l.b16 %v613
      %v2010 = vunpack.c.h.b16 %v613
      %v2011 = vunpack.c.l.b16 %v614
      %v2012 = vunpack.c.h.b16 %v614
      %v2013 = vunpack.c.l.b16 %v615
      %v2014 = vunpack.c.h.b16 %v615
      %v2015 = vunpack.c.l.b16 %v616
      %v2016 = vunpack.c.h.b16 %v616
      %v2017 = vunpack.c.l.b16 %v617
      %v2018 = vunpack.c.h.b16 %v617
      %v2019 = vunpack.c.l.b16 %v618
      %v2020 = vunpack.c.h.b16 %v618
      %v2021 = vunpack.c.l.b16 %v619
      %v2022 = vunpack.c.h.b16 %v619
      %v2023 = vunpack.c.l.b16 %v620
      %v2024 = vunpack.c.h.b16 %v620
      %v2025 = vunpack.c.l.b16 %v621
      %v2026 = vunpack.c.h.b16 %v621
      %v2027 = vunpack.c.l.b16 %v622
      %v2028 = vunpack.c.h.b16 %v622
      %v2029 = vunpack.c.l.b16 %v623
      %v2030 = vunpack.c.h.b16 %v623
      %v2031 = vunpack.c.l.b16 %v624
      %v2032 = vunpack.c.h.b16 %v624
      %v2033 = vunpack.c.l.b16 %v625
      %v2034 = vunpack.c.h.b16 %v625
      %v2035 = vunpack.c.l.b16 %v626
      %v2036 = vunpack.c.h.b16 %v626
      %v2037 = vunpack.c.l.b16 %v627
      %v2038 = vunpack.c.h.b16 %v627
      %v2039 = vunpack.c.l.b16 %v628
      %v2040 = vunpack.c.h.b16 %v628
      %v2041 = vunpack.c.l.b16 %v629
      %v2042 = vunpack.c.h.b16 %v629
      %v2043 = vunpack.c.l.b16 %v630
      %v2044 = vunpack.c.h.b16 %v630
      %v2045 = vunpack.c.l.b16 %v631
      %v2046 = vunpack.c.h.b16 %v631
      %v2047 = vunpack.c.l.b16 %v632
      %v2048 = vunpack.c.h.b16 %v632
      %v2049 = vunpack.c.l.b16 %v633
      %v2050 = vunpack.c.h.b16 %v633
      %v2051 = vunpack.c.l.b16 %v634
      %v2052 = vunpack.c.h.b16 %v634
      %v2053 = vunpack.c.l.b16 %v635
      %v2054 = vunpack.c.h.b16 %v635
      %v2055 = vunpack.c.l.b16 %v636
      %v2056 = vunpack.c.h.b16 %v636
      %v2057 = vunpack.c.l.b16 %v637
      %v2058 = vunpack.c.h.b16 %v637
      %v2059 = vunpack.c.l.b16 %v638
      %v2060 = vunpack.c.h.b16 %v638
      %v2061 = vunpack.c.l.b16 %v639
      %v2062 = vunpack.c.h.b16 %v639
      %v2063 = vunpack.c.l.b16 %v640
      %v2064 = vunpack.c.h.b16 %v640
      %v2065 = vunpack.c.l.b16 %v641
      %v2066 = vunpack.c.h.b16 %v641
      %v2067 = vunpack.c.l.b16 %v642
      %v2068 = vunpack.c.h.b16 %v642
      %v2069 = vunpack.c.l.b16 %v643
      %v2070 = vunpack.c.h.b16 %v643
      %v2071 = vunpack.c.l.b16 %v644
      %v2072 = vunpack.c.h.b16 %v644
      %v2073 = vunpack.c.l.b16 %v645
      %v2074 = vunpack.c.h.b16 %v645
      %v2075 = vunpack.c.l.b16 %v646
      %v2076 = vunpack.c.h.b16 %v646
      %v2077 = vunpack.c.l.b16 %v647
      %v2078 = vunpack.c.h.b16 %v647
      %v2079 = vunpack.c.l.b16 %v648
      %v2080 = vunpack.c.h.b16 %v648
      %v2081 = vunpack.c.l.b16 %v649
      %v2082 = vunpack.c.h.b16 %v649
      %v2083 = vunpack.c.l.b16 %v650
      %v2084 = vunpack.c.h.b16 %v650
      %v2085 = vunpack.c.l.b16 %v651
      %v2086 = vunpack.c.h.b16 %v651
      %v2087 = vunpack.c.l.b16 %v652
      %v2088 = vunpack.c.h.b16 %v652
      %v2089 = vunpack.c.l.b16 %v653
      %v2090 = vunpack.c.h.b16 %v653
      %v2091 = vunpack.c.l.b16 %v654
      %v2092 = vunpack.c.h.b16 %v654
      %v2093 = vunpack.c.l.b16 %v655
      %v2094 = vunpack.c.h.b16 %v655
      %v2095 = vunpack.c.l.b16 %v656
      %v2096 = vunpack.c.h.b16 %v656
      %v2097 = vunpack.c.l.b16 %v657
      %v2098 = vunpack.c.h.b16 %v657
      %v2099 = vunpack.c.l.b16 %v658
      %v2100 = vunpack.c.h.b16 %v658
      %v2101 = vunpack.c.l.b16 %v659
      %v2102 = vunpack.c.h.b16 %v659
      %v2103 = vunpack.c.l.b16 %v660
      %v2104 = vunpack.c.h.b16 %v660
      %v2105 = vunpack.c.l.b16 %v661
      %v2106 = vunpack.c.h.b16 %v661
      %v2107 = vunpack.c.l.b16 %v662
      %v2108 = vunpack.c.h.b16 %v662
      %v2109 = vunpack.c.l.b16 %v663
      %v2110 = vunpack.c.h.b16 %v663
      %v2111 = vunpack.c.l.b16 %v664
      %v2112 = vunpack.c.h.b16 %v664
      %v2113 = vunpack.c.l.b16 %v665
      %v2114 = vunpack.c.h.b16 %v665
      %v2115 = vunpack.c.l.b16 %v666
      %v2116 = vunpack.c.h.b16 %v666
      %v2117 = vunpack.c.l.b16 %v667
      %v2118 = vunpack.c.h.b16 %v667
      %v2119 = vunpack.c.l.b16 %v668
      %v2120 = vunpack.c.h.b16 %v668
      %v2121 = vunpack.c.l.b16 %v669
      %v2122 = vunpack.c.h.b16 %v669
      %v2123 = vunpack.c.l.b16 %v670
      %v2124 = vunpack.c.h.b16 %v670
      %v2125 = vunpack.c.l.b16 %v671
      %v2126 = vunpack.c.h.b16 %v671
      %v2127 = vunpack.c.l.b16 %v672
      %v2128 = vunpack.c.h.b16 %v672
      %v2129 = vunpack.c.l.b16 %v673
      %v2130 = vunpack.c.h.b16 %v673
      %v2131 = vunpack.c.l.b16 %v674
      %v2132 = vunpack.c.h.b16 %v674
      %v2133 = vunpack.c.l.b16 %v675
      %v2134 = vunpack.c.h.b16 %v675
      %v2135 = vunpack.c.l.b16 %v676
      %v2136 = vunpack.c.h.b16 %v676
      %v2137 = vunpack.c.l.b16 %v677
      %v2138 = vunpack.c.h.b16 %v677
      %v2139 = vunpack.c.l.b16 %v678
      %v2140 = vunpack.c.h.b16 %v678
      %v2141 = vunpack.c.l.b16 %v679
      %v2142 = vunpack.c.h.b16 %v679
      %v2143 = vunpack.c.l.b16 %v680
      %v2144 = vunpack.c.h.b16 %v680
      %v2145 = vunpack.c.l.b16 %v681
      %v2146 = vunpack.c.h.b16 %v681
      %v2147 = vunpack.c.l.b16 %v682
      %v2148 = vunpack.c.h.b16 %v682
      %v2149 = vunpack.c.l.b16 %v683
      %v2150 = vunpack.c.h.b16 %v683
      %v2151 = vunpack.c.l.b16 %v684
      %v2152 = vunpack.c.h.b16 %v684
      %v2153 = vunpack.c.l.b16 %v685
      %v2154 = vunpack.c.h.b16 %v685
      %v2155 = vunpack.c.l.b16 %v686
      %v2156 = vunpack.c.h.b16 %v686
      %v2157 = vunpack.c.l.b16 %v687
      %v2158 = vunpack.c.h.b16 %v687
      %v2159 = vunpack.c.l.b16 %v688
      %v2160 = vunpack.c.h.b16 %v688
      %v2161 = vunpack.c.l.b16 %v689
      %v2162 = vunpack.c.h.b16 %v689
      %v2163 = vunpack.c.l.b16 %v690
      %v2164 = vunpack.c.h.b16 %v690
      %v2165 = vunpack.c.l.b16 %v691
      %v2166 = vunpack.c.h.b16 %v691
      %v2167 = vunpack.c.l.b16 %v692
      %v2168 = vunpack.c.h.b16 %v692
      %v2169 = vunpack.c.l.b16 %v693
      %v2170 = vunpack.c.h.b16 %v693
      %v2171 = vunpack.c.l.b16 %v694
      %v2172 = vunpack.c.h.b16 %v694
      %v2173 = vunpack.c.l.b16 %v695
      %v2174 = vunpack.c.h.b16 %v695
      %v2175 = vunpack.c.l.b16 %v696
      %v2176 = vunpack.c.h.b16 %v696
      %v2177 = vunpack.c.l.b16 %v697
      %v2178 = vunpack.c.h.b16 %v697
      %v2179 = vunpack.c.l.b16 %v698
      %v2180 = vunpack.c.h.b16 %v698
      %v2181 = vunpack.c.l.b16 %v699
      %v2182 = vunpack.c.h.b16 %v699
      %v2183 = vunpack.c.l.b16 %v700
      %v2184 = vunpack.c.h.b16 %v700
      %v2185 = vunpack.c.l.b16 %v701
      %v2186 = vunpack.c.h.b16 %v701
      %v2187 = vunpack.c.l.b16 %v702
      %v2188 = vunpack.c.h.b16 %v702
      %v2189 = vunpack.c.l.b16 %v703
      %v2190 = vunpack.c.h.b16 %v703
      %v2191 = vunpack.c.l.b16 %v704
      %v2192 = vunpack.c.h.b16 %v704
      %v2193 = vunpack.c.l.b16 %v705
      %v2194 = vunpack.c.h.b16 %v705
      %v2195 = vunpack.c.l.b16 %v706
      %v2196 = vunpack.c.h.b16 %v706
      %v2197 = vunpack.c.l.b16 %v707
      %v2198 = vunpack.c.h.b16 %v707
      %v2199 = vunpack.c.l.b16 %v708
      %v2200 = vunpack.c.h.b16 %v708
      %v2201 = vunpack.c.l.b16 %v709
      %v2202 = vunpack.c.h.b16 %v709
      %v2203 = vunpack.c.l.b16 %v710
      %v2204 = vunpack.c.h.b16 %v710
      %v2205 = vunpack.c.l.b16 %v711
      %v2206 = vunpack.c.h.b16 %v711
      %v2207 = vunpack.c.l.b16 %v712
      %v2208 = vunpack.c.h.b16 %v712
      %v2209 = vunpack.c.l.b16 %v713
      %v2210 = vunpack.c.h.b16 %v713
      %v2211 = vunpack.c.l.b16 %v714
      %v2212 = vunpack.c.h.b16 %v714
      %v2213 = vunpack.c.l.b16 %v715
      %v2214 = vunpack.c.h.b16 %v715
      %v2215 = vunpack.c.l.b16 %v716
      %v2216 = vunpack.c.h.b16 %v716
      %v2217 = vunpack.c.l.b16 %v717
      %v2218 = vunpack.c.h.b16 %v717
      %v2219 = vunpack.c.l.b16 %v718
      %v2220 = vunpack.c.h.b16 %v718
      %v2221 = vunpack.c.l.b16 %v719
      %v2222 = vunpack.c.h.b16 %v719
      %v2223 = vunpack.c.l.b16 %v720
      %v2224 = vunpack.c.h.b16 %v720
      %v2225 = vunpack.c.l.b16 %v721
      %v2226 = vunpack.c.h.b16 %v721
      %v2227 = vunpack.c.l.b16 %v722
      %v2228 = vunpack.c.h.b16 %v722
      %v2229 = vunpack.c.l.b16 %v723
      %v2230 = vunpack.c.h.b16 %v723
      %v2231 = vunpack.c.l.b16 %v724
      %v2232 = vunpack.c.h.b16 %v724
      %v2233 = vunpack.c.l.b16 %v725
      %v2234 = vunpack.c.h.b16 %v725
      %v2235 = vunpack.c.l.b16 %v726
      %v2236 = vunpack.c.h.b16 %v726
      %v2237 = vunpack.c.l.b16 %v727
      %v2238 = vunpack.c.h.b16 %v727
      %v2239 = vunpack.c.l.b16 %v728
      %v2240 = vunpack.c.h.b16 %v728
      %v2241 = vunpack.c.l.b16 %v729
      %v2242 = vunpack.c.h.b16 %v729
      %v2243 = vunpack.c.l.b16 %v730
      %v2244 = vunpack.c.h.b16 %v730
      %v2245 = vunpack.c.l.b16 %v731
      %v2246 = vunpack.c.h.b16 %v731
      %v2247 = vunpack.c.l.b16 %v732
      %v2248 = vunpack.c.h.b16 %v732
      %v2249 = vunpack.c.l.b16 %v733
      %v2250 = vunpack.c.h.b16 %v733
      %v2251 = vunpack.c.l.b16 %v734
      %v2252 = vunpack.c.h.b16 %v734
      %v2253 = vunpack.c.l.b16 %v735
      %v2254 = vunpack.c.h.b16 %v735
      %v2255 = vunpack.c.l.b16 %v736
      %v2256 = vunpack.c.h.b16 %v736
      %v2257 = vunpack.c.l.b16 %v737
      %v2258 = vunpack.c.h.b16 %v737
      %v2259 = vunpack.c.l.b16 %v738
      %v2260 = vunpack.c.h.b16 %v738
      %v2261 = vunpack.c.l.b16 %v739
      %v2262 = vunpack.c.h.b16 %v739
      %v2263 = vunpack.c.l.b16 %v740
      %v2264 = vunpack.c.h.b16 %v740
      %v2265 = vunpack.c.l.b16 %v741
      %v2266 = vunpack.c.h.b16 %v741
      %v2267 = vunpack.c.l.b16 %v742
      %v2268 = vunpack.c.h.b16 %v742
      %v2269 = vunpack.c.l.b16 %v743
      %v2270 = vunpack.c.h.b16 %v743
      %v2271 = vunpack.c.l.b16 %v744
      %v2272 = vunpack.c.h.b16 %v744
      %v2273 = vunpack.c.l.b16 %v745
      %v2274 = vunpack.c.h.b16 %v745
      %v2275 = vunpack.c.l.b16 %v746
      %v2276 = vunpack.c.h.b16 %v746
      %v2277 = vunpack.c.l.b16 %v747
      %v2278 = vunpack.c.h.b16 %v747
      %v2279 = vunpack.c.l.b16 %v748
      %v2280 = vunpack.c.h.b16 %v748
      %v2281 = vunpack.c.l.b16 %v749
      %v2282 = vunpack.c.h.b16 %v749
      %v2283 = vunpack.c.l.b16 %v750
      %v2284 = vunpack.c.h.b16 %v750
      %v2285 = vunpack.c.l.b16 %v751
      %v2286 = vunpack.c.h.b16 %v751
      %v2287 = vunpack.c.l.b16 %v752
      %v2288 = vunpack.c.h.b16 %v752
      %v2289 = vunpack.c.l.b16 %v753
      %v2290 = vunpack.c.h.b16 %v753
      %v2291 = vunpack.c.l.b16 %v754
      %v2292 = vunpack.c.h.b16 %v754
      %v2293 = vunpack.c.l.b16 %v755
      %v2294 = vunpack.c.h.b16 %v755
      %v2295 = vunpack.c.l.b16 %v756
      %v2296 = vunpack.c.h.b16 %v756
      %v2297 = vunpack.c.l.b16 %v757
      %v2298 = vunpack.c.h.b16 %v757
      %v2299 = vunpack.c.l.b16 %v758
      %v2300 = vunpack.c.h.b16 %v758
      %v2301 = vunpack.c.l.b16 %v759
      %v2302 = vunpack.c.h.b16 %v759
      %v2303 = vunpack.c.l.b16 %v760
      %v2304 = vunpack.c.h.b16 %v760
      %v2305 = vunpack.c.l.b16 %v761
      %v2306 = vunpack.c.h.b16 %v761
      %v2307 = vunpack.c.l.b16 %v762
      %v2308 = vunpack.c.h.b16 %v762
      %v2309 = vunpack.c.l.b16 %v763
      %v2310 = vunpack.c.h.b16 %v763
      %v2311 = vunpack.c.l.b16 %v764
      %v2312 = vunpack.c.h.b16 %v764
      %v2313 = vunpack.c.l.b16 %v765
      %v2314 = vunpack.c.h.b16 %v765
      %v2315 = vunpack.c.l.b16 %v766
      %v2316 = vunpack.c.h.b16 %v766
      %v2317 = vunpack.c.l.b16 %v767
      %v2318 = vunpack.c.h.b16 %v767
      %v2319 = vunpack.c.l.b16 %v768
      %v2320 = vunpack.c.h.b16 %v768
      %v2321 = vunpack.c.l.b16 %v769
      %v2322 = vunpack.c.h.b16 %v769
      %v2323 = vunpack.c.l.b16 %v770
      %v2324 = vunpack.c.h.b16 %v770
      %v2325 = vunpack.c.l.b16 %v771
      %v2326 = vunpack.c.h.b16 %v771
      %v2327 = vunpack.c.l.b16 %v772
      %v2328 = vunpack.c.h.b16 %v772
      %v2329 = vunpack.c.l.b16 %v773
      %v2330 = vunpack.c.h.b16 %v773
      %v2331 = vunpack.c.l.b16 %v774
      %v2332 = vunpack.c.h.b16 %v774
      %v2333 = vunpack.c.l.b16 %v775
      %v2334 = vunpack.c.h.b16 %v775
      %v2335 = vunpack.c.l.b16 %v776
      %v2336 = vunpack.c.h.b16 %v776
      %v2337 = vunpack.c.l.b16 %v777
      %v2338 = vunpack.c.h.b16 %v777
      %v2339 = vunpack.c.l.b16 %v778
      %v2340 = vunpack.c.h.b16 %v778
      %v2341 = vunpack.c.l.b16 %v779
      %v2342 = vunpack.c.h.b16 %v779
      %v2343 = vunpack.c.l.b16 %v780
      %v2344 = vunpack.c.h.b16 %v780
      %v2345 = vunpack.c.l.b16 %v781
      %v2346 = vunpack.c.h.b16 %v781
      %v2347 = vunpack.c.l.b16 %v782
      %v2348 = vunpack.c.h.b16 %v782
      %v2349 = vunpack.c.l.b16 %v783
      %v2350 = vunpack.c.h.b16 %v783
      %v2351 = vunpack.c.l.b16 %v784
      %v2352 = vunpack.c.h.b16 %v784
      %v2353 = vunpack.c.l.b16 %v785
      %v2354 = vunpack.c.h.b16 %v785
      %v2355 = vunpack.c.l.b16 %v786
      %v2356 = vunpack.c.h.b16 %v786
      %v2357 = vunpack.c.l.b16 %v787
      %v2358 = vunpack.c.h.b16 %v787
      %v2359 = vunpack.c.l.b16 %v788
      %v2360 = vunpack.c.h.b16 %v788
      %v2361 = vunpack.c.l.b16 %v789
      %v2362 = vunpack.c.h.b16 %v789
      %v2363 = vunpack.c.l.b16 %v790
      %v2364 = vunpack.c.h.b16 %v790
      %v2365 = vunpack.c.l.b16 %v791
      %v2366 = vunpack.c.h.b16 %v791
      %v2367 = vunpack.c.l.b16 %v792
      %v2368 = vunpack.c.h.b16 %v792
      %v2369 = vunpack.c.l.b16 %v793
      %v2370 = vunpack.c.h.b16 %v793
      %v2371 = vunpack.c.l.b16 %v794
      %v2372 = vunpack.c.h.b16 %v794
      %v2373 = vunpack.c.l.b16 %v795
      %v2374 = vunpack.c.h.b16 %v795
      %v2375 = vunpack.c.l.b16 %v796
      %v2376 = vunpack.c.h.b16 %v796
      %v2377 = vunpack.c.l.b16 %v797
      %v2378 = vunpack.c.h.b16 %v797
      %v2379 = vunpack.c.l.b16 %v798
      %v2380 = vunpack.c.h.b16 %v798
      %v2381 = vunpack.c.l.b16 %v799
      %v2382 = vunpack.c.h.b16 %v799
      %v2383 = vunpack.c.l.b16 %v800
      %v2384 = vunpack.c.h.b16 %v800
      %v2385 = vunpack.c.l.b16 %v801
      %v2386 = vunpack.c.h.b16 %v801
      %v2387 = vunpack.c.l.b16 %v802
      %v2388 = vunpack.c.h.b16 %v802
      %v2389 = vunpack.c.l.b16 %v803
      %v2390 = vunpack.c.h.b16 %v803
      %v2391 = vunpack.c.l.b16 %v804
      %v2392 = vunpack.c.h.b16 %v804
      %v2393 = vunpack.c.l.b16 %v805
      %v2394 = vunpack.c.h.b16 %v805
      %v2395 = vunpack.c.l.b16 %v806
      %v2396 = vunpack.c.h.b16 %v806
      %v2397 = vunpack.c.l.b16 %v807
      %v2398 = vunpack.c.h.b16 %v807
      %v2399 = vunpack.c.l.b16 %v808
      %v2400 = vunpack.c.h.b16 %v808
      %v2401 = vunpack.c.l.b16 %v809
      %v2402 = vunpack.c.h.b16 %v809
      %v2403 = vunpack.c.l.b16 %v810
      %v2404 = vunpack.c.h.b16 %v810
      %v2405 = vunpack.c.l.b16 %v811
      %v2406 = vunpack.c.h.b16 %v811
      %v2407 = vunpack.c.l.b16 %v812
      %v2408 = vunpack.c.h.b16 %v812
      %v2409 = vunpack.c.l.b16 %v813
      %v2410 = vunpack.c.h.b16 %v813
      %v2411 = vunpack.c.l.b16 %v814
      %v2412 = vunpack.c.h.b16 %v814
      %v2413 = vunpack.c.l.b16 %v815
      %v2414 = vunpack.c.h.b16 %v815
      %v2415 = vunpack.c.l.b16 %v816
      %v2416 = vunpack.c.h.b16 %v816
      %v2417 = vunpack.c.l.b16 %v817
      %v2418 = vunpack.c.h.b16 %v817
      %v2419 = vunpack.c.l.b16 %v818
      %v2420 = vunpack.c.h.b16 %v818
      %v2421 = vunpack.c.l.b16 %v819
      %v2422 = vunpack.c.h.b16 %v819
      %v2423 = vunpack.c.l.b16 %v820
      %v2424 = vunpack.c.h.b16 %v820
      %v2425 = vunpack.c.l.b16 %v821
      %v2426 = vunpack.c.h.b16 %v821
      %v2427 = vunpack.c.l.b16 %v822
      %v2428 = vunpack.c.h.b16 %v822
      %v2429 = vunpack.c.l.b16 %v823
      %v2430 = vunpack.c.h.b16 %v823
      %v2431 = vunpack.c.l.b16 %v824
      %v2432 = vunpack.c.h.b16 %v824
      %v2433 = vunpack.c.l.b16 %v825
      %v2434 = vunpack.c.h.b16 %v825
      %v2435 = vunpack.c.l.b16 %v826
      %v2436 = vunpack.c.h.b16 %v826
      %v2437 = vunpack.c.l.b16 %v827
      %v2438 = vunpack.c.h.b16 %v827
      %v2439 = vunpack.c.l.b16 %v828
      %v2440 = vunpack.c.h.b16 %v828
      %v2441 = vunpack.c.l.b16 %v829
      %v2442 = vunpack.c.h.b16 %v829
      %v2443 = vunpack.c.l.b16 %v830
      %v2444 = vunpack.c.h.b16 %v830
      %v2445 = vunpack.c.l.b16 %v831
      %v2446 = vunpack.c.h.b16 %v831
      %v2447 = vunpack.c.l.b16 %v832
      %v2448 = vunpack.c.h.b16 %v832
      %v2449 = vunpack.c.l.b16 %v833
      %v2450 = vunpack.c.h.b16 %v833
      %v2451 = vunpack.c.l.b16 %v834
      %v2452 = vunpack.c.h.b16 %v834
      %v2453 = vunpack.c.l.b16 %v835
      %v2454 = vunpack.c.h.b16 %v835
      %v2455 = vunpack.c.l.b16 %v836
      %v2456 = vunpack.c.h.b16 %v836
      %v2457 = vpack.c.b16 %v1449, %v1433
      %v2458 = vpack.c.b16 %v1450, %v1434
      %v2459 = vpack.c.b16 %v1451, %v1435
      %v2460 = vpack.c.b16 %v1452, %v1436
      %v2461 = vpack.c.b16 %v1453, %v1437
      %v2462 = vpack.c.b16 %v1454, %v1438
      %v2463 = vpack.c.b16 %v1455, %v1439
      %v2464 = vpack.c.b16 %v1456, %v1440
      %v2465 = vpack.c.b16 %v1457, %v1441
      %v2466 = vpack.c.b16 %v1458, %v1442
      %v2467 = vpack.c.b16 %v1459, %v1443
      %v2468 = vpack.c.b16 %v1460, %v1444
      %v2469 = vpack.c.b16 %v1461, %v1445
      %v2470 = vpack.c.b16 %v1462, %v1446
      %v2471 = vpack.c.b16 %v1463, %v1447
      %v2472 = vpack.c.b16 %v1464, %v1448
      %v2473 = vpack.c.b16 %v1481, %v1465
      %v2474 = vpack.c.b16 %v1482, %v1466
      %v2475 = vpack.c.b16 %v1483, %v1467
      %v2476 = vpack.c.b16 %v1484, %v1468
      %v2477 = vpack.c.b16 %v1485, %v1469
      %v2478 = vpack.c.b16 %v1486, %v1470
      %v2479 = vpack.c.b16 %v1487, %v1471
      %v2480 = vpack.c.b16 %v1488, %v1472
      %v2481 = vpack.c.b16 %v1489, %v1473
      %v2482 = vpack.c.b16 %v1490, %v1474
      %v2483 = vpack.c.b16 %v1491, %v1475
      %v2484 = vpack.c.b16 %v1492, %v1476
      %v2485 = vpack.c.b16 %v1493, %v1477
      %v2486 = vpack.c.b16 %v1494, %v1478
      %v2487 = vpack.c.b16 %v1495, %v1479
      %v2488 = vpack.c.b16 %v1496, %v1480
      %v2489 = vpack.c.b16 %v1513, %v1497
      %v2490 = vpack.c.b16 %v1514, %v1498
      %v2491 = vpack.c.b16 %v1515, %v1499
      %v2492 = vpack.c.b16 %v1516, %v1500
      %v2493 = vpack.c.b16 %v1517, %v1501
      %v2494 = vpack.c.b16 %v1518, %v1502
      %v2495 = vpack.c.b16 %v1519, %v1503
      %v2496 = vpack.c.b16 %v1520, %v1504
      %v2497 = vpack.c.b16 %v1521, %v1505
      %v2498 = vpack.c.b16 %v1522, %v1506
      %v2499 = vpack.c.b16 %v1523, %v1507
      %v2500 = vpack.c.b16 %v1524, %v1508
      %v2501 = vpack.c.b16 %v1525, %v1509
      %v2502 = vpack.c.b16 %v1526, %v1510
      %v2503 = vpack.c.b16 %v1527, %v1511
      %v2504 = vpack.c.b16 %v1528, %v1512
      %v2505 = vpack.c.b16 %v1545, %v1529
      %v2506 = vpack.c.b16 %v1546, %v1530
      %v2507 = vpack.c.b16 %v1547, %v1531
      %v2508 = vpack.c.b16 %v1548, %v1532
      %v2509 = vpack.c.b16 %v1549, %v1533
      %v2510 = vpack.c.b16 %v1550, %v1534
      %v2511 = vpack.c.b16 %v1551, %v1535
      %v2512 = vpack.c.b16 %v1552, %v1536
      %v2513 = vpack.c.b16 %v1553, %v1537
      %v2514 = vpack.c.b16 %v1554, %v1538
      %v2515 = vpack.c.b16 %v1555, %v1539
      %v2516 = vpack.c.b16 %v1556, %v1540
      %v2517 = vpack.c.b16 %v1557, %v1541
      %v2518 = vpack.c.b16 %v1558, %v1542
      %v2519 = vpack.c.b16 %v1559, %v1543
      %v2520 = vpack.c.b16 %v1560, %v1544
      %v2521 = vpack.c.b16 %v1577, %v1561
      %v2522 = vpack.c.b16 %v1578, %v1562
      %v2523 = vpack.c.b16 %v1579, %v1563
      %v2524 = vpack.c.b16 %v1580, %v1564
      %v2525 = vpack.c.b16 %v1581, %v1565
      %v2526 = vpack.c.b16 %v1582, %v1566
      %v2527 = vpack.c.b16 %v1583, %v1567
      %v2528 = vpack.c.b16 %v1584, %v1568
      %v2529 = vpack.c.b16 %v1585, %v1569
      %v2530 = vpack.c.b16 %v1586, %v1570
      %v2531 = vpack.c.b16 %v1587, %v1571
      %v2532 = vpack.c.b16 %v1588, %v1572
      %v2533 = vpack.c.b16 %v1589, %v1573
      %v2534 = vpack.c.b16 %v1590, %v1574
      %v2535 = vpack.c.b16 %v1591, %v1575
      %v2536 = vpack.c.b16 %v1592, %v1576
      %v2537 = vpack.c.b16 %v1609, %v1593
      %v2538 = vpack.c.b16 %v1610, %v1594
      %v2539 = vpack.c.b16 %v1611, %v1595
      %v2540 = vpack.c.b16 %v1612, %v1596
      %v2541 = vpack.c.b16 %v1613, %v1597
      %v2542 = vpack.c.b16 %v1614, %v1598
      %v2543 = vpack.c.b16 %v1615, %v1599
      %v2544 = vpack.c.b16 %v1616, %v1600
      %v2545 = vpack.c.b16 %v1617, %v1601
      %v2546 = vpack.c.b16 %v1618, %v1602
      %v2547 = vpack.c.b16 %v1619, %v1603
      %v2548 = vpack.c.b16 %v1620, %v1604
      %v2549 = vpack.c.b16 %v1621, %v1605
      %v2550 = vpack.c.b16 %v1622, %v1606
      %v2551 = vpack.c.b16 %v1623, %v1607
      %v2552 = vpack.c.b16 %v1624, %v1608
      %v2553 = vpack.c.b16 %v1641, %v1625
      %v2554 = vpack.c.b16 %v1642, %v1626
      %v2555 = vpack.c.b16 %v1643, %v1627
      %v2556 = vpack.c.b16 %v1644, %v1628
      %v2557 = vpack.c.b16 %v1645, %v1629
      %v2558 = vpack.c.b16 %v1646, %v1630
      %v2559 = vpack.c.b16 %v1647, %v1631
      %v2560 = vpack.c.b16 %v1648, %v1632
      %v2561 = vpack.c.b16 %v1649, %v1633
      %v2562 = vpack.c.b16 %v1650, %v1634
      %v2563 = vpack.c.b16 %v1651, %v1635
      %v2564 = vpack.c.b16 %v1652, %v1636
      %v2565 = vpack.c.b16 %v1653, %v1637
      %v2566 = vpack.c.b16 %v1654, %v1638
      %v2567 = vpack.c.b16 %v1655, %v1639
      %v2568 = vpack.c.b16 %v1656, %v1640
      %v2569 = vpack.c.b16 %v1673, %v1657
      %v2570 = vpack.c.b16 %v1674, %v1658
      %v2571 = vpack.c.b16 %v1675, %v1659
      %v2572 = vpack.c.b16 %v1676, %v1660
      %v2573 = vpack.c.b16 %v1677, %v1661
      %v2574 = vpack.c.b16 %v1678, %v1662
      %v2575 = vpack.c.b16 %v1679, %v1663
      %v2576 = vpack.c.b16 %v1680, %v1664
      %v2577 = vpack.c.b16 %v1681, %v1665
      %v2578 = vpack.c.b16 %v1682, %v1666
      %v2579 = vpack.c.b16 %v1683, %v1667
      %v2580 = vpack.c.b16 %v1684, %v1668
      %v2581 = vpack.c.b16 %v1685, %v1669
      %v2582 = vpack.c.b16 %v1686, %v1670
      %v2583 = vpack.c.b16 %v1687, %v1671
      %v2584 = vpack.c.b16 %v1688, %v1672
      %v2585 = vpack.c.b16 %v1705, %v1689
      %v2586 = vpack.c.b16 %v1706, %v1690
      %v2587 = vpack.c.b16 %v1707, %v1691
      %v2588 = vpack.c.b16 %v1708, %v1692
      %v2589 = vpack.c.b16 %v1709, %v1693
      %v2590 = vpack.c.b16 %v1710, %v1694
      %v2591 = vpack.c.b16 %v1711, %v1695
      %v2592 = vpack.c.b16 %v1712, %v1696
      %v2593 = vpack.c.b16 %v1713, %v1697
      %v2594 = vpack.c.b16 %v1714, %v1698
      %v2595 = vpack.c.b16 %v1715, %v1699
      %v2596 = vpack.c.b16 %v1716, %v1700
      %v2597 = vpack.c.b16 %v1717, %v1701
      %v2598 = vpack.c.b16 %v1718, %v1702
      %v2599 = vpack.c.b16 %v1719, %v1703
      %v2600 = vpack.c.b16 %v1720, %v1704
      %v2601 = vpack.c.b16 %v1737, %v1721
      %v2602 = vpack.c.b16 %v1738, %v1722
      %v2603 = vpack.c.b16 %v1739, %v1723
      %v2604 = vpack.c.b16 %v1740, %v1724
      %v2605 = vpack.c.b16 %v1741, %v1725
      %v2606 = vpack.c.b16 %v1742, %v1726
      %v2607 = vpack.c.b16 %v1743, %v1727
      %v2608 = vpack.c.b16 %v1744, %v1728
      %v2609 = vpack.c.b16 %v1745, %v1729
      %v2610 = vpack.c.b16 %v1746, %v1730
      %v2611 = vpack.c.b16 %v1747, %v1731
      %v2612 = vpack.c.b16 %v1748, %v1732
      %v2613 = vpack.c.b16 %v1749, %v1733
      %v2614 = vpack.c.b16 %v1750, %v1734
      %v2615 = vpack.c.b16 %v1751, %v1735
      %v2616 = vpack.c.b16 %v1752, %v1736
      %v2617 = vpack.c.b16 %v1769, %v1753
      %v2618 = vpack.c.b16 %v1770, %v1754
      %v2619 = vpack.c.b16 %v1771, %v1755
      %v2620 = vpack.c.b16 %v1772, %v1756
      %v2621 = vpack.c.b16 %v1773, %v1757
      %v2622 = vpack.c.b16 %v1774, %v1758
      %v2623 = vpack.c.b16 %v1775, %v1759
      %v2624 = vpack.c.b16 %v1776, %v1760
      %v2625 = vpack.c.b16 %v1777, %v1761
      %v2626 = vpack.c.b16 %v1778, %v1762
      %v2627 = vpack.c.b16 %v1779, %v1763
      %v2628 = vpack.c.b16 %v1780, %v1764
      %v2629 = vpack.c.b16 %v1781, %v1765
      %v2630 = vpack.c.b16 %v1782, %v1766
      %v2631 = vpack.c.b16 %v1783, %v1767
      %v2632 = vpack.c.b16 %v1784, %v1768
      %v2633 = vpack.c.b16 %v1801, %v1785
      %v2634 = vpack.c.b16 %v1802, %v1786
      %v2635 = vpack.c.b16 %v1803, %v1787
      %v2636 = vpack.c.b16 %v1804, %v1788
      %v2637 = vpack.c.b16 %v1805, %v1789
      %v2638 = vpack.c.b16 %v1806, %v1790
      %v2639 = vpack.c.b16 %v1807, %v1791
      %v2640 = vpack.c.b16 %v1808, %v1792
      %v2641 = vpack.c.b16 %v1809, %v1793
      %v2642 = vpack.c.b16 %v1810, %v1794
      %v2643 = vpack.c.b16 %v1811, %v1795
      %v2644 = vpack.c.b16 %v1812, %v1796
      %v2645 = vpack.c.b16 %v1813, %v1797
      %v2646 = vpack.c.b16 %v1814, %v1798
      %v2647 = vpack.c.b16 %v1815, %v1799
      %v2648 = vpack.c.b16 %v1816, %v1800
      %v2649 = vpack.c.b16 %v1833, %v1817
      %v2650 = vpack.c.b16 %v1834, %v1818
      %v2651 = vpack.c.b16 %v1835, %v1819
      %v2652 = vpack.c.b16 %v1836, %v1820
      %v2653 = vpack.c.b16 %v1837, %v1821
      %v2654 = vpack.c.b16 %v1838, %v1822
      %v2655 = vpack.c.b16 %v1839, %v1823
      %v2656 = vpack.c.b16 %v1840, %v1824
      %v2657 = vpack.c.b16 %v1841, %v1825
      %v2658 = vpack.c.b16 %v1842, %v1826
      %v2659 = vpack.c.b16 %v1843, %v1827
      %v2660 = vpack.c.b16 %v1844, %v1828
      %v2661 = vpack.c.b16 %v1845, %v1829
      %v2662 = vpack.c.b16 %v1846, %v1830
      %v2663 = vpack.c.b16 %v1847, %v1831
      %v2664 = vpack.c.b16 %v1848, %v1832
      %v2665 = vpack.c.b16 %v1865, %v1849
      %v2666 = vpack.c.b16 %v1866, %v1850
      %v2667 = vpack.c.b16 %v1867, %v1851
      %v2668 = vpack.c.b16 %v1868, %v1852
      %v2669 = vpack.c.b16 %v1869, %v1853
      %v2670 = vpack.c.b16 %v1870, %v1854
      %v2671 = vpack.c.b16 %v1871, %v1855
      %v2672 = vpack.c.b16 %v1872, %v1856
      %v2673 = vpack.c.b16 %v1873, %v1857
      %v2674 = vpack.c.b16 %v1874, %v1858
      %v2675 = vpack.c.b16 %v1875, %v1859
      %v2676 = vpack.c.b16 %v1876, %v1860
      %v2677 = vpack.c.b16 %v1877, %v1861
      %v2678 = vpack.c.b16 %v1878, %v1862
      %v2679 = vpack.c.b16 %v1879, %v1863
      %v2680 = vpack.c.b16 %v1880, %v1864
      %v2681 = vpack.c.b16 %v1897, %v1881
      %v2682 = vpack.c.b16 %v1898, %v1882
      %v2683 = vpack.c.b16 %v1899, %v1883
      %v2684 = vpack.c.b16 %v1900, %v1884
      %v2685 = vpack.c.b16 %v1901, %v1885
      %v2686 = vpack.c.b16 %v1902, %v1886
      %v2687 = vpack.c.b16 %v1903, %v1887
      %v2688 = vpack.c.b16 %v1904, %v1888
      %v2689 = vpack.c.b16 %v1905, %v1889
      %v2690 = vpack.c.b16 %v1906, %v1890
      %v2691 = vpack.c.b16 %v1907, %v1891
      %v2692 = vpack.c.b16 %v1908, %v1892
      %v2693 = vpack.c.b16 %v1909, %v1893
      %v2694 = vpack.c.b16 %v1910, %v1894
      %v2695 = vpack.c.b16 %v1911, %v1895
      %v2696 = vpack.c.b16 %v1912, %v1896
      %v2697 = vpack.c.b16 %v1929, %v1913
      %v2698 = vpack.c.b16 %v1930, %v1914
      %v2699 = vpack.c.b16 %v1931, %v1915
      %v2700 = vpack.c.b16 %v1932, %v1916
      %v2701 = vpack.c.b16 %v1933, %v1917
      %v2702 = vpack.c.b16 %v1934, %v1918
      %v2703 = vpack.c.b16 %v1935, %v1919
      %v2704 = vpack.c.b16 %v1936, %v1920
      %v2705 = vpack.c.b16 %v1937, %v1921
      %v2706 = vpack.c.b16 %v1938, %v1922
      %v2707 = vpack.c.b16 %v1939, %v1923
      %v2708 = vpack.c.b16 %v1940, %v1924
      %v2709 = vpack.c.b16 %v1941, %v1925
      %v2710 = vpack.c.b16 %v1942, %v1926
      %v2711 = vpack.c.b16 %v1943, %v1927
      %v2712 = vpack.c.b16 %v1944, %v1928
      %v2713 = vpack.c.b16 %v1961, %v1945
      %v2714 = vpack.c.b16 %v1962, %v1946
      %v2715 = vpack.c.b16 %v1963, %v1947
      %v2716 = vpack.c.b16 %v1964, %v1948
      %v2717 = vpack.c.b16 %v1965, %v1949
      %v2718 = vpack.c.b16 %v1966, %v1950
      %v2719 = vpack.c.b16 %v1967, %v1951
      %v2720 = vpack.c.b16 %v1968, %v1952
      %v2721 = vpack.c.b16 %v1969, %v1953
      %v2722 = vpack.c.b16 %v1970, %v1954
      %v2723 = vpack.c.b16 %v1971, %v1955
      %v2724 = vpack.c.b16 %v1972, %v1956
      %v2725 = vpack.c.b16 %v1973, %v1957
      %v2726 = vpack.c.b16 %v1974, %v1958
      %v2727 = vpack.c.b16 %v1975, %v1959
      %v2728 = vpack.c.b16 %v1976, %v1960
      %v2729 = vpack.c.b16 %v1993, %v1977
      %v2730 = vpack.c.b16 %v1994, %v1978
      %v2731 = vpack.c.b16 %v1995, %v1979
      %v2732 = vpack.c.b16 %v1996, %v1980
      %v2733 = vpack.c.b16 %v1997, %v1981
      %v2734 = vpack.c.b16 %v1998, %v1982
      %v2735 = vpack.c.b16 %v1999, %v1983
      %v2736 = vpack.c.b16 %v2000, %v1984
      %v2737 = vpack.c.b16 %v2001, %v1985
      %v2738 = vpack.c.b16 %v2002, %v1986
      %v2739 = vpack.c.b16 %v2003, %v1987
      %v2740 = vpack.c.b16 %v2004, %v1988
      %v2741 = vpack.c.b16 %v2005, %v1989
      %v2742 = vpack.c.b16 %v2006, %v1990
      %v2743 = vpack.c.b16 %v2007, %v1991
      %v2744 = vpack.c.b16 %v2008, %v1992
      %v2745 = vpack.c.b16 %v2025, %v2009
      %v2746 = vpack.c.b16 %v2026, %v2010
      %v2747 = vpack.c.b16 %v2027, %v2011
      %v2748 = vpack.c.b16 %v2028, %v2012
      %v2749 = vpack.c.b16 %v2029, %v2013
      %v2750 = vpack.c.b16 %v2030, %v2014
      %v2751 = vpack.c.b16 %v2031, %v2015
      %v2752 = vpack.c.b16 %v2032, %v2016
      %v2753 = vpack.c.b16 %v2033, %v2017
      %v2754 = vpack.c.b16 %v2034, %v2018
      %v2755 = vpack.c.b16 %v2035, %v2019
      %v2756 = vpack.c.b16 %v2036, %v2020
      %v2757 = vpack.c.b16 %v2037, %v2021
      %v2758 = vpack.c.b16 %v2038, %v2022
      %v2759 = vpack.c.b16 %v2039, %v2023
      %v2760 = vpack.c.b16 %v2040, %v2024
      %v2761 = vpack.c.b16 %v2057, %v2041
      %v2762 = vpack.c.b16 %v2058, %v2042
      %v2763 = vpack.c.b16 %v2059, %v2043
      %v2764 = vpack.c.b16 %v2060, %v2044
      %v2765 = vpack.c.b16 %v2061, %v2045
      %v2766 = vpack.c.b16 %v2062, %v2046
      %v2767 = vpack.c.b16 %v2063, %v2047
      %v2768 = vpack.c.b16 %v2064, %v2048
      %v2769 = vpack.c.b16 %v2065, %v2049
      %v2770 = vpack.c.b16 %v2066, %v2050
      %v2771 = vpack.c.b16 %v2067, %v2051
      %v2772 = vpack.c.b16 %v2068, %v2052
      %v2773 = vpack.c.b16 %v2069, %v2053
      %v2774 = vpack.c.b16 %v2070, %v2054
      %v2775 = vpack.c.b16 %v2071, %v2055
      %v2776 = vpack.c.b16 %v2072, %v2056
      %v2777 = vpack.c.b16 %v2089, %v2073
      %v2778 = vpack.c.b16 %v2090, %v2074
      %v2779 = vpack.c.b16 %v2091, %v2075
      %v2780 = vpack.c.b16 %v2092, %v2076
      %v2781 = vpack.c.b16 %v2093, %v2077
      %v2782 = vpack.c.b16 %v2094, %v2078
      %v2783 = vpack.c.b16 %v2095, %v2079
      %v2784 = vpack.c.b16 %v2096, %v2080
      %v2785 = vpack.c.b16 %v2097, %v2081
      %v2786 = vpack.c.b16 %v2098, %v2082
      %v2787 = vpack.c.b16 %v2099, %v2083
      %v2788 = vpack.c.b16 %v2100, %v2084
      %v2789 = vpack.c.b16 %v2101, %v2085
      %v2790 = vpack.c.b16 %v2102, %v2086
      %v2791 = vpack.c.b16 %v2103, %v2087
      %v2792 = vpack.c.b16 %v2104, %v2088
      %v2793 = vpack.c.b16 %v2121, %v2105
      %v2794 = vpack.c.b16 %v2122, %v2106
      %v2795 = vpack.c.b16 %v2123, %v2107
      %v2796 = vpack.c.b16 %v2124, %v2108
      %v2797 = vpack.c.b16 %v2125, %v2109
      %v2798 = vpack.c.b16 %v2126, %v2110
      %v2799 = vpack.c.b16 %v2127, %v2111
      %v2800 = vpack.c.b16 %v2128, %v2112
      %v2801 = vpack.c.b16 %v2129, %v2113
      %v2802 = vpack.c.b16 %v2130, %v2114
      %v2803 = vpack.c.b16 %v2131, %v2115
      %v2804 = vpack.c.b16 %v2132, %v2116
      %v2805 = vpack.c.b16 %v2133, %v2117
      %v2806 = vpack.c.b16 %v2134, %v2118
      %v2807 = vpack.c.b16 %v2135, %v2119
      %v2808 = vpack.c.b16 %v2136, %v2120
      %v2809 = vpack.c.b16 %v2153, %v2137
      %v2810 = vpack.c.b16 %v2154, %v2138
      %v2811 = vpack.c.b16 %v2155, %v2139
      %v2812 = vpack.c.b16 %v2156, %v2140
      %v2813 = vpack.c.b16 %v2157, %v2141
      %v2814 = vpack.c.b16 %v2158, %v2142
      %v2815 = vpack.c.b16 %v2159, %v2143
      %v2816 = vpack.c.b16 %v2160, %v2144
      %v2817 = vpack.c.b16 %v2161, %v2145
      %v2818 = vpack.c.b16 %v2162, %v2146
      %v2819 = vpack.c.b16 %v2163, %v2147
      %v2820 = vpack.c.b16 %v2164, %v2148
      %v2821 = vpack.c.b16 %v2165, %v2149
      %v2822 = vpack.c.b16 %v2166, %v2150
      %v2823 = vpack.c.b16 %v2167, %v2151
      %v2824 = vpack.c.b16 %v2168, %v2152
      %v2825 = vpack.c.b16 %v2185, %v2169
      %v2826 = vpack.c.b16 %v2186, %v2170
      %v2827 = vpack.c.b16 %v2187, %v2171
      %v2828 = vpack.c.b16 %v2188, %v2172
      %v2829 = vpack.c.b16 %v2189, %v2173
      %v2830 = vpack.c.b16 %v2190, %v2174
      %v2831 = vpack.c.b16 %v2191, %v2175
      %v2832 = vpack.c.b16 %v2192, %v2176
      %v2833 = vpack.c.b16 %v2193, %v2177
      %v2834 = vpack.c.b16 %v2194, %v2178
      %v2835 = vpack.c.b16 %v2195, %v2179
      %v2836 = vpack.c.b16 %v2196, %v2180
      %v2837 = vpack.c.b16 %v2197, %v2181
      %v2838 = vpack.c.b16 %v2198, %v2182
      %v2839 = vpack.c.b16 %v2199, %v2183
      %v2840 = vpack.c.b16 %v2200, %v2184
      %v2841 = vpack.c.b16 %v2217, %v2201
      %v2842 = vpack.c.b16 %v2218, %v2202
      %v2843 = vpack.c.b16 %v2219, %v2203
      %v2844 = vpack.c.b16 %v2220, %v2204
      %v2845 = vpack.c.b16 %v2221, %v2205
      %v2846 = vpack.c.b16 %v2222, %v2206
      %v2847 = vpack.c.b16 %v2223, %v2207
      %v2848 = vpack.c.b16 %v2224, %v2208
      %v2849 = vpack.c.b16 %v2225, %v2209
      %v2850 = vpack.c.b16 %v2226, %v2210
      %v2851 = vpack.c.b16 %v2227, %v2211
      %v2852 = vpack.c.b16 %v2228, %v2212
      %v2853 = vpack.c.b16 %v2229, %v2213
      %v2854 = vpack.c.b16 %v2230, %v2214
      %v2855 = vpack.c.b16 %v2231, %v2215
      %v2856 = vpack.c.b16 %v2232, %v2216
      %v2857 = vpack.c.b16 %v2249, %v2233
      %v2858 = vpack.c.b16 %v2250, %v2234
      %v2859 = vpack.c.b16 %v2251, %v2235
      %v2860 = vpack.c.b16 %v2252, %v2236
      %v2861 = vpack.c.b16 %v2253, %v2237
      %v2862 = vpack.c.b16 %v2254, %v2238
      %v2863 = vpack.c.b16 %v2255, %v2239
      %v2864 = vpack.c.b16 %v2256, %v2240
      %v2865 = vpack.c.b16 %v2257, %v2241
      %v2866 = vpack.c.b16 %v2258, %v2242
      %v2867 = vpack.c.b16 %v2259, %v2243
      %v2868 = vpack.c.b16 %v2260, %v2244
      %v2869 = vpack.c.b16 %v2261, %v2245
      %v2870 = vpack.c.b16 %v2262, %v2246
      %v2871 = vpack.c.b16 %v2263, %v2247
      %v2872 = vpack.c.b16 %v2264, %v2248
      %v2873 = vpack.c.b16 %v2281, %v2265
      %v2874 = vpack.c.b16 %v2282, %v2266
      %v2875 = vpack.c.b16 %v2283, %v2267
      %v2876 = vpack.c.b16 %v2284, %v2268
      %v2877 = vpack.c.b16 %v2285, %v2269
      %v2878 = vpack.c.b16 %v2286, %v2270
      %v2879 = vpack.c.b16 %v2287, %v2271
      %v2880 = vpack.c.b16 %v2288, %v2272
      %v2881 = vpack.c.b16 %v2289, %v2273
      %v2882 = vpack.c.b16 %v2290, %v2274
      %v2883 = vpack.c.b16 %v2291, %v2275
      %v2884 = vpack.c.b16 %v2292, %v2276
      %v2885 = vpack.c.b16 %v2293, %v2277
      %v2886 = vpack.c.b16 %v2294, %v2278
      %v2887 = vpack.c.b16 %v2295, %v2279
      %v2888 = vpack.c.b16 %v2296, %v2280
      %v2889 = vpack.c.b16 %v2313, %v2297
      %v2890 = vpack.c.b16 %v2314, %v2298
      %v2891 = vpack.c.b16 %v2315, %v2299
      %v2892 = vpack.c.b16 %v2316, %v2300
      %v2893 = vpack.c.b16 %v2317, %v2301
      %v2894 = vpack.c.b16 %v2318, %v2302
      %v2895 = vpack.c.b16 %v2319, %v2303
      %v2896 = vpack.c.b16 %v2320, %v2304
      %v2897 = vpack.c.b16 %v2321, %v2305
      %v2898 = vpack.c.b16 %v2322, %v2306
      %v2899 = vpack.c.b16 %v2323, %v2307
      %v2900 = vpack.c.b16 %v2324, %v2308
      %v2901 = vpack.c.b16 %v2325, %v2309
      %v2902 = vpack.c.b16 %v2326, %v2310
      %v2903 = vpack.c.b16 %v2327, %v2311
      %v2904 = vpack.c.b16 %v2328, %v2312
      %v2905 = vpack.c.b16 %v2345, %v2329
      %v2906 = vpack.c.b16 %v2346, %v2330
      %v2907 = vpack.c.b16 %v2347, %v2331
      %v2908 = vpack.c.b16 %v2348, %v2332
      %v2909 = vpack.c.b16 %v2349, %v2333
      %v2910 = vpack.c.b16 %v2350, %v2334
      %v2911 = vpack.c.b16 %v2351, %v2335
      %v2912 = vpack.c.b16 %v2352, %v2336
      %v2913 = vpack.c.b16 %v2353, %v2337
      %v2914 = vpack.c.b16 %v2354, %v2338
      %v2915 = vpack.c.b16 %v2355, %v2339
      %v2916 = vpack.c.b16 %v2356, %v2340
      %v2917 = vpack.c.b16 %v2357, %v2341
      %v2918 = vpack.c.b16 %v2358, %v2342
      %v2919 = vpack.c.b16 %v2359, %v2343
      %v2920 = vpack.c.b16 %v2360, %v2344
      %v2921 = vpack.c.b16 %v2377, %v2361
      %v2922 = vpack.c.b16 %v2378, %v2362
      %v2923 = vpack.c.b16 %v2379, %v2363
      %v2924 = vpack.c.b16 %v2380, %v2364
      %v2925 = vpack.c.b16 %v2381, %v2365
      %v2926 = vpack.c.b16 %v2382, %v2366
      %v2927 = vpack.c.b16 %v2383, %v2367
      %v2928 = vpack.c.b16 %v2384, %v2368
      %v2929 = vpack.c.b16 %v2385, %v2369
      %v2930 = vpack.c.b16 %v2386, %v2370
      %v2931 = vpack.c.b16 %v2387, %v2371
      %v2932 = vpack.c.b16 %v2388, %v2372
      %v2933 = vpack.c.b16 %v2389, %v2373
      %v2934 = vpack.c.b16 %v2390, %v2374
      %v2935 = vpack.c.b16 %v2391, %v2375
      %v2936 = vpack.c.b16 %v2392, %v2376
      %v2937 = vpack.c.b16 %v2409, %v2393
      %v2938 = vpack.c.b16 %v2410, %v2394
      %v2939 = vpack.c.b16 %v2411, %v2395
      %v2940 = vpack.c.b16 %v2412, %v2396
      %v2941 = vpack.c.b16 %v2413, %v2397
      %v2942 = vpack.c.b16 %v2414, %v2398
      %v2943 = vpack.c.b16 %v2415, %v2399
      %v2944 = vpack.c.b16 %v2416, %v2400
      %v2945 = vpack.c.b16 %v2417, %v2401
      %v2946 = vpack.c.b16 %v2418, %v2402
      %v2947 = vpack.c.b16 %v2419, %v2403
      %v2948 = vpack.c.b16 %v2420, %v2404
      %v2949 = vpack.c.b16 %v2421, %v2405
      %v2950 = vpack.c.b16 %v2422, %v2406
      %v2951 = vpack.c.b16 %v2423, %v2407
      %v2952 = vpack.c.b16 %v2424, %v2408
      %v2953 = vpack.c.b16 %v2441, %v2425
      %v2954 = vpack.c.b16 %v2442, %v2426
      %v2955 = vpack.c.b16 %v2443, %v2427
      %v2956 = vpack.c.b16 %v2444, %v2428
      %v2957 = vpack.c.b16 %v2445, %v2429
      %v2958 = vpack.c.b16 %v2446, %v2430
      %v2959 = vpack.c.b16 %v2447, %v2431
      %v2960 = vpack.c.b16 %v2448, %v2432
      %v2961 = vpack.c.b16 %v2449, %v2433
      %v2962 = vpack.c.b16 %v2450, %v2434
      %v2963 = vpack.c.b16 %v2451, %v2435
      %v2964 = vpack.c.b16 %v2452, %v2436
      %v2965 = vpack.c.b16 %v2453, %v2437
      %v2966 = vpack.c.b16 %v2454, %v2438
      %v2967 = vpack.c.b16 %v2455, %v2439
      %v2968 = vpack.c.b16 %v2456, %v2440
      %3481 = vmatprep.subr.bf16.mxu0 %v2570
      %3482 = vmatpush1.bf16.msra.mxu0 %v2569
      %3483 = vmatprep.subr.bf16.mxu0 %v2554
      %3484 = vmatpush1.bf16.msra.mxu0 %v2553
      %3485 = vmatprep.subr.bf16.mxu0 %v2538
      %3486 = vmatpush1.bf16.msra.mxu0 %v2537
      %3487 = vmatprep.subr.bf16.mxu0 %v2522
      %3488 = vmatpush1.bf16.msra.mxu0 %v2521
      %3489 = vmatprep.subr.bf16.mxu0 %v2506
      %3490 = vmatpush1.bf16.msra.mxu0 %v2505
      %3491 = vmatprep.subr.bf16.mxu0 %v2490
      %3492 = vmatpush1.bf16.msra.mxu0 %v2489
      %3493 = vmatprep.subr.bf16.mxu0 %v2474
      %3494 = vmatpush1.bf16.msra.mxu0 %v2473
      %3495 = vmatprep.subr.bf16.mxu0 %v2458
      %3496 = vmatpush1.bf16.msra.mxu0 %v2457
      %3497 = vmatprep.subr.bf16.mxu0 %v2698
      %3498 = vmatpush2.bf16.msra.mxu0 %v2697
      %3499 = vmatprep.subr.bf16.mxu0 %v2682
      %3500 = vmatpush2.bf16.msra.mxu0 %v2681
      %3501 = vmatprep.subr.bf16.mxu0 %v2666
      %3502 = vmatpush2.bf16.msra.mxu0 %v2665
      %3503 = vmatprep.subr.bf16.mxu0 %v2650
      %3504 = vmatpush2.bf16.msra.mxu0 %v2649
      %3505 = vmatprep.subr.bf16.mxu0 %v2634
      %3506 = vmatpush2.bf16.msra.mxu0 %v2633
      %3507 = vmatprep.subr.bf16.mxu0 %v2618
      %3508 = vmatpush2.bf16.msra.mxu0 %v2617
      %3509 = vmatprep.subr.bf16.mxu0 %v2602
      %3510 = vmatpush2.bf16.msra.mxu0 %v2601
      %3511 = vmatprep.subr.bf16.mxu0 %v2586
      %3512 = vmatpush2.bf16.msra.mxu0 %v2585
      %3513 = vmatprep.mubr.bf16.mxu0 %v322
      %3514 = vmatmul.mubr.bf16.gmra.mxu0 %v321
      %v3515 = vpop.f32.mrf.mxu0
      %v3516 = vadd.f32 %v844, %v3515
      %v3517 = vpop.f32.mrf.mxu0
      %v3518 = vadd.f32 %v848, %v3517
      %v3519 = vpop.f32.mrf.mxu0
      %v3520 = vpop.f32.mrf.mxu0
      %3521 = vdwg.mxu0
      %3522 = vmatprep.subr.bf16.mxu0 %v2826
      %3523 = vmatpush1.bf16.msra.mxu0 %v2825
      %3524 = vmatprep.subr.bf16.mxu0 %v2810
      %3525 = vmatpush1.bf16.msra.mxu0 %v2809
      %3526 = vmatprep.subr.bf16.mxu0 %v2794
      %3527 = vmatpush1.bf16.msra.mxu0 %v2793
      %3528 = vmatprep.subr.bf16.mxu0 %v2778
      %3529 = vmatpush1.bf16.msra.mxu0 %v2777
      %3530 = vmatprep.subr.bf16.mxu0 %v2762
      %3531 = vmatpush1.bf16.msra.mxu0 %v2761
      %3532 = vmatprep.subr.bf16.mxu0 %v2746
      %3533 = vmatpush1.bf16.msra.mxu0 %v2745
      %3534 = vmatprep.subr.bf16.mxu0 %v2730
      %3535 = vmatpush1.bf16.msra.mxu0 %v2729
      %3536 = vmatprep.subr.bf16.mxu0 %v2714
      %3537 = vmatpush1.bf16.msra.mxu0 %v2713
      %3538 = vmatprep.subr.bf16.mxu0 %v2954
      %3539 = vmatpush2.bf16.msra.mxu0 %v2953
      %3540 = vmatprep.subr.bf16.mxu0 %v2938
      %3541 = vmatpush2.bf16.msra.mxu0 %v2937
      %3542 = vmatprep.subr.bf16.mxu0 %v2922
      %3543 = vmatpush2.bf16.msra.mxu0 %v2921
      %3544 = vmatprep.subr.bf16.mxu0 %v2906
      %3545 = vmatpush2.bf16.msra.mxu0 %v2905
      %3546 = vmatprep.subr.bf16.mxu0 %v2890
      %3547 = vmatpush2.bf16.msra.mxu0 %v2889
      %3548 = vmatprep.subr.bf16.mxu0 %v2874
      %3549 = vmatpush2.bf16.msra.mxu0 %v2873
      %3550 = vmatprep.subr.bf16.mxu0 %v2858
      %3551 = vmatpush2.bf16.msra.mxu0 %v2857
      %3552 = vmatprep.subr.bf16.mxu0 %v2842
      %3553 = vmatpush2.bf16.msra.mxu0 %v2841
      %3554 = vmatprep.mubr.bf16.mxu0 %v324
      %3555 = vmatmul.mubr.bf16.gmra.mxu0 %v323
      %v3556 = vpop.f32.mrf.mxu0
      %v3557 = vadd.f32 %v3516, %v3556
      %v3558 = vpop.f32.mrf.mxu0
      %v3559 = vadd.f32 %v3518, %v3558
      %v3560 = vpop.f32.mrf.mxu0
      %v3561 = vpop.f32.mrf.mxu0
      %3562 = vdwg.mxu0
      %3563 = vmatprep.subr.bf16.mxu0 %v2572
      %3564 = vmatpush1.bf16.msra.mxu0 %v2571
      %3565 = vmatprep.subr.bf16.mxu0 %v2556
      %3566 = vmatpush1.bf16.msra.mxu0 %v2555
      %3567 = vmatprep.subr.bf16.mxu0 %v2540
      %3568 = vmatpush1.bf16.msra.mxu0 %v2539
      %3569 = vmatprep.subr.bf16.mxu0 %v2524
      %3570 = vmatpush1.bf16.msra.mxu0 %v2523
      %3571 = vmatprep.subr.bf16.mxu0 %v2508
      %3572 = vmatpush1.bf16.msra.mxu0 %v2507
      %3573 = vmatprep.subr.bf16.mxu0 %v2492
      %3574 = vmatpush1.bf16.msra.mxu0 %v2491
      %3575 = vmatprep.subr.bf16.mxu0 %v2476
      %3576 = vmatpush1.bf16.msra.mxu0 %v2475
      %3577 = vmatprep.subr.bf16.mxu0 %v2460
      %3578 = vmatpush1.bf16.msra.mxu0 %v2459
      %3579 = vmatprep.subr.bf16.mxu0 %v2700
      %3580 = vmatpush2.bf16.msra.mxu0 %v2699
      %3581 = vmatprep.subr.bf16.mxu0 %v2684
      %3582 = vmatpush2.bf16.msra.mxu0 %v2683
      %3583 = vmatprep.subr.bf16.mxu0 %v2668
      %3584 = vmatpush2.bf16.msra.mxu0 %v2667
      %3585 = vmatprep.subr.bf16.mxu0 %v2652
      %3586 = vmatpush2.bf16.msra.mxu0 %v2651
      %3587 = vmatprep.subr.bf16.mxu0 %v2636
      %3588 = vmatpush2.bf16.msra.mxu0 %v2635
      %3589 = vmatprep.subr.bf16.mxu0 %v2620
      %3590 = vmatpush2.bf16.msra.mxu0 %v2619
      %3591 = vmatprep.subr.bf16.mxu0 %v2604
      %3592 = vmatpush2.bf16.msra.mxu0 %v2603
      %3593 = vmatprep.subr.bf16.mxu0 %v2588
      %3594 = vmatpush2.bf16.msra.mxu0 %v2587
      %3595 = vmatprep.mubr.bf16.mxu0 %v322
      %3596 = vmatmul.mubr.bf16.gmra.mxu0 %v321
      %v3597 = vpop.f32.mrf.mxu0
      %v3598 = vadd.f32 %v852, %v3597
      %v3599 = vpop.f32.mrf.mxu0
      %v3600 = vadd.f32 %v856, %v3599
      %v3601 = vpop.f32.mrf.mxu0
      %v3602 = vpop.f32.mrf.mxu0
      %3603 = vdwg.mxu0
      %3604 = vmatprep.subr.bf16.mxu0 %v2828
      %3605 = vmatpush1.bf16.msra.mxu0 %v2827
      %3606 = vmatprep.subr.bf16.mxu0 %v2812
      %3607 = vmatpush1.bf16.msra.mxu0 %v2811
      %3608 = vmatprep.subr.bf16.mxu0 %v2796
      %3609 = vmatpush1.bf16.msra.mxu0 %v2795
      %3610 = vmatprep.subr.bf16.mxu0 %v2780
      %3611 = vmatpush1.bf16.msra.mxu0 %v2779
      %3612 = vmatprep.subr.bf16.mxu0 %v2764
      %3613 = vmatpush1.bf16.msra.mxu0 %v2763
      %3614 = vmatprep.subr.bf16.mxu0 %v2748
      %3615 = vmatpush1.bf16.msra.mxu0 %v2747
      %3616 = vmatprep.subr.bf16.mxu0 %v2732
      %3617 = vmatpush1.bf16.msra.mxu0 %v2731
      %3618 = vmatprep.subr.bf16.mxu0 %v2716
      %3619 = vmatpush1.bf16.msra.mxu0 %v2715
      %3620 = vmatprep.subr.bf16.mxu0 %v2956
      %3621 = vmatpush2.bf16.msra.mxu0 %v2955
      %3622 = vmatprep.subr.bf16.mxu0 %v2940
      %3623 = vmatpush2.bf16.msra.mxu0 %v2939
      %3624 = vmatprep.subr.bf16.mxu0 %v2924
      %3625 = vmatpush2.bf16.msra.mxu0 %v2923
      %3626 = vmatprep.subr.bf16.mxu0 %v2908
      %3627 = vmatpush2.bf16.msra.mxu0 %v2907
      %3628 = vmatprep.subr.bf16.mxu0 %v2892
      %3629 = vmatpush2.bf16.msra.mxu0 %v2891
      %3630 = vmatprep.subr.bf16.mxu0 %v2876
      %3631 = vmatpush2.bf16.msra.mxu0 %v2875
      %3632 = vmatprep.subr.bf16.mxu0 %v2860
      %3633 = vmatpush2.bf16.msra.mxu0 %v2859
      %3634 = vmatprep.subr.bf16.mxu0 %v2844
      %3635 = vmatpush2.bf16.msra.mxu0 %v2843
      %3636 = vmatprep.mubr.bf16.mxu0 %v324
      %3637 = vmatmul.mubr.bf16.gmra.mxu0 %v323
      %v3638 = vpop.f32.mrf.mxu0
      %v3639 = vadd.f32 %v3598, %v3638
      %v3640 = vpop.f32.mrf.mxu0
      %v3641 = vadd.f32 %v3600, %v3640
      %v3642 = vpop.f32.mrf.mxu0
      %v3643 = vpop.f32.mrf.mxu0
      %3644 = vdwg.mxu0
      %3645 = vmatprep.subr.bf16.mxu0 %v2574
      %3646 = vmatpush1.bf16.msra.mxu0 %v2573
      %3647 = vmatprep.subr.bf16.mxu0 %v2558
      %3648 = vmatpush1.bf16.msra.mxu0 %v2557
      %3649 = vmatprep.subr.bf16.mxu0 %v2542
      %3650 = vmatpush1.bf16.msra.mxu0 %v2541
      %3651 = vmatprep.subr.bf16.mxu0 %v2526
      %3652 = vmatpush1.bf16.msra.mxu0 %v2525
      %3653 = vmatprep.subr.bf16.mxu0 %v2510
      %3654 = vmatpush1.bf16.msra.mxu0 %v2509
      %3655 = vmatprep.subr.bf16.mxu0 %v2494
      %3656 = vmatpush1.bf16.msra.mxu0 %v2493
      %3657 = vmatprep.subr.bf16.mxu0 %v2478
      %3658 = vmatpush1.bf16.msra.mxu0 %v2477
      %3659 = vmatprep.subr.bf16.mxu0 %v2462
      %3660 = vmatpush1.bf16.msra.mxu0 %v2461
      %3661 = vmatprep.subr.bf16.mxu0 %v2702
      %3662 = vmatpush2.bf16.msra.mxu0 %v2701
      %3663 = vmatprep.subr.bf16.mxu0 %v2686
      %3664 = vmatpush2.bf16.msra.mxu0 %v2685
      %3665 = vmatprep.subr.bf16.mxu0 %v2670
      %3666 = vmatpush2.bf16.msra.mxu0 %v2669
      %3667 = vmatprep.subr.bf16.mxu0 %v2654
      %3668 = vmatpush2.bf16.msra.mxu0 %v2653
      %3669 = vmatprep.subr.bf16.mxu0 %v2638
      %3670 = vmatpush2.bf16.msra.mxu0 %v2637
      %3671 = vmatprep.subr.bf16.mxu0 %v2622
      %3672 = vmatpush2.bf16.msra.mxu0 %v2621
      %3673 = vmatprep.subr.bf16.mxu0 %v2606
      %3674 = vmatpush2.bf16.msra.mxu0 %v2605
      %3675 = vmatprep.subr.bf16.mxu0 %v2590
      %3676 = vmatpush2.bf16.msra.mxu0 %v2589
      %3677 = vmatprep.mubr.bf16.mxu0 %v322
      %3678 = vmatmul.mubr.bf16.gmra.mxu0 %v321
      %v3679 = vpop.f32.mrf.mxu0
      %v3680 = vadd.f32 %v860, %v3679
      %v3681 = vpop.f32.mrf.mxu0
      %v3682 = vadd.f32 %v864, %v3681
      %v3683 = vpop.f32.mrf.mxu0
      %v3684 = vpop.f32.mrf.mxu0
      %3685 = vdwg.mxu0
      %3686 = vmatprep.subr.bf16.mxu0 %v2830
      %3687 = vmatpush1.bf16.msra.mxu0 %v2829
      %3688 = vmatprep.subr.bf16.mxu0 %v2814
      %3689 = vmatpush1.bf16.msra.mxu0 %v2813
      %3690 = vmatprep.subr.bf16.mxu0 %v2798
      %3691 = vmatpush1.bf16.msra.mxu0 %v2797
      %3692 = vmatprep.subr.bf16.mxu0 %v2782
      %3693 = vmatpush1.bf16.msra.mxu0 %v2781
      %3694 = vmatprep.subr.bf16.mxu0 %v2766
      %3695 = vmatpush1.bf16.msra.mxu0 %v2765
      %3696 = vmatprep.subr.bf16.mxu0 %v2750
      %3697 = vmatpush1.bf16.msra.mxu0 %v2749
      %3698 = vmatprep.subr.bf16.mxu0 %v2734
      %3699 = vmatpush1.bf16.msra.mxu0 %v2733
      %3700 = vmatprep.subr.bf16.mxu0 %v2718
      %3701 = vmatpush1.bf16.msra.mxu0 %v2717
      %3702 = vmatprep.subr.bf16.mxu0 %v2958
      %3703 = vmatpush2.bf16.msra.mxu0 %v2957
      %3704 = vmatprep.subr.bf16.mxu0 %v2942
      %3705 = vmatpush2.bf16.msra.mxu0 %v2941
      %3706 = vmatprep.subr.bf16.mxu0 %v2926
      %3707 = vmatpush2.bf16.msra.mxu0 %v2925
      %3708 = vmatprep.subr.bf16.mxu0 %v2910
      %3709 = vmatpush2.bf16.msra.mxu0 %v2909
      %3710 = vmatprep.subr.bf16.mxu0 %v2894
      %3711 = vmatpush2.bf16.msra.mxu0 %v2893
      %3712 = vmatprep.subr.bf16.mxu0 %v2878
      %3713 = vmatpush2.bf16.msra.mxu0 %v2877
      %3714 = vmatprep.subr.bf16.mxu0 %v2862
      %3715 = vmatpush2.bf16.msra.mxu0 %v2861
      %3716 = vmatprep.subr.bf16.mxu0 %v2846
      %3717 = vmatpush2.bf16.msra.mxu0 %v2845
      %3718 = vmatprep.mubr.bf16.mxu0 %v324
      %3719 = vmatmul.mubr.bf16.gmra.mxu0 %v323
      %v3720 = vpop.f32.mrf.mxu0
      %v3721 = vadd.f32 %v3680, %v3720
      %v3722 = vpop.f32.mrf.mxu0
      %v3723 = vadd.f32 %v3682, %v3722
      %v3724 = vpop.f32.mrf.mxu0
      %v3725 = vpop.f32.mrf.mxu0
      %3726 = vdwg.mxu0
      %3727 = vmatprep.subr.bf16.mxu0 %v2576
      %3728 = vmatpush1.bf16.msra.mxu0 %v2575
      %3729 = vmatprep.subr.bf16.mxu0 %v2560
      %3730 = vmatpush1.bf16.msra.mxu0 %v2559
      %3731 = vmatprep.subr.bf16.mxu0 %v2544
      %3732 = vmatpush1.bf16.msra.mxu0 %v2543
      %3733 = vmatprep.subr.bf16.mxu0 %v2528
      %3734 = vmatpush1.bf16.msra.mxu0 %v2527
      %3735 = vmatprep.subr.bf16.mxu0 %v2512
      %3736 = vmatpush1.bf16.msra.mxu0 %v2511
      %3737 = vmatprep.subr.bf16.mxu0 %v2496
      %3738 = vmatpush1.bf16.msra.mxu0 %v2495
      %3739 = vmatprep.subr.bf16.mxu0 %v2480
      %3740 = vmatpush1.bf16.msra.mxu0 %v2479
      %3741 = vmatprep.subr.bf16.mxu0 %v2464
      %3742 = vmatpush1.bf16.msra.mxu0 %v2463
      %3743 = vmatprep.subr.bf16.mxu0 %v2704
      %3744 = vmatpush2.bf16.msra.mxu0 %v2703
      %3745 = vmatprep.subr.bf16.mxu0 %v2688
      %3746 = vmatpush2.bf16.msra.mxu0 %v2687
      %3747 = vmatprep.subr.bf16.mxu0 %v2672
      %3748 = vmatpush2.bf16.msra.mxu0 %v2671
      %3749 = vmatprep.subr.bf16.mxu0 %v2656
      %3750 = vmatpush2.bf16.msra.mxu0 %v2655
      %3751 = vmatprep.subr.bf16.mxu0 %v2640
      %3752 = vmatpush2.bf16.msra.mxu0 %v2639
      %3753 = vmatprep.subr.bf16.mxu0 %v2624
      %3754 = vmatpush2.bf16.msra.mxu0 %v2623
      %3755 = vmatprep.subr.bf16.mxu0 %v2608
      %3756 = vmatpush2.bf16.msra.mxu0 %v2607
      %3757 = vmatprep.subr.bf16.mxu0 %v2592
      %3758 = vmatpush2.bf16.msra.mxu0 %v2591
      %3759 = vmatprep.mubr.bf16.mxu0 %v322
      %3760 = vmatmul.mubr.bf16.gmra.mxu0 %v321
      %v3761 = vpop.f32.mrf.mxu0
      %v3762 = vadd.f32 %v868, %v3761
      %v3763 = vpop.f32.mrf.mxu0
      %v3764 = vadd.f32 %v872, %v3763
      %v3765 = vpop.f32.mrf.mxu0
      %v3766 = vpop.f32.mrf.mxu0
      %3767 = vdwg.mxu0
      %3768 = vmatprep.subr.bf16.mxu0 %v2832
      %3769 = vmatpush1.bf16.msra.mxu0 %v2831
      %3770 = vmatprep.subr.bf16.mxu0 %v2816
      %3771 = vmatpush1.bf16.msra.mxu0 %v2815
      %3772 = vmatprep.subr.bf16.mxu0 %v2800
      %3773 = vmatpush1.bf16.msra.mxu0 %v2799
      %3774 = vmatprep.subr.bf16.mxu0 %v2784
      %3775 = vmatpush1.bf16.msra.mxu0 %v2783
      %3776 = vmatprep.subr.bf16.mxu0 %v2768
      %3777 = vmatpush1.bf16.msra.mxu0 %v2767
      %3778 = vmatprep.subr.bf16.mxu0 %v2752
      %3779 = vmatpush1.bf16.msra.mxu0 %v2751
      %3780 = vmatprep.subr.bf16.mxu0 %v2736
      %3781 = vmatpush1.bf16.msra.mxu0 %v2735
      %3782 = vmatprep.subr.bf16.mxu0 %v2720
      %3783 = vmatpush1.bf16.msra.mxu0 %v2719
      %3784 = vmatprep.subr.bf16.mxu0 %v2960
      %3785 = vmatpush2.bf16.msra.mxu0 %v2959
      %3786 = vmatprep.subr.bf16.mxu0 %v2944
      %3787 = vmatpush2.bf16.msra.mxu0 %v2943
      %3788 = vmatprep.subr.bf16.mxu0 %v2928
      %3789 = vmatpush2.bf16.msra.mxu0 %v2927
      %3790 = vmatprep.subr.bf16.mxu0 %v2912
      %3791 = vmatpush2.bf16.msra.mxu0 %v2911
      %3792 = vmatprep.subr.bf16.mxu0 %v2896
      %3793 = vmatpush2.bf16.msra.mxu0 %v2895
      %3794 = vmatprep.subr.bf16.mxu0 %v2880
      %3795 = vmatpush2.bf16.msra.mxu0 %v2879
      %3796 = vmatprep.subr.bf16.mxu0 %v2864
      %3797 = vmatpush2.bf16.msra.mxu0 %v2863
      %3798 = vmatprep.subr.bf16.mxu0 %v2848
      %3799 = vmatpush2.bf16.msra.mxu0 %v2847
      %3800 = vmatprep.mubr.bf16.mxu0 %v324
      %3801 = vmatmul.mubr.bf16.gmra.mxu0 %v323
      %v3802 = vpop.f32.mrf.mxu0
      %v3803 = vadd.f32 %v3762, %v3802
      %v3804 = vpop.f32.mrf.mxu0
      %v3805 = vadd.f32 %v3764, %v3804
      %v3806 = vpop.f32.mrf.mxu0
      %v3807 = vpop.f32.mrf.mxu0
      %3808 = vdwg.mxu0
      %3809 = vmatprep.subr.bf16.mxu0 %v2578
      %3810 = vmatpush1.bf16.msra.mxu0 %v2577
      %3811 = vmatprep.subr.bf16.mxu0 %v2562
      %3812 = vmatpush1.bf16.msra.mxu0 %v2561
      %3813 = vmatprep.subr.bf16.mxu0 %v2546
      %3814 = vmatpush1.bf16.msra.mxu0 %v2545
      %3815 = vmatprep.subr.bf16.mxu0 %v2530
      %3816 = vmatpush1.bf16.msra.mxu0 %v2529
      %3817 = vmatprep.subr.bf16.mxu0 %v2514
      %3818 = vmatpush1.bf16.msra.mxu0 %v2513
      %3819 = vmatprep.subr.bf16.mxu0 %v2498
      %3820 = vmatpush1.bf16.msra.mxu0 %v2497
      %3821 = vmatprep.subr.bf16.mxu0 %v2482
      %3822 = vmatpush1.bf16.msra.mxu0 %v2481
      %3823 = vmatprep.subr.bf16.mxu0 %v2466
      %3824 = vmatpush1.bf16.msra.mxu0 %v2465
      %3825 = vmatprep.subr.bf16.mxu0 %v2706
      %3826 = vmatpush2.bf16.msra.mxu0 %v2705
      %3827 = vmatprep.subr.bf16.mxu0 %v2690
      %3828 = vmatpush2.bf16.msra.mxu0 %v2689
      %3829 = vmatprep.subr.bf16.mxu0 %v2674
      %3830 = vmatpush2.bf16.msra.mxu0 %v2673
      %3831 = vmatprep.subr.bf16.mxu0 %v2658
      %3832 = vmatpush2.bf16.msra.mxu0 %v2657
      %3833 = vmatprep.subr.bf16.mxu0 %v2642
      %3834 = vmatpush2.bf16.msra.mxu0 %v2641
      %3835 = vmatprep.subr.bf16.mxu0 %v2626
      %3836 = vmatpush2.bf16.msra.mxu0 %v2625
      %3837 = vmatprep.subr.bf16.mxu0 %v2610
      %3838 = vmatpush2.bf16.msra.mxu0 %v2609
      %3839 = vmatprep.subr.bf16.mxu0 %v2594
      %3840 = vmatpush2.bf16.msra.mxu0 %v2593
      %3841 = vmatprep.mubr.bf16.mxu0 %v322
      %3842 = vmatmul.mubr.bf16.gmra.mxu0 %v321
      %v3843 = vpop.f32.mrf.mxu0
      %v3844 = vadd.f32 %v876, %v3843
      %v3845 = vpop.f32.mrf.mxu0
      %v3846 = vadd.f32 %v880, %v3845
      %v3847 = vpop.f32.mrf.mxu0
      %v3848 = vpop.f32.mrf.mxu0
      %3849 = vdwg.mxu0
      %3850 = vmatprep.subr.bf16.mxu0 %v2834
      %3851 = vmatpush1.bf16.msra.mxu0 %v2833
      %3852 = vmatprep.subr.bf16.mxu0 %v2818
      %3853 = vmatpush1.bf16.msra.mxu0 %v2817
      %3854 = vmatprep.subr.bf16.mxu0 %v2802
      %3855 = vmatpush1.bf16.msra.mxu0 %v2801
      %3856 = vmatprep.subr.bf16.mxu0 %v2786
      %3857 = vmatpush1.bf16.msra.mxu0 %v2785
      %3858 = vmatprep.subr.bf16.mxu0 %v2770
      %3859 = vmatpush1.bf16.msra.mxu0 %v2769
      %3860 = vmatprep.subr.bf16.mxu0 %v2754
      %3861 = vmatpush1.bf16.msra.mxu0 %v2753
      %3862 = vmatprep.subr.bf16.mxu0 %v2738
      %3863 = vmatpush1.bf16.msra.mxu0 %v2737
      %3864 = vmatprep.subr.bf16.mxu0 %v2722
      %3865 = vmatpush1.bf16.msra.mxu0 %v2721
      %3866 = vmatprep.subr.bf16.mxu0 %v2962
      %3867 = vmatpush2.bf16.msra.mxu0 %v2961
      %3868 = vmatprep.subr.bf16.mxu0 %v2946
      %3869 = vmatpush2.bf16.msra.mxu0 %v2945
      %3870 = vmatprep.subr.bf16.mxu0 %v2930
      %3871 = vmatpush2.bf16.msra.mxu0 %v2929
      %3872 = vmatprep.subr.bf16.mxu0 %v2914
      %3873 = vmatpush2.bf16.msra.mxu0 %v2913
      %3874 = vmatprep.subr.bf16.mxu0 %v2898
      %3875 = vmatpush2.bf16.msra.mxu0 %v2897
      %3876 = vmatprep.subr.bf16.mxu0 %v2882
      %3877 = vmatpush2.bf16.msra.mxu0 %v2881
      %3878 = vmatprep.subr.bf16.mxu0 %v2866
      %3879 = vmatpush2.bf16.msra.mxu0 %v2865
      %3880 = vmatprep.subr.bf16.mxu0 %v2850
      %3881 = vmatpush2.bf16.msra.mxu0 %v2849
      %3882 = vmatprep.mubr.bf16.mxu0 %v324
      %3883 = vmatmul.mubr.bf16.gmra.mxu0 %v323
      %v3884 = vpop.f32.mrf.mxu0
      %v3885 = vadd.f32 %v3844, %v3884
      %v3886 = vpop.f32.mrf.mxu0
      %v3887 = vadd.f32 %v3846, %v3886
      %v3888 = vpop.f32.mrf.mxu0
      %v3889 = vpop.f32.mrf.mxu0
      %3890 = vdwg.mxu0
      %3891 = vmatprep.subr.bf16.mxu0 %v2580
      %3892 = vmatpush1.bf16.msra.mxu0 %v2579
      %3893 = vmatprep.subr.bf16.mxu0 %v2564
      %3894 = vmatpush1.bf16.msra.mxu0 %v2563
      %3895 = vmatprep.subr.bf16.mxu0 %v2548
      %3896 = vmatpush1.bf16.msra.mxu0 %v2547
      %3897 = vmatprep.subr.bf16.mxu0 %v2532
      %3898 = vmatpush1.bf16.msra.mxu0 %v2531
      %3899 = vmatprep.subr.bf16.mxu0 %v2516
      %3900 = vmatpush1.bf16.msra.mxu0 %v2515
      %3901 = vmatprep.subr.bf16.mxu0 %v2500
      %3902 = vmatpush1.bf16.msra.mxu0 %v2499
      %3903 = vmatprep.subr.bf16.mxu0 %v2484
      %3904 = vmatpush1.bf16.msra.mxu0 %v2483
      %3905 = vmatprep.subr.bf16.mxu0 %v2468
      %3906 = vmatpush1.bf16.msra.mxu0 %v2467
      %3907 = vmatprep.subr.bf16.mxu0 %v2708
      %3908 = vmatpush2.bf16.msra.mxu0 %v2707
      %3909 = vmatprep.subr.bf16.mxu0 %v2692
      %3910 = vmatpush2.bf16.msra.mxu0 %v2691
      %3911 = vmatprep.subr.bf16.mxu0 %v2676
      %3912 = vmatpush2.bf16.msra.mxu0 %v2675
      %3913 = vmatprep.subr.bf16.mxu0 %v2660
      %3914 = vmatpush2.bf16.msra.mxu0 %v2659
      %3915 = vmatprep.subr.bf16.mxu0 %v2644
      %3916 = vmatpush2.bf16.msra.mxu0 %v2643
      %3917 = vmatprep.subr.bf16.mxu0 %v2628
      %3918 = vmatpush2.bf16.msra.mxu0 %v2627
      %3919 = vmatprep.subr.bf16.mxu0 %v2612
      %3920 = vmatpush2.bf16.msra.mxu0 %v2611
      %3921 = vmatprep.subr.bf16.mxu0 %v2596
      %3922 = vmatpush2.bf16.msra.mxu0 %v2595
      %3923 = vmatprep.mubr.bf16.mxu0 %v322
      %3924 = vmatmul.mubr.bf16.gmra.mxu0 %v321
      %v3925 = vpop.f32.mrf.mxu0
      %v3926 = vadd.f32 %v884, %v3925
      %v3927 = vpop.f32.mrf.mxu0
      %v3928 = vadd.f32 %v888, %v3927
      %v3929 = vpop.f32.mrf.mxu0
      %v3930 = vpop.f32.mrf.mxu0
      %3931 = vdwg.mxu0
      %3932 = vmatprep.subr.bf16.mxu0 %v2836
      %3933 = vmatpush1.bf16.msra.mxu0 %v2835
      %3934 = vmatprep.subr.bf16.mxu0 %v2820
      %3935 = vmatpush1.bf16.msra.mxu0 %v2819
      %3936 = vmatprep.subr.bf16.mxu0 %v2804
      %3937 = vmatpush1.bf16.msra.mxu0 %v2803
      %3938 = vmatprep.subr.bf16.mxu0 %v2788
      %3939 = vmatpush1.bf16.msra.mxu0 %v2787
      %3940 = vmatprep.subr.bf16.mxu0 %v2772
      %3941 = vmatpush1.bf16.msra.mxu0 %v2771
      %3942 = vmatprep.subr.bf16.mxu0 %v2756
      %3943 = vmatpush1.bf16.msra.mxu0 %v2755
      %3944 = vmatprep.subr.bf16.mxu0 %v2740
      %3945 = vmatpush1.bf16.msra.mxu0 %v2739
      %3946 = vmatprep.subr.bf16.mxu0 %v2724
      %3947 = vmatpush1.bf16.msra.mxu0 %v2723
      %3948 = vmatprep.subr.bf16.mxu0 %v2964
      %3949 = vmatpush2.bf16.msra.mxu0 %v2963
      %3950 = vmatprep.subr.bf16.mxu0 %v2948
      %3951 = vmatpush2.bf16.msra.mxu0 %v2947
      %3952 = vmatprep.subr.bf16.mxu0 %v2932
      %3953 = vmatpush2.bf16.msra.mxu0 %v2931
      %3954 = vmatprep.subr.bf16.mxu0 %v2916
      %3955 = vmatpush2.bf16.msra.mxu0 %v2915
      %3956 = vmatprep.subr.bf16.mxu0 %v2900
      %3957 = vmatpush2.bf16.msra.mxu0 %v2899
      %3958 = vmatprep.subr.bf16.mxu0 %v2884
      %3959 = vmatpush2.bf16.msra.mxu0 %v2883
      %3960 = vmatprep.subr.bf16.mxu0 %v2868
      %3961 = vmatpush2.bf16.msra.mxu0 %v2867
      %3962 = vmatprep.subr.bf16.mxu0 %v2852
      %3963 = vmatpush2.bf16.msra.mxu0 %v2851
      %3964 = vmatprep.mubr.bf16.mxu0 %v324
      %3965 = vmatmul.mubr.bf16.gmra.mxu0 %v323
      %v3966 = vpop.f32.mrf.mxu0
      %v3967 = vadd.f32 %v3926, %v3966
      %v3968 = vpop.f32.mrf.mxu0
      %v3969 = vadd.f32 %v3928, %v3968
      %v3970 = vpop.f32.mrf.mxu0
      %v3971 = vpop.f32.mrf.mxu0
      %3972 = vdwg.mxu0
      %3973 = vmatprep.subr.bf16.mxu0 %v2582
      %3974 = vmatpush1.bf16.msra.mxu0 %v2581
      %3975 = vmatprep.subr.bf16.mxu0 %v2566
      %3976 = vmatpush1.bf16.msra.mxu0 %v2565
      %3977 = vmatprep.subr.bf16.mxu0 %v2550
      %3978 = vmatpush1.bf16.msra.mxu0 %v2549
      %3979 = vmatprep.subr.bf16.mxu0 %v2534
      %3980 = vmatpush1.bf16.msra.mxu0 %v2533
      %3981 = vmatprep.subr.bf16.mxu0 %v2518
      %3982 = vmatpush1.bf16.msra.mxu0 %v2517
      %3983 = vmatprep.subr.bf16.mxu0 %v2502
      %3984 = vmatpush1.bf16.msra.mxu0 %v2501
      %3985 = vmatprep.subr.bf16.mxu0 %v2486
      %3986 = vmatpush1.bf16.msra.mxu0 %v2485
      %3987 = vmatprep.subr.bf16.mxu0 %v2470
      %3988 = vmatpush1.bf16.msra.mxu0 %v2469
      %3989 = vmatprep.subr.bf16.mxu0 %v2710
      %3990 = vmatpush2.bf16.msra.mxu0 %v2709
      %3991 = vmatprep.subr.bf16.mxu0 %v2694
      %3992 = vmatpush2.bf16.msra.mxu0 %v2693
      %3993 = vmatprep.subr.bf16.mxu0 %v2678
      %3994 = vmatpush2.bf16.msra.mxu0 %v2677
      %3995 = vmatprep.subr.bf16.mxu0 %v2662
      %3996 = vmatpush2.bf16.msra.mxu0 %v2661
      %3997 = vmatprep.subr.bf16.mxu0 %v2646
      %3998 = vmatpush2.bf16.msra.mxu0 %v2645
      %3999 = vmatprep.subr.bf16.mxu0 %v2630
      %4000 = vmatpush2.bf16.msra.mxu0 %v2629
      %4001 = vmatprep.subr.bf16.mxu0 %v2614
      %4002 = vmatpush2.bf16.msra.mxu0 %v2613
      %4003 = vmatprep.subr.bf16.mxu0 %v2598
      %4004 = vmatpush2.bf16.msra.mxu0 %v2597
      %4005 = vmatprep.mubr.bf16.mxu0 %v322
      %4006 = vmatmul.mubr.bf16.gmra.mxu0 %v321
      %v4007 = vpop.f32.mrf.mxu0
      %v4008 = vadd.f32 %v892, %v4007
      %v4009 = vpop.f32.mrf.mxu0
      %v4010 = vadd.f32 %v896, %v4009
      %v4011 = vpop.f32.mrf.mxu0
      %v4012 = vpop.f32.mrf.mxu0
      %4013 = vdwg.mxu0
      %4014 = vmatprep.subr.bf16.mxu0 %v2838
      %4015 = vmatpush1.bf16.msra.mxu0 %v2837
      %4016 = vmatprep.subr.bf16.mxu0 %v2822
      %4017 = vmatpush1.bf16.msra.mxu0 %v2821
      %4018 = vmatprep.subr.bf16.mxu0 %v2806
      %4019 = vmatpush1.bf16.msra.mxu0 %v2805
      %4020 = vmatprep.subr.bf16.mxu0 %v2790
      %4021 = vmatpush1.bf16.msra.mxu0 %v2789
      %4022 = vmatprep.subr.bf16.mxu0 %v2774
      %4023 = vmatpush1.bf16.msra.mxu0 %v2773
      %4024 = vmatprep.subr.bf16.mxu0 %v2758
      %4025 = vmatpush1.bf16.msra.mxu0 %v2757
      %4026 = vmatprep.subr.bf16.mxu0 %v2742
      %4027 = vmatpush1.bf16.msra.mxu0 %v2741
      %4028 = vmatprep.subr.bf16.mxu0 %v2726
      %4029 = vmatpush1.bf16.msra.mxu0 %v2725
      %4030 = vmatprep.subr.bf16.mxu0 %v2966
      %4031 = vmatpush2.bf16.msra.mxu0 %v2965
      %4032 = vmatprep.subr.bf16.mxu0 %v2950
      %4033 = vmatpush2.bf16.msra.mxu0 %v2949
      %4034 = vmatprep.subr.bf16.mxu0 %v2934
      %4035 = vmatpush2.bf16.msra.mxu0 %v2933
      %4036 = vmatprep.subr.bf16.mxu0 %v2918
      %4037 = vmatpush2.bf16.msra.mxu0 %v2917
      %4038 = vmatprep.subr.bf16.mxu0 %v2902
      %4039 = vmatpush2.bf16.msra.mxu0 %v2901
      %4040 = vmatprep.subr.bf16.mxu0 %v2886
      %4041 = vmatpush2.bf16.msra.mxu0 %v2885
      %4042 = vmatprep.subr.bf16.mxu0 %v2870
      %4043 = vmatpush2.bf16.msra.mxu0 %v2869
      %4044 = vmatprep.subr.bf16.mxu0 %v2854
      %4045 = vmatpush2.bf16.msra.mxu0 %v2853
      %4046 = vmatprep.mubr.bf16.mxu0 %v324
      %4047 = vmatmul.mubr.bf16.gmra.mxu0 %v323
      %v4048 = vpop.f32.mrf.mxu0
      %v4049 = vadd.f32 %v4008, %v4048
      %v4050 = vpop.f32.mrf.mxu0
      %v4051 = vadd.f32 %v4010, %v4050
      %v4052 = vpop.f32.mrf.mxu0
      %v4053 = vpop.f32.mrf.mxu0
      %4054 = vdwg.mxu0
      %4055 = vmatprep.subr.bf16.mxu0 %v2584
      %4056 = vmatpush1.bf16.msra.mxu0 %v2583
      %4057 = vmatprep.subr.bf16.mxu0 %v2568
      %4058 = vmatpush1.bf16.msra.mxu0 %v2567
      %4059 = vmatprep.subr.bf16.mxu0 %v2552
      %4060 = vmatpush1.bf16.msra.mxu0 %v2551
      %4061 = vmatprep.subr.bf16.mxu0 %v2536
      %4062 = vmatpush1.bf16.msra.mxu0 %v2535
      %4063 = vmatprep.subr.bf16.mxu0 %v2520
      %4064 = vmatpush1.bf16.msra.mxu0 %v2519
      %4065 = vmatprep.subr.bf16.mxu0 %v2504
      %4066 = vmatpush1.bf16.msra.mxu0 %v2503
      %4067 = vmatprep.subr.bf16.mxu0 %v2488
      %4068 = vmatpush1.bf16.msra.mxu0 %v2487
      %4069 = vmatprep.subr.bf16.mxu0 %v2472
      %4070 = vmatpush1.bf16.msra.mxu0 %v2471
      %4071 = vmatprep.subr.bf16.mxu0 %v2712
      %4072 = vmatpush2.bf16.msra.mxu0 %v2711
      %4073 = vmatprep.subr.bf16.mxu0 %v2696
      %4074 = vmatpush2.bf16.msra.mxu0 %v2695
      %4075 = vmatprep.subr.bf16.mxu0 %v2680
      %4076 = vmatpush2.bf16.msra.mxu0 %v2679
      %4077 = vmatprep.subr.bf16.mxu0 %v2664
      %4078 = vmatpush2.bf16.msra.mxu0 %v2663
      %4079 = vmatprep.subr.bf16.mxu0 %v2648
      %4080 = vmatpush2.bf16.msra.mxu0 %v2647
      %4081 = vmatprep.subr.bf16.mxu0 %v2632
      %4082 = vmatpush2.bf16.msra.mxu0 %v2631
      %4083 = vmatprep.subr.bf16.mxu0 %v2616
      %4084 = vmatpush2.bf16.msra.mxu0 %v2615
      %4085 = vmatprep.subr.bf16.mxu0 %v2600
      %4086 = vmatpush2.bf16.msra.mxu0 %v2599
      %4087 = vmatprep.mubr.bf16.mxu0 %v322
      %4088 = vmatmul.mubr.bf16.gmra.mxu0 %v321
      %v4089 = vpop.f32.mrf.mxu0
      %v4090 = vadd.f32 %v900, %v4089
      %v4091 = vpop.f32.mrf.mxu0
      %v4092 = vadd.f32 %v904, %v4091
      %v4093 = vpop.f32.mrf.mxu0
      %v4094 = vpop.f32.mrf.mxu0
      %4095 = vdwg.mxu0
      %4096 = vmatprep.subr.bf16.mxu0 %v2840
      %4097 = vmatpush1.bf16.msra.mxu0 %v2839
      %4098 = vmatprep.subr.bf16.mxu0 %v2824
      %4099 = vmatpush1.bf16.msra.mxu0 %v2823
      %4100 = vmatprep.subr.bf16.mxu0 %v2808
      %4101 = vmatpush1.bf16.msra.mxu0 %v2807
      %4102 = vmatprep.subr.bf16.mxu0 %v2792
      %4103 = vmatpush1.bf16.msra.mxu0 %v2791
      %4104 = vmatprep.subr.bf16.mxu0 %v2776
      %4105 = vmatpush1.bf16.msra.mxu0 %v2775
      %4106 = vmatprep.subr.bf16.mxu0 %v2760
      %4107 = vmatpush1.bf16.msra.mxu0 %v2759
      %4108 = vmatprep.subr.bf16.mxu0 %v2744
      %4109 = vmatpush1.bf16.msra.mxu0 %v2743
      %4110 = vmatprep.subr.bf16.mxu0 %v2728
      %4111 = vmatpush1.bf16.msra.mxu0 %v2727
      %4112 = vmatprep.subr.bf16.mxu0 %v2968
      %4113 = vmatpush2.bf16.msra.mxu0 %v2967
      %4114 = vmatprep.subr.bf16.mxu0 %v2952
      %4115 = vmatpush2.bf16.msra.mxu0 %v2951
      %4116 = vmatprep.subr.bf16.mxu0 %v2936
      %4117 = vmatpush2.bf16.msra.mxu0 %v2935
      %4118 = vmatprep.subr.bf16.mxu0 %v2920
      %4119 = vmatpush2.bf16.msra.mxu0 %v2919
      %4120 = vmatprep.subr.bf16.mxu0 %v2904
      %4121 = vmatpush2.bf16.msra.mxu0 %v2903
      %4122 = vmatprep.subr.bf16.mxu0 %v2888
      %4123 = vmatpush2.bf16.msra.mxu0 %v2887
      %4124 = vmatprep.subr.bf16.mxu0 %v2872
      %4125 = vmatpush2.bf16.msra.mxu0 %v2871
      %4126 = vmatprep.subr.bf16.mxu0 %v2856
      %4127 = vmatpush2.bf16.msra.mxu0 %v2855
      %4128 = vmatprep.mubr.bf16.mxu0 %v324
      %4129 = vmatmul.mubr.bf16.gmra.mxu0 %v323
      %v4130 = vpop.f32.mrf.mxu0
      %v4131 = vadd.f32 %v4090, %v4130
      %v4132 = vpop.f32.mrf.mxu0
      %v4133 = vadd.f32 %v4092, %v4132
      %v4134 = vpop.f32.mrf.mxu0
      %v4135 = vpop.f32.mrf.mxu0
      %4136 = vdwg.mxu0
      %vm4137 = vcmp.ge.f32.partialorder %v3557, 0.0
      %vm4138 = vcmp.ge.f32.partialorder %v3559, 0.0
      %vm4139 = vcmp.ge.f32.partialorder %v3639, 0.0
      %vm4140 = vcmp.ge.f32.partialorder %v3641, 0.0
      %vm4141 = vcmp.ge.f32.partialorder %v3721, 0.0
      %vm4142 = vcmp.ge.f32.partialorder %v3723, 0.0
      %vm4143 = vcmp.ge.f32.partialorder %v3803, 0.0
      %vm4144 = vcmp.ge.f32.partialorder %v3805, 0.0
      %vm4145 = vcmp.ge.f32.partialorder %v3885, 0.0
      %vm4146 = vcmp.ge.f32.partialorder %v3887, 0.0
      %vm4147 = vcmp.ge.f32.partialorder %v3967, 0.0
      %vm4148 = vcmp.ge.f32.partialorder %v3969, 0.0
      %vm4149 = vcmp.ge.f32.partialorder %v4049, 0.0
      %vm4150 = vcmp.ge.f32.partialorder %v4051, 0.0
      %vm4151 = vcmp.ge.f32.partialorder %v4131, 0.0
      %vm4152 = vcmp.ge.f32.partialorder %v4133, 0.0
      %v4153 = vmul.f32 %v3557, 0.2
      %v4154 = vmul.f32 %v3559, 0.2
      %v4155 = vmul.f32 %v3639, 0.2
      %v4156 = vmul.f32 %v3641, 0.2
      %v4157 = vmul.f32 %v3721, 0.2
      %v4158 = vmul.f32 %v3723, 0.2
      %v4159 = vmul.f32 %v3803, 0.2
      %v4160 = vmul.f32 %v3805, 0.2
      %v4161 = vmul.f32 %v3885, 0.2
      %v4162 = vmul.f32 %v3887, 0.2
      %v4163 = vmul.f32 %v3967, 0.2
      %v4164 = vmul.f32 %v3969, 0.2
      %v4165 = vmul.f32 %v4049, 0.2
      %v4166 = vmul.f32 %v4051, 0.2
      %v4167 = vmul.f32 %v4131, 0.2
      %v4168 = vmul.f32 %v4133, 0.2
      %v4169 = vsel %vm4137, %v3557, %v4153
      %v4170 = vsel %vm4138, %v3559, %v4154
      %v4171 = vsel %vm4139, %v3639, %v4155
      %v4172 = vsel %vm4140, %v3641, %v4156
      %v4173 = vsel %vm4141, %v3721, %v4157
      %v4174 = vsel %vm4142, %v3723, %v4158
      %v4175 = vsel %vm4143, %v3803, %v4159
      %v4176 = vsel %vm4144, %v3805, %v4160
      %v4177 = vsel %vm4145, %v3885, %v4161
      %v4178 = vsel %vm4146, %v3887, %v4162
      %v4179 = vsel %vm4147, %v3967, %v4163
      %v4180 = vsel %vm4148, %v3969, %v4164
      %v4181 = vsel %vm4149, %v4049, %v4165
      %v4182 = vsel %vm4150, %v4051, %v4166
      %v4183 = vsel %vm4151, %v4131, %v4167
      %v4184 = vsel %vm4152, %v4133, %v4168
      %v4185 = vpack.c.bf16 %v4169, %v4169
      %v4186 = vpack.c.bf16 %v4170, %v4170
      %v4187 = vpack.c.bf16 %v4171, %v4171
      %v4188 = vpack.c.bf16 %v4172, %v4172
      %v4189 = vpack.c.bf16 %v4173, %v4173
      %v4190 = vpack.c.bf16 %v4174, %v4174
      %v4191 = vpack.c.bf16 %v4175, %v4175
      %v4192 = vpack.c.bf16 %v4176, %v4176
      %v4193 = vld [vmem:[%s3] sm:$0xff]
      %v4194 = vld [vmem:[%s3 + $0x8] sm:$0xff]
      %v4195 = vld [vmem:[%s3 + $0x20] sm:$0xff]
      %v4196 = vld [vmem:[%s3 + $0x28] sm:$0xff]
      %v4197 = vld [vmem:[%s3 + $0x40] sm:$0xff]
      %v4198 = vld [vmem:[%s3 + $0x48] sm:$0xff]
      %v4199 = vld [vmem:[%s3 + $0x60] sm:$0xff]
      %v4200 = vld [vmem:[%s3 + $0x68] sm:$0xff]
      %v4201 = vld [vmem:[%s3 + $0x80] sm:$0xff]
      %v4202 = vld [vmem:[%s3 + $0x88] sm:$0xff]
      %v4203 = vld [vmem:[%s3 + $0xa0] sm:$0xff]
      %v4204 = vld [vmem:[%s3 + $0xa8] sm:$0xff]
      %v4205 = vld [vmem:[%s3 + $0xc0] sm:$0xff]
      %v4206 = vld [vmem:[%s3 + $0xc8] sm:$0xff]
      %v4207 = vld [vmem:[%s3 + $0xe0] sm:$0xff]
      %v4208 = vld [vmem:[%s3 + $0xe8] sm:$0xff]
      %v4209 = vld [vmem:[%s3 + $0x100] sm:$0xff]
      %v4210 = vld [vmem:[%s3 + $0x108] sm:$0xff]
      %v4211 = vld [vmem:[%s3 + $0x120] sm:$0xff]
      %v4212 = vld [vmem:[%s3 + $0x128] sm:$0xff]
      %v4213 = vld [vmem:[%s3 + $0x140] sm:$0xff]
      %v4214 = vld [vmem:[%s3 + $0x148] sm:$0xff]
      %v4215 = vld [vmem:[%s3 + $0x160] sm:$0xff]
      %v4216 = vld [vmem:[%s3 + $0x168] sm:$0xff]
      %v4217 = vld [vmem:[%s3 + $0x180] sm:$0xff]
      %v4218 = vld [vmem:[%s3 + $0x188] sm:$0xff]
      %v4219 = vld [vmem:[%s3 + $0x1a0] sm:$0xff]
      %v4220 = vld [vmem:[%s3 + $0x1a8] sm:$0xff]
      %v4221 = vld [vmem:[%s3 + $0x1c0] sm:$0xff]
      %v4222 = vld [vmem:[%s3 + $0x1c8] sm:$0xff]
      %v4223 = vld [vmem:[%s3 + $0x1e0] sm:$0xff]
      %v4224 = vld [vmem:[%s3 + $0x1e8] sm:$0xff]
      %v4225 = vld [vmem:[%s3 + $0x200] sm:$0xff]
      %v4226 = vld [vmem:[%s3 + $0x208] sm:$0xff]
      %v4227 = vld [vmem:[%s3 + $0x220] sm:$0xff]
      %v4228 = vld [vmem:[%s3 + $0x228] sm:$0xff]
      %v4229 = vld [vmem:[%s3 + $0x240] sm:$0xff]
      %v4230 = vld [vmem:[%s3 + $0x248] sm:$0xff]
      %v4231 = vld [vmem:[%s3 + $0x260] sm:$0xff]
      %v4232 = vld [vmem:[%s3 + $0x268] sm:$0xff]
      %v4233 = vld [vmem:[%s3 + $0x280] sm:$0xff]
      %v4234 = vld [vmem:[%s3 + $0x288] sm:$0xff]
      %v4235 = vld [vmem:[%s3 + $0x2a0] sm:$0xff]
      %v4236 = vld [vmem:[%s3 + $0x2a8] sm:$0xff]
      %v4237 = vld [vmem:[%s3 + $0x2c0] sm:$0xff]
      %v4238 = vld [vmem:[%s3 + $0x2c8] sm:$0xff]
      %v4239 = vld [vmem:[%s3 + $0x2e0] sm:$0xff]
      %v4240 = vld [vmem:[%s3 + $0x2e8] sm:$0xff]
      %v4241 = vld [vmem:[%s3 + $0x300] sm:$0xff]
      %v4242 = vld [vmem:[%s3 + $0x308] sm:$0xff]
      %v4243 = vld [vmem:[%s3 + $0x320] sm:$0xff]
      %v4244 = vld [vmem:[%s3 + $0x328] sm:$0xff]
      %v4245 = vld [vmem:[%s3 + $0x340] sm:$0xff]
      %v4246 = vld [vmem:[%s3 + $0x348] sm:$0xff]
      %v4247 = vld [vmem:[%s3 + $0x360] sm:$0xff]
      %v4248 = vld [vmem:[%s3 + $0x368] sm:$0xff]
      %v4249 = vld [vmem:[%s3 + $0x380] sm:$0xff]
      %v4250 = vld [vmem:[%s3 + $0x388] sm:$0xff]
      %v4251 = vld [vmem:[%s3 + $0x3a0] sm:$0xff]
      %v4252 = vld [vmem:[%s3 + $0x3a8] sm:$0xff]
      %v4253 = vld [vmem:[%s3 + $0x3c0] sm:$0xff]
      %v4254 = vld [vmem:[%s3 + $0x3c8] sm:$0xff]
      %v4255 = vld [vmem:[%s3 + $0x3e0] sm:$0xff]
      %v4256 = vld [vmem:[%s3 + $0x3e8] sm:$0xff]
      %v4257 = vld [vmem:[%s3 + $0x400] sm:$0xff]
      %v4258 = vld [vmem:[%s3 + $0x408] sm:$0xff]
      %v4259 = vld [vmem:[%s3 + $0x420] sm:$0xff]
      %v4260 = vld [vmem:[%s3 + $0x428] sm:$0xff]
      %v4261 = vld [vmem:[%s3 + $0x440] sm:$0xff]
      %v4262 = vld [vmem:[%s3 + $0x448] sm:$0xff]
      %v4263 = vld [vmem:[%s3 + $0x460] sm:$0xff]
      %v4264 = vld [vmem:[%s3 + $0x468] sm:$0xff]
      %v4265 = vld [vmem:[%s3 + $0x480] sm:$0xff]
      %v4266 = vld [vmem:[%s3 + $0x488] sm:$0xff]
      %v4267 = vld [vmem:[%s3 + $0x4a0] sm:$0xff]
      %v4268 = vld [vmem:[%s3 + $0x4a8] sm:$0xff]
      %v4269 = vld [vmem:[%s3 + $0x4c0] sm:$0xff]
      %v4270 = vld [vmem:[%s3 + $0x4c8] sm:$0xff]
      %v4271 = vld [vmem:[%s3 + $0x4e0] sm:$0xff]
      %v4272 = vld [vmem:[%s3 + $0x4e8] sm:$0xff]
      %v4273 = vld [vmem:[%s3 + $0x500] sm:$0xff]
      %v4274 = vld [vmem:[%s3 + $0x508] sm:$0xff]
      %v4275 = vld [vmem:[%s3 + $0x520] sm:$0xff]
      %v4276 = vld [vmem:[%s3 + $0x528] sm:$0xff]
      %v4277 = vld [vmem:[%s3 + $0x540] sm:$0xff]
      %v4278 = vld [vmem:[%s3 + $0x548] sm:$0xff]
      %v4279 = vld [vmem:[%s3 + $0x560] sm:$0xff]
      %v4280 = vld [vmem:[%s3 + $0x568] sm:$0xff]
      %v4281 = vld [vmem:[%s3 + $0x580] sm:$0xff]
      %v4282 = vld [vmem:[%s3 + $0x588] sm:$0xff]
      %v4283 = vld [vmem:[%s3 + $0x5a0] sm:$0xff]
      %v4284 = vld [vmem:[%s3 + $0x5a8] sm:$0xff]
      %v4285 = vld [vmem:[%s3 + $0x5c0] sm:$0xff]
      %v4286 = vld [vmem:[%s3 + $0x5c8] sm:$0xff]
      %v4287 = vld [vmem:[%s3 + $0x5e0] sm:$0xff]
      %v4288 = vld [vmem:[%s3 + $0x5e8] sm:$0xff]
      %v4289 = vld [vmem:[%s3 + $0x600] sm:$0xff]
      %v4290 = vld [vmem:[%s3 + $0x608] sm:$0xff]
      %v4291 = vld [vmem:[%s3 + $0x620] sm:$0xff]
      %v4292 = vld [vmem:[%s3 + $0x628] sm:$0xff]
      %v4293 = vld [vmem:[%s3 + $0x640] sm:$0xff]
      %v4294 = vld [vmem:[%s3 + $0x648] sm:$0xff]
      %v4295 = vld [vmem:[%s3 + $0x660] sm:$0xff]
      %v4296 = vld [vmem:[%s3 + $0x668] sm:$0xff]
      %v4297 = vld [vmem:[%s3 + $0x680] sm:$0xff]
      %v4298 = vld [vmem:[%s3 + $0x688] sm:$0xff]
      %v4299 = vld [vmem:[%s3 + $0x6a0] sm:$0xff]
      %v4300 = vld [vmem:[%s3 + $0x6a8] sm:$0xff]
      %v4301 = vld [vmem:[%s3 + $0x6c0] sm:$0xff]
      %v4302 = vld [vmem:[%s3 + $0x6c8] sm:$0xff]
      %v4303 = vld [vmem:[%s3 + $0x6e0] sm:$0xff]
      %v4304 = vld [vmem:[%s3 + $0x6e8] sm:$0xff]
      %v4305 = vld [vmem:[%s3 + $0x700] sm:$0xff]
      %v4306 = vld [vmem:[%s3 + $0x708] sm:$0xff]
      %v4307 = vld [vmem:[%s3 + $0x720] sm:$0xff]
      %v4308 = vld [vmem:[%s3 + $0x728] sm:$0xff]
      %v4309 = vld [vmem:[%s3 + $0x740] sm:$0xff]
      %v4310 = vld [vmem:[%s3 + $0x748] sm:$0xff]
      %v4311 = vld [vmem:[%s3 + $0x760] sm:$0xff]
      %v4312 = vld [vmem:[%s3 + $0x768] sm:$0xff]
      %v4313 = vld [vmem:[%s3 + $0x780] sm:$0xff]
      %v4314 = vld [vmem:[%s3 + $0x788] sm:$0xff]
      %v4315 = vld [vmem:[%s3 + $0x7a0] sm:$0xff]
      %v4316 = vld [vmem:[%s3 + $0x7a8] sm:$0xff]
      %v4317 = vld [vmem:[%s3 + $0x7c0] sm:$0xff]
      %v4318 = vld [vmem:[%s3 + $0x7c8] sm:$0xff]
      %v4319 = vld [vmem:[%s3 + $0x7e0] sm:$0xff]
      %v4320 = vld [vmem:[%s3 + $0x7e8] sm:$0xff]
      %v4449 = vunpack.c.l.b16 %v4193
      %v4450 = vunpack.c.h.b16 %v4193
      %v4451 = vunpack.c.l.b16 %v4194
      %v4452 = vunpack.c.h.b16 %v4194
      %v4453 = vunpack.c.l.b16 %v4195
      %v4454 = vunpack.c.h.b16 %v4195
      %v4455 = vunpack.c.l.b16 %v4196
      %v4456 = vunpack.c.h.b16 %v4196
      %v4457 = vunpack.c.l.b16 %v4197
      %v4458 = vunpack.c.h.b16 %v4197
      %v4459 = vunpack.c.l.b16 %v4198
      %v4460 = vunpack.c.h.b16 %v4198
      %v4461 = vunpack.c.l.b16 %v4199
      %v4462 = vunpack.c.h.b16 %v4199
      %v4463 = vunpack.c.l.b16 %v4200
      %v4464 = vunpack.c.h.b16 %v4200
      %v4465 = vunpack.c.l.b16 %v4201
      %v4466 = vunpack.c.h.b16 %v4201
      %v4467 = vunpack.c.l.b16 %v4202
      %v4468 = vunpack.c.h.b16 %v4202
      %v4469 = vunpack.c.l.b16 %v4203
      %v4470 = vunpack.c.h.b16 %v4203
      %v4471 = vunpack.c.l.b16 %v4204
      %v4472 = vunpack.c.h.b16 %v4204
      %v4473 = vunpack.c.l.b16 %v4205
      %v4474 = vunpack.c.h.b16 %v4205
      %v4475 = vunpack.c.l.b16 %v4206
      %v4476 = vunpack.c.h.b16 %v4206
      %v4477 = vunpack.c.l.b16 %v4207
      %v4478 = vunpack.c.h.b16 %v4207
      %v4479 = vunpack.c.l.b16 %v4208
      %v4480 = vunpack.c.h.b16 %v4208
      %v4481 = vunpack.c.l.b16 %v4209
      %v4482 = vunpack.c.h.b16 %v4209
      %v4483 = vunpack.c.l.b16 %v4210
      %v4484 = vunpack.c.h.b16 %v4210
      %v4485 = vunpack.c.l.b16 %v4211
      %v4486 = vunpack.c.h.b16 %v4211
      %v4487 = vunpack.c.l.b16 %v4212
      %v4488 = vunpack.c.h.b16 %v4212
      %v4489 = vunpack.c.l.b16 %v4213
      %v4490 = vunpack.c.h.b16 %v4213
      %v4491 = vunpack.c.l.b16 %v4214
      %v4492 = vunpack.c.h.b16 %v4214
      %v4493 = vunpack.c.l.b16 %v4215
      %v4494 = vunpack.c.h.b16 %v4215
      %v4495 = vunpack.c.l.b16 %v4216
      %v4496 = vunpack.c.h.b16 %v4216
      %v4497 = vunpack.c.l.b16 %v4217
      %v4498 = vunpack.c.h.b16 %v4217
      %v4499 = vunpack.c.l.b16 %v4218
      %v4500 = vunpack.c.h.b16 %v4218
      %v4501 = vunpack.c.l.b16 %v4219
      %v4502 = vunpack.c.h.b16 %v4219
      %v4503 = vunpack.c.l.b16 %v4220
      %v4504 = vunpack.c.h.b16 %v4220
      %v4505 = vunpack.c.l.b16 %v4221
      %v4506 = vunpack.c.h.b16 %v4221
      %v4507 = vunpack.c.l.b16 %v4222
      %v4508 = vunpack.c.h.b16 %v4222
      %v4509 = vunpack.c.l.b16 %v4223
      %v4510 = vunpack.c.h.b16 %v4223
      %v4511 = vunpack.c.l.b16 %v4224
      %v4512 = vunpack.c.h.b16 %v4224
      %v4513 = vunpack.c.l.b16 %v4225
      %v4514 = vunpack.c.h.b16 %v4225
      %v4515 = vunpack.c.l.b16 %v4226
      %v4516 = vunpack.c.h.b16 %v4226
      %v4517 = vunpack.c.l.b16 %v4227
      %v4518 = vunpack.c.h.b16 %v4227
      %v4519 = vunpack.c.l.b16 %v4228
      %v4520 = vunpack.c.h.b16 %v4228
      %v4521 = vunpack.c.l.b16 %v4229
      %v4522 = vunpack.c.h.b16 %v4229
      %v4523 = vunpack.c.l.b16 %v4230
      %v4524 = vunpack.c.h.b16 %v4230
      %v4525 = vunpack.c.l.b16 %v4231
      %v4526 = vunpack.c.h.b16 %v4231
      %v4527 = vunpack.c.l.b16 %v4232
      %v4528 = vunpack.c.h.b16 %v4232
      %v4529 = vunpack.c.l.b16 %v4233
      %v4530 = vunpack.c.h.b16 %v4233
      %v4531 = vunpack.c.l.b16 %v4234
      %v4532 = vunpack.c.h.b16 %v4234
      %v4533 = vunpack.c.l.b16 %v4235
      %v4534 = vunpack.c.h.b16 %v4235
      %v4535 = vunpack.c.l.b16 %v4236
      %v4536 = vunpack.c.h.b16 %v4236
      %v4537 = vunpack.c.l.b16 %v4237
      %v4538 = vunpack.c.h.b16 %v4237
      %v4539 = vunpack.c.l.b16 %v4238
      %v4540 = vunpack.c.h.b16 %v4238
      %v4541 = vunpack.c.l.b16 %v4239
      %v4542 = vunpack.c.h.b16 %v4239
      %v4543 = vunpack.c.l.b16 %v4240
      %v4544 = vunpack.c.h.b16 %v4240
      %v4545 = vunpack.c.l.b16 %v4241
      %v4546 = vunpack.c.h.b16 %v4241
      %v4547 = vunpack.c.l.b16 %v4242
      %v4548 = vunpack.c.h.b16 %v4242
      %v4549 = vunpack.c.l.b16 %v4243
      %v4550 = vunpack.c.h.b16 %v4243
      %v4551 = vunpack.c.l.b16 %v4244
      %v4552 = vunpack.c.h.b16 %v4244
      %v4553 = vunpack.c.l.b16 %v4245
      %v4554 = vunpack.c.h.b16 %v4245
      %v4555 = vunpack.c.l.b16 %v4246
      %v4556 = vunpack.c.h.b16 %v4246
      %v4557 = vunpack.c.l.b16 %v4247
      %v4558 = vunpack.c.h.b16 %v4247
      %v4559 = vunpack.c.l.b16 %v4248
      %v4560 = vunpack.c.h.b16 %v4248
      %v4561 = vunpack.c.l.b16 %v4249
      %v4562 = vunpack.c.h.b16 %v4249
      %v4563 = vunpack.c.l.b16 %v4250
      %v4564 = vunpack.c.h.b16 %v4250
      %v4565 = vunpack.c.l.b16 %v4251
      %v4566 = vunpack.c.h.b16 %v4251
      %v4567 = vunpack.c.l.b16 %v4252
      %v4568 = vunpack.c.h.b16 %v4252
      %v4569 = vunpack.c.l.b16 %v4253
      %v4570 = vunpack.c.h.b16 %v4253
      %v4571 = vunpack.c.l.b16 %v4254
      %v4572 = vunpack.c.h.b16 %v4254
      %v4573 = vunpack.c.l.b16 %v4255
      %v4574 = vunpack.c.h.b16 %v4255
      %v4575 = vunpack.c.l.b16 %v4256
      %v4576 = vunpack.c.h.b16 %v4256
      %v4577 = vunpack.c.l.b16 %v4257
      %v4578 = vunpack.c.h.b16 %v4257
      %v4579 = vunpack.c.l.b16 %v4258
      %v4580 = vunpack.c.h.b16 %v4258
      %v4581 = vunpack.c.l.b16 %v4259
      %v4582 = vunpack.c.h.b16 %v4259
      %v4583 = vunpack.c.l.b16 %v4260
      %v4584 = vunpack.c.h.b16 %v4260
      %v4585 = vunpack.c.l.b16 %v4261
      %v4586 = vunpack.c.h.b16 %v4261
      %v4587 = vunpack.c.l.b16 %v4262
      %v4588 = vunpack.c.h.b16 %v4262
      %v4589 = vunpack.c.l.b16 %v4263
      %v4590 = vunpack.c.h.b16 %v4263
      %v4591 = vunpack.c.l.b16 %v4264
      %v4592 = vunpack.c.h.b16 %v4264
      %v4593 = vunpack.c.l.b16 %v4265
      %v4594 = vunpack.c.h.b16 %v4265
      %v4595 = vunpack.c.l.b16 %v4266
      %v4596 = vunpack.c.h.b16 %v4266
      %v4597 = vunpack.c.l.b16 %v4267
      %v4598 = vunpack.c.h.b16 %v4267
      %v4599 = vunpack.c.l.b16 %v4268
      %v4600 = vunpack.c.h.b16 %v4268
      %v4601 = vunpack.c.l.b16 %v4269
      %v4602 = vunpack.c.h.b16 %v4269
      %v4603 = vunpack.c.l.b16 %v4270
      %v4604 = vunpack.c.h.b16 %v4270
      %v4605 = vunpack.c.l.b16 %v4271
      %v4606 = vunpack.c.h.b16 %v4271
      %v4607 = vunpack.c.l.b16 %v4272
      %v4608 = vunpack.c.h.b16 %v4272
      %v4609 = vunpack.c.l.b16 %v4273
      %v4610 = vunpack.c.h.b16 %v4273
      %v4611 = vunpack.c.l.b16 %v4274
      %v4612 = vunpack.c.h.b16 %v4274
      %v4613 = vunpack.c.l.b16 %v4275
      %v4614 = vunpack.c.h.b16 %v4275
      %v4615 = vunpack.c.l.b16 %v4276
      %v4616 = vunpack.c.h.b16 %v4276
      %v4617 = vunpack.c.l.b16 %v4277
      %v4618 = vunpack.c.h.b16 %v4277
      %v4619 = vunpack.c.l.b16 %v4278
      %v4620 = vunpack.c.h.b16 %v4278
      %v4621 = vunpack.c.l.b16 %v4279
      %v4622 = vunpack.c.h.b16 %v4279
      %v4623 = vunpack.c.l.b16 %v4280
      %v4624 = vunpack.c.h.b16 %v4280
      %v4625 = vunpack.c.l.b16 %v4281
      %v4626 = vunpack.c.h.b16 %v4281
      %v4627 = vunpack.c.l.b16 %v4282
      %v4628 = vunpack.c.h.b16 %v4282
      %v4629 = vunpack.c.l.b16 %v4283
      %v4630 = vunpack.c.h.b16 %v4283
      %v4631 = vunpack.c.l.b16 %v4284
      %v4632 = vunpack.c.h.b16 %v4284
      %v4633 = vunpack.c.l.b16 %v4285
      %v4634 = vunpack.c.h.b16 %v4285
      %v4635 = vunpack.c.l.b16 %v4286
      %v4636 = vunpack.c.h.b16 %v4286
      %v4637 = vunpack.c.l.b16 %v4287
      %v4638 = vunpack.c.h.b16 %v4287
      %v4639 = vunpack.c.l.b16 %v4288
      %v4640 = vunpack.c.h.b16 %v4288
      %v4641 = vunpack.c.l.b16 %v4289
      %v4642 = vunpack.c.h.b16 %v4289
      %v4643 = vunpack.c.l.b16 %v4290
      %v4644 = vunpack.c.h.b16 %v4290
      %v4645 = vunpack.c.l.b16 %v4291
      %v4646 = vunpack.c.h.b16 %v4291
      %v4647 = vunpack.c.l.b16 %v4292
      %v4648 = vunpack.c.h.b16 %v4292
      %v4649 = vunpack.c.l.b16 %v4293
      %v4650 = vunpack.c.h.b16 %v4293
      %v4651 = vunpack.c.l.b16 %v4294
      %v4652 = vunpack.c.h.b16 %v4294
      %v4653 = vunpack.c.l.b16 %v4295
      %v4654 = vunpack.c.h.b16 %v4295
      %v4655 = vunpack.c.l.b16 %v4296
      %v4656 = vunpack.c.h.b16 %v4296
      %v4657 = vunpack.c.l.b16 %v4297
      %v4658 = vunpack.c.h.b16 %v4297
      %v4659 = vunpack.c.l.b16 %v4298
      %v4660 = vunpack.c.h.b16 %v4298
      %v4661 = vunpack.c.l.b16 %v4299
      %v4662 = vunpack.c.h.b16 %v4299
      %v4663 = vunpack.c.l.b16 %v4300
      %v4664 = vunpack.c.h.b16 %v4300
      %v4665 = vunpack.c.l.b16 %v4301
      %v4666 = vunpack.c.h.b16 %v4301
      %v4667 = vunpack.c.l.b16 %v4302
      %v4668 = vunpack.c.h.b16 %v4302
      %v4669 = vunpack.c.l.b16 %v4303
      %v4670 = vunpack.c.h.b16 %v4303
      %v4671 = vunpack.c.l.b16 %v4304
      %v4672 = vunpack.c.h.b16 %v4304
      %v4673 = vunpack.c.l.b16 %v4305
      %v4674 = vunpack.c.h.b16 %v4305
      %v4675 = vunpack.c.l.b16 %v4306
      %v4676 = vunpack.c.h.b16 %v4306
      %v4677 = vunpack.c.l.b16 %v4307
      %v4678 = vunpack.c.h.b16 %v4307
      %v4679 = vunpack.c.l.b16 %v4308
      %v4680 = vunpack.c.h.b16 %v4308
      %v4681 = vunpack.c.l.b16 %v4309
      %v4682 = vunpack.c.h.b16 %v4309
      %v4683 = vunpack.c.l.b16 %v4310
      %v4684 = vunpack.c.h.b16 %v4310
      %v4685 = vunpack.c.l.b16 %v4311
      %v4686 = vunpack.c.h.b16 %v4311
      %v4687 = vunpack.c.l.b16 %v4312
      %v4688 = vunpack.c.h.b16 %v4312
      %v4689 = vunpack.c.l.b16 %v4313
      %v4690 = vunpack.c.h.b16 %v4313
      %v4691 = vunpack.c.l.b16 %v4314
      %v4692 = vunpack.c.h.b16 %v4314
      %v4693 = vunpack.c.l.b16 %v4315
      %v4694 = vunpack.c.h.b16 %v4315
      %v4695 = vunpack.c.l.b16 %v4316
      %v4696 = vunpack.c.h.b16 %v4316
      %v4697 = vunpack.c.l.b16 %v4317
      %v4698 = vunpack.c.h.b16 %v4317
      %v4699 = vunpack.c.l.b16 %v4318
      %v4700 = vunpack.c.h.b16 %v4318
      %v4701 = vunpack.c.l.b16 %v4319
      %v4702 = vunpack.c.h.b16 %v4319
      %v4703 = vunpack.c.l.b16 %v4320
      %v4704 = vunpack.c.h.b16 %v4320
      %v4705 = vpack.c.b16 %v4453, %v4449
      %v4706 = vpack.c.b16 %v4454, %v4450
      %v4707 = vpack.c.b16 %v4455, %v4451
      %v4708 = vpack.c.b16 %v4456, %v4452
      %v4709 = vpack.c.b16 %v4461, %v4457
      %v4710 = vpack.c.b16 %v4462, %v4458
      %v4711 = vpack.c.b16 %v4463, %v4459
      %v4712 = vpack.c.b16 %v4464, %v4460
      %v4713 = vpack.c.b16 %v4469, %v4465
      %v4714 = vpack.c.b16 %v4470, %v4466
      %v4715 = vpack.c.b16 %v4471, %v4467
      %v4716 = vpack.c.b16 %v4472, %v4468
      %v4717 = vpack.c.b16 %v4477, %v4473
      %v4718 = vpack.c.b16 %v4478, %v4474
      %v4719 = vpack.c.b16 %v4479, %v4475
      %v4720 = vpack.c.b16 %v4480, %v4476
      %v4721 = vpack.c.b16 %v4485, %v4481
      %v4722 = vpack.c.b16 %v4486, %v4482
      %v4723 = vpack.c.b16 %v4487, %v4483
      %v4724 = vpack.c.b16 %v4488, %v4484
      %v4725 = vpack.c.b16 %v4493, %v4489
      %v4726 = vpack.c.b16 %v4494, %v4490
      %v4727 = vpack.c.b16 %v4495, %v4491
      %v4728 = vpack.c.b16 %v4496, %v4492
      %v4729 = vpack.c.b16 %v4501, %v4497
      %v4730 = vpack.c.b16 %v4502, %v4498
      %v4731 = vpack.c.b16 %v4503, %v4499
      %v4732 = vpack.c.b16 %v4504, %v4500
      %v4733 = vpack.c.b16 %v4509, %v4505
      %v4734 = vpack.c.b16 %v4510, %v4506
      %v4735 = vpack.c.b16 %v4511, %v4507
      %v4736 = vpack.c.b16 %v4512, %v4508
      %v4737 = vpack.c.b16 %v4517, %v4513
      %v4738 = vpack.c.b16 %v4518, %v4514
      %v4739 = vpack.c.b16 %v4519, %v4515
      %v4740 = vpack.c.b16 %v4520, %v4516
      %v4741 = vpack.c.b16 %v4525, %v4521
      %v4742 = vpack.c.b16 %v4526, %v4522
      %v4743 = vpack.c.b16 %v4527, %v4523
      %v4744 = vpack.c.b16 %v4528, %v4524
      %v4745 = vpack.c.b16 %v4533, %v4529
      %v4746 = vpack.c.b16 %v4534, %v4530
      %v4747 = vpack.c.b16 %v4535, %v4531
      %v4748 = vpack.c.b16 %v4536, %v4532
      %v4749 = vpack.c.b16 %v4541, %v4537
      %v4750 = vpack.c.b16 %v4542, %v4538
      %v4751 = vpack.c.b16 %v4543, %v4539
      %v4752 = vpack.c.b16 %v4544, %v4540
      %v4753 = vpack.c.b16 %v4549, %v4545
      %v4754 = vpack.c.b16 %v4550, %v4546
      %v4755 = vpack.c.b16 %v4551, %v4547
      %v4756 = vpack.c.b16 %v4552, %v4548
      %v4757 = vpack.c.b16 %v4557, %v4553
      %v4758 = vpack.c.b16 %v4558, %v4554
      %v4759 = vpack.c.b16 %v4559, %v4555
      %v4760 = vpack.c.b16 %v4560, %v4556
      %v4761 = vpack.c.b16 %v4565, %v4561
      %v4762 = vpack.c.b16 %v4566, %v4562
      %v4763 = vpack.c.b16 %v4567, %v4563
      %v4764 = vpack.c.b16 %v4568, %v4564
      %v4765 = vpack.c.b16 %v4573, %v4569
      %v4766 = vpack.c.b16 %v4574, %v4570
      %v4767 = vpack.c.b16 %v4575, %v4571
      %v4768 = vpack.c.b16 %v4576, %v4572
      %v4769 = vpack.c.b16 %v4581, %v4577
      %v4770 = vpack.c.b16 %v4582, %v4578
      %v4771 = vpack.c.b16 %v4583, %v4579
      %v4772 = vpack.c.b16 %v4584, %v4580
      %v4773 = vpack.c.b16 %v4589, %v4585
      %v4774 = vpack.c.b16 %v4590, %v4586
      %v4775 = vpack.c.b16 %v4591, %v4587
      %v4776 = vpack.c.b16 %v4592, %v4588
      %v4777 = vpack.c.b16 %v4597, %v4593
      %v4778 = vpack.c.b16 %v4598, %v4594
      %v4779 = vpack.c.b16 %v4599, %v4595
      %v4780 = vpack.c.b16 %v4600, %v4596
      %v4781 = vpack.c.b16 %v4605, %v4601
      %v4782 = vpack.c.b16 %v4606, %v4602
      %v4783 = vpack.c.b16 %v4607, %v4603
      %v4784 = vpack.c.b16 %v4608, %v4604
      %v4785 = vpack.c.b16 %v4613, %v4609
      %v4786 = vpack.c.b16 %v4614, %v4610
      %v4787 = vpack.c.b16 %v4615, %v4611
      %v4788 = vpack.c.b16 %v4616, %v4612
      %v4789 = vpack.c.b16 %v4621, %v4617
      %v4790 = vpack.c.b16 %v4622, %v4618
      %v4791 = vpack.c.b16 %v4623, %v4619
      %v4792 = vpack.c.b16 %v4624, %v4620
      %v4793 = vpack.c.b16 %v4629, %v4625
      %v4794 = vpack.c.b16 %v4630, %v4626
      %v4795 = vpack.c.b16 %v4631, %v4627
      %v4796 = vpack.c.b16 %v4632, %v4628
      %v4797 = vpack.c.b16 %v4637, %v4633
      %v4798 = vpack.c.b16 %v4638, %v4634
      %v4799 = vpack.c.b16 %v4639, %v4635
      %v4800 = vpack.c.b16 %v4640, %v4636
      %v4801 = vpack.c.b16 %v4645, %v4641
      %v4802 = vpack.c.b16 %v4646, %v4642
      %v4803 = vpack.c.b16 %v4647, %v4643
      %v4804 = vpack.c.b16 %v4648, %v4644
      %v4805 = vpack.c.b16 %v4653, %v4649
      %v4806 = vpack.c.b16 %v4654, %v4650
      %v4807 = vpack.c.b16 %v4655, %v4651
      %v4808 = vpack.c.b16 %v4656, %v4652
      %v4809 = vpack.c.b16 %v4661, %v4657
      %v4810 = vpack.c.b16 %v4662, %v4658
      %v4811 = vpack.c.b16 %v4663, %v4659
      %v4812 = vpack.c.b16 %v4664, %v4660
      %v4813 = vpack.c.b16 %v4669, %v4665
      %v4814 = vpack.c.b16 %v4670, %v4666
      %v4815 = vpack.c.b16 %v4671, %v4667
      %v4816 = vpack.c.b16 %v4672, %v4668
      %v4817 = vpack.c.b16 %v4677, %v4673
      %v4818 = vpack.c.b16 %v4678, %v4674
      %v4819 = vpack.c.b16 %v4679, %v4675
      %v4820 = vpack.c.b16 %v4680, %v4676
      %v4821 = vpack.c.b16 %v4685, %v4681
      %v4822 = vpack.c.b16 %v4686, %v4682
      %v4823 = vpack.c.b16 %v4687, %v4683
      %v4824 = vpack.c.b16 %v4688, %v4684
      %v4825 = vpack.c.b16 %v4693, %v4689
      %v4826 = vpack.c.b16 %v4694, %v4690
      %v4827 = vpack.c.b16 %v4695, %v4691
      %v4828 = vpack.c.b16 %v4696, %v4692
      %v4829 = vpack.c.b16 %v4701, %v4697
      %v4830 = vpack.c.b16 %v4702, %v4698
      %v4831 = vpack.c.b16 %v4703, %v4699
      %v4832 = vpack.c.b16 %v4704, %v4700
      %4961 = vmatprep.subr.bf16.mxu0 %v4734
      %4962 = vmatpush1.bf16.msra.mxu0 %v4733
      %4963 = vmatprep.subr.bf16.mxu0 %v4730
      %4964 = vmatpush1.bf16.msra.mxu0 %v4729
      %4965 = vmatprep.subr.bf16.mxu0 %v4726
      %4966 = vmatpush1.bf16.msra.mxu0 %v4725
      %4967 = vmatprep.subr.bf16.mxu0 %v4722
      %4968 = vmatpush1.bf16.msra.mxu0 %v4721
      %4969 = vmatprep.subr.bf16.mxu0 %v4718
      %4970 = vmatpush1.bf16.msra.mxu0 %v4717
      %4971 = vmatprep.subr.bf16.mxu0 %v4714
      %4972 = vmatpush1.bf16.msra.mxu0 %v4713
      %4973 = vmatprep.subr.bf16.mxu0 %v4710
      %4974 = vmatpush1.bf16.msra.mxu0 %v4709
      %4975 = vmatprep.subr.bf16.mxu0 %v4706
      %4976 = vmatpush1.bf16.msra.mxu0 %v4705
      %4977 = vmatprep.subr.bf16.mxu0 %v4766
      %4978 = vmatpush2.bf16.msra.mxu0 %v4765
      %4979 = vmatprep.subr.bf16.mxu0 %v4762
      %4980 = vmatpush2.bf16.msra.mxu0 %v4761
      %4981 = vmatprep.subr.bf16.mxu0 %v4758
      %4982 = vmatpush2.bf16.msra.mxu0 %v4757
      %4983 = vmatprep.subr.bf16.mxu0 %v4754
      %4984 = vmatpush2.bf16.msra.mxu0 %v4753
      %4985 = vmatprep.subr.bf16.mxu0 %v4750
      %4986 = vmatpush2.bf16.msra.mxu0 %v4749
      %4987 = vmatprep.subr.bf16.mxu0 %v4746
      %4988 = vmatpush2.bf16.msra.mxu0 %v4745
      %4989 = vmatprep.subr.bf16.mxu0 %v4742
      %4990 = vmatpush2.bf16.msra.mxu0 %v4741
      %4991 = vmatprep.subr.bf16.mxu0 %v4738
      %4992 = vmatpush2.bf16.msra.mxu0 %v4737
      %4993 = vmatprep.mubr.bf16.mxu0 %v4186
      %4994 = vmatmul.mubr.bf16.gmra.mxu0 %v4185
      %v4995 = vpop.f32.mrf.mxu0
      %v4996 = vadd.f32 0.0, %v4995
      %v4997 = vpop.f32.mrf.mxu0
      %v4998 = vadd.f32 0.0, %v4997
      %v4999 = vpop.f32.mrf.mxu0
      %v5000 = vpop.f32.mrf.mxu0
      %5001 = vdwg.mxu0
      %5002 = vmatprep.subr.bf16.mxu0 %v4798
      %5003 = vmatpush1.bf16.msra.mxu0 %v4797
      %5004 = vmatprep.subr.bf16.mxu0 %v4794
      %5005 = vmatpush1.bf16.msra.mxu0 %v4793
      %5006 = vmatprep.subr.bf16.mxu0 %v4790
      %5007 = vmatpush1.bf16.msra.mxu0 %v4789
      %5008 = vmatprep.subr.bf16.mxu0 %v4786
      %5009 = vmatpush1.bf16.msra.mxu0 %v4785
      %5010 = vmatprep.subr.bf16.mxu0 %v4782
      %5011 = vmatpush1.bf16.msra.mxu0 %v4781
      %5012 = vmatprep.subr.bf16.mxu0 %v4778
      %5013 = vmatpush1.bf16.msra.mxu0 %v4777
      %5014 = vmatprep.subr.bf16.mxu0 %v4774
      %5015 = vmatpush1.bf16.msra.mxu0 %v4773
      %5016 = vmatprep.subr.bf16.mxu0 %v4770
      %5017 = vmatpush1.bf16.msra.mxu0 %v4769
      %5018 = vmatprep.subr.bf16.mxu0 %v4830
      %5019 = vmatpush2.bf16.msra.mxu0 %v4829
      %5020 = vmatprep.subr.bf16.mxu0 %v4826
      %5021 = vmatpush2.bf16.msra.mxu0 %v4825
      %5022 = vmatprep.subr.bf16.mxu0 %v4822
      %5023 = vmatpush2.bf16.msra.mxu0 %v4821
      %5024 = vmatprep.subr.bf16.mxu0 %v4818
      %5025 = vmatpush2.bf16.msra.mxu0 %v4817
      %5026 = vmatprep.subr.bf16.mxu0 %v4814
      %5027 = vmatpush2.bf16.msra.mxu0 %v4813
      %5028 = vmatprep.subr.bf16.mxu0 %v4810
      %5029 = vmatpush2.bf16.msra.mxu0 %v4809
      %5030 = vmatprep.subr.bf16.mxu0 %v4806
      %5031 = vmatpush2.bf16.msra.mxu0 %v4805
      %5032 = vmatprep.subr.bf16.mxu0 %v4802
      %5033 = vmatpush2.bf16.msra.mxu0 %v4801
      %5034 = vmatprep.mubr.bf16.mxu0 %v4188
      %5035 = vmatmul.mubr.bf16.gmra.mxu0 %v4187
      %v5036 = vpop.f32.mrf.mxu0
      %v5037 = vadd.f32 %v4996, %v5036
      %v5038 = vpop.f32.mrf.mxu0
      %v5039 = vadd.f32 %v4998, %v5038
      %v5040 = vpop.f32.mrf.mxu0
      %v5041 = vpop.f32.mrf.mxu0
      %5042 = vdwg.mxu0
      %5043 = vmatprep.subr.bf16.mxu0 %v4736
      %5044 = vmatpush1.bf16.msra.mxu0 %v4735
      %5045 = vmatprep.subr.bf16.mxu0 %v4732
      %5046 = vmatpush1.bf16.msra.mxu0 %v4731
      %5047 = vmatprep.subr.bf16.mxu0 %v4728
      %5048 = vmatpush1.bf16.msra.mxu0 %v4727
      %5049 = vmatprep.subr.bf16.mxu0 %v4724
      %5050 = vmatpush1.bf16.msra.mxu0 %v4723
      %5051 = vmatprep.subr.bf16.mxu0 %v4720
      %5052 = vmatpush1.bf16.msra.mxu0 %v4719
      %5053 = vmatprep.subr.bf16.mxu0 %v4716
      %5054 = vmatpush1.bf16.msra.mxu0 %v4715
      %5055 = vmatprep.subr.bf16.mxu0 %v4712
      %5056 = vmatpush1.bf16.msra.mxu0 %v4711
      %5057 = vmatprep.subr.bf16.mxu0 %v4708
      %5058 = vmatpush1.bf16.msra.mxu0 %v4707
      %5059 = vmatprep.subr.bf16.mxu0 %v4768
      %5060 = vmatpush2.bf16.msra.mxu0 %v4767
      %5061 = vmatprep.subr.bf16.mxu0 %v4764
      %5062 = vmatpush2.bf16.msra.mxu0 %v4763
      %5063 = vmatprep.subr.bf16.mxu0 %v4760
      %5064 = vmatpush2.bf16.msra.mxu0 %v4759
      %5065 = vmatprep.subr.bf16.mxu0 %v4756
      %5066 = vmatpush2.bf16.msra.mxu0 %v4755
      %5067 = vmatprep.subr.bf16.mxu0 %v4752
      %5068 = vmatpush2.bf16.msra.mxu0 %v4751
      %5069 = vmatprep.subr.bf16.mxu0 %v4748
      %5070 = vmatpush2.bf16.msra.mxu0 %v4747
      %5071 = vmatprep.subr.bf16.mxu0 %v4744
      %5072 = vmatpush2.bf16.msra.mxu0 %v4743
      %5073 = vmatprep.subr.bf16.mxu0 %v4740
      %5074 = vmatpush2.bf16.msra.mxu0 %v4739
      %5075 = vmatprep.mubr.bf16.mxu0 %v4186
      %5076 = vmatmul.mubr.bf16.gmra.mxu0 %v4185
      %v5077 = vpop.f32.mrf.mxu0
      %v5078 = vadd.f32 0.0, %v5077
      %v5079 = vpop.f32.mrf.mxu0
      %v5080 = vadd.f32 0.0, %v5079
      %v5081 = vpop.f32.mrf.mxu0
      %v5082 = vpop.f32.mrf.mxu0
      %5083 = vdwg.mxu0
      %5084 = vmatprep.subr.bf16.mxu0 %v4800
      %5085 = vmatpush1.bf16.msra.mxu0 %v4799
      %5086 = vmatprep.subr.bf16.mxu0 %v4796
      %5087 = vmatpush1.bf16.msra.mxu0 %v4795
      %5088 = vmatprep.subr.bf16.mxu0 %v4792
      %5089 = vmatpush1.bf16.msra.mxu0 %v4791
      %5090 = vmatprep.subr.bf16.mxu0 %v4788
      %5091 = vmatpush1.bf16.msra.mxu0 %v4787
      %5092 = vmatprep.subr.bf16.mxu0 %v4784
      %5093 = vmatpush1.bf16.msra.mxu0 %v4783
      %5094 = vmatprep.subr.bf16.mxu0 %v4780
      %5095 = vmatpush1.bf16.msra.mxu0 %v4779
      %5096 = vmatprep.subr.bf16.mxu0 %v4776
      %5097 = vmatpush1.bf16.msra.mxu0 %v4775
      %5098 = vmatprep.subr.bf16.mxu0 %v4772
      %5099 = vmatpush1.bf16.msra.mxu0 %v4771
      %5100 = vmatprep.subr.bf16.mxu0 %v4832
      %5101 = vmatpush2.bf16.msra.mxu0 %v4831
      %5102 = vmatprep.subr.bf16.mxu0 %v4828
      %5103 = vmatpush2.bf16.msra.mxu0 %v4827
      %5104 = vmatprep.subr.bf16.mxu0 %v4824
      %5105 = vmatpush2.bf16.msra.mxu0 %v4823
      %5106 = vmatprep.subr.bf16.mxu0 %v4820
      %5107 = vmatpush2.bf16.msra.mxu0 %v4819
      %5108 = vmatprep.subr.bf16.mxu0 %v4816
      %5109 = vmatpush2.bf16.msra.mxu0 %v4815
      %5110 = vmatprep.subr.bf16.mxu0 %v4812
      %5111 = vmatpush2.bf16.msra.mxu0 %v4811
      %5112 = vmatprep.subr.bf16.mxu0 %v4808
      %5113 = vmatpush2.bf16.msra.mxu0 %v4807
      %5114 = vmatprep.subr.bf16.mxu0 %v4804
      %5115 = vmatpush2.bf16.msra.mxu0 %v4803
      %5116 = vmatprep.mubr.bf16.mxu0 %v4188
      %5117 = vmatmul.mubr.bf16.gmra.mxu0 %v4187
      %v5118 = vpop.f32.mrf.mxu0
      %v5119 = vadd.f32 %v5078, %v5118
      %v5120 = vpop.f32.mrf.mxu0
      %v5121 = vadd.f32 %v5080, %v5120
      %v5122 = vpop.f32.mrf.mxu0
      %v5123 = vpop.f32.mrf.mxu0
      %5124 = vdwg.mxu0
      %v5125 = vld [vmem:[%s3 + $0x10] sm:$0xff]
      %v5126 = vld [vmem:[%s3 + $0x18] sm:$0xff]
      %v5127 = vld [vmem:[%s3 + $0x30] sm:$0xff]
      %v5128 = vld [vmem:[%s3 + $0x38] sm:$0xff]
      %v5129 = vld [vmem:[%s3 + $0x50] sm:$0xff]
      %v5130 = vld [vmem:[%s3 + $0x58] sm:$0xff]
      %v5131 = vld [vmem:[%s3 + $0x70] sm:$0xff]
      %v5132 = vld [vmem:[%s3 + $0x78] sm:$0xff]
      %v5133 = vld [vmem:[%s3 + $0x90] sm:$0xff]
      %v5134 = vld [vmem:[%s3 + $0x98] sm:$0xff]
      %v5135 = vld [vmem:[%s3 + $0xb0] sm:$0xff]
      %v5136 = vld [vmem:[%s3 + $0xb8] sm:$0xff]
      %v5137 = vld [vmem:[%s3 + $0xd0] sm:$0xff]
      %v5138 = vld [vmem:[%s3 + $0xd8] sm:$0xff]
      %v5139 = vld [vmem:[%s3 + $0xf0] sm:$0xff]
      %v5140 = vld [vmem:[%s3 + $0xf8] sm:$0xff]
      %v5141 = vld [vmem:[%s3 + $0x110] sm:$0xff]
      %v5142 = vld [vmem:[%s3 + $0x118] sm:$0xff]
      %v5143 = vld [vmem:[%s3 + $0x130] sm:$0xff]
      %v5144 = vld [vmem:[%s3 + $0x138] sm:$0xff]
      %v5145 = vld [vmem:[%s3 + $0x150] sm:$0xff]
      %v5146 = vld [vmem:[%s3 + $0x158] sm:$0xff]
      %v5147 = vld [vmem:[%s3 + $0x170] sm:$0xff]
      %v5148 = vld [vmem:[%s3 + $0x178] sm:$0xff]
      %v5149 = vld [vmem:[%s3 + $0x190] sm:$0xff]
      %v5150 = vld [vmem:[%s3 + $0x198] sm:$0xff]
      %v5151 = vld [vmem:[%s3 + $0x1b0] sm:$0xff]
      %v5152 = vld [vmem:[%s3 + $0x1b8] sm:$0xff]
      %v5153 = vld [vmem:[%s3 + $0x1d0] sm:$0xff]
      %v5154 = vld [vmem:[%s3 + $0x1d8] sm:$0xff]
      %v5155 = vld [vmem:[%s3 + $0x1f0] sm:$0xff]
      %v5156 = vld [vmem:[%s3 + $0x1f8] sm:$0xff]
      %v5157 = vld [vmem:[%s3 + $0x210] sm:$0xff]
      %v5158 = vld [vmem:[%s3 + $0x218] sm:$0xff]
      %v5159 = vld [vmem:[%s3 + $0x230] sm:$0xff]
      %v5160 = vld [vmem:[%s3 + $0x238] sm:$0xff]
      %v5161 = vld [vmem:[%s3 + $0x250] sm:$0xff]
      %v5162 = vld [vmem:[%s3 + $0x258] sm:$0xff]
      %v5163 = vld [vmem:[%s3 + $0x270] sm:$0xff]
      %v5164 = vld [vmem:[%s3 + $0x278] sm:$0xff]
      %v5165 = vld [vmem:[%s3 + $0x290] sm:$0xff]
      %v5166 = vld [vmem:[%s3 + $0x298] sm:$0xff]
      %v5167 = vld [vmem:[%s3 + $0x2b0] sm:$0xff]
      %v5168 = vld [vmem:[%s3 + $0x2b8] sm:$0xff]
      %v5169 = vld [vmem:[%s3 + $0x2d0] sm:$0xff]
      %v5170 = vld [vmem:[%s3 + $0x2d8] sm:$0xff]
      %v5171 = vld [vmem:[%s3 + $0x2f0] sm:$0xff]
      %v5172 = vld [vmem:[%s3 + $0x2f8] sm:$0xff]
      %v5173 = vld [vmem:[%s3 + $0x310] sm:$0xff]
      %v5174 = vld [vmem:[%s3 + $0x318] sm:$0xff]
      %v5175 = vld [vmem:[%s3 + $0x330] sm:$0xff]
      %v5176 = vld [vmem:[%s3 + $0x338] sm:$0xff]
      %v5177 = vld [vmem:[%s3 + $0x350] sm:$0xff]
      %v5178 = vld [vmem:[%s3 + $0x358] sm:$0xff]
      %v5179 = vld [vmem:[%s3 + $0x370] sm:$0xff]
      %v5180 = vld [vmem:[%s3 + $0x378] sm:$0xff]
      %v5181 = vld [vmem:[%s3 + $0x390] sm:$0xff]
      %v5182 = vld [vmem:[%s3 + $0x398] sm:$0xff]
      %v5183 = vld [vmem:[%s3 + $0x3b0] sm:$0xff]
      %v5184 = vld [vmem:[%s3 + $0x3b8] sm:$0xff]
      %v5185 = vld [vmem:[%s3 + $0x3d0] sm:$0xff]
      %v5186 = vld [vmem:[%s3 + $0x3d8] sm:$0xff]
      %v5187 = vld [vmem:[%s3 + $0x3f0] sm:$0xff]
      %v5188 = vld [vmem:[%s3 + $0x3f8] sm:$0xff]
      %v5189 = vld [vmem:[%s3 + $0x410] sm:$0xff]
      %v5190 = vld [vmem:[%s3 + $0x418] sm:$0xff]
      %v5191 = vld [vmem:[%s3 + $0x430] sm:$0xff]
      %v5192 = vld [vmem:[%s3 + $0x438] sm:$0xff]
      %v5193 = vld [vmem:[%s3 + $0x450] sm:$0xff]
      %v5194 = vld [vmem:[%s3 + $0x458] sm:$0xff]
      %v5195 = vld [vmem:[%s3 + $0x470] sm:$0xff]
      %v5196 = vld [vmem:[%s3 + $0x478] sm:$0xff]
      %v5197 = vld [vmem:[%s3 + $0x490] sm:$0xff]
      %v5198 = vld [vmem:[%s3 + $0x498] sm:$0xff]
      %v5199 = vld [vmem:[%s3 + $0x4b0] sm:$0xff]
      %v5200 = vld [vmem:[%s3 + $0x4b8] sm:$0xff]
      %v5201 = vld [vmem:[%s3 + $0x4d0] sm:$0xff]
      %v5202 = vld [vmem:[%s3 + $0x4d8] sm:$0xff]
      %v5203 = vld [vmem:[%s3 + $0x4f0] sm:$0xff]
      %v5204 = vld [vmem:[%s3 + $0x4f8] sm:$0xff]
      %v5205 = vld [vmem:[%s3 + $0x510] sm:$0xff]
      %v5206 = vld [vmem:[%s3 + $0x518] sm:$0xff]
      %v5207 = vld [vmem:[%s3 + $0x530] sm:$0xff]
      %v5208 = vld [vmem:[%s3 + $0x538] sm:$0xff]
      %v5209 = vld [vmem:[%s3 + $0x550] sm:$0xff]
      %v5210 = vld [vmem:[%s3 + $0x558] sm:$0xff]
      %v5211 = vld [vmem:[%s3 + $0x570] sm:$0xff]
      %v5212 = vld [vmem:[%s3 + $0x578] sm:$0xff]
      %v5213 = vld [vmem:[%s3 + $0x590] sm:$0xff]
      %v5214 = vld [vmem:[%s3 + $0x598] sm:$0xff]
      %v5215 = vld [vmem:[%s3 + $0x5b0] sm:$0xff]
      %v5216 = vld [vmem:[%s3 + $0x5b8] sm:$0xff]
      %v5217 = vld [vmem:[%s3 + $0x5d0] sm:$0xff]
      %v5218 = vld [vmem:[%s3 + $0x5d8] sm:$0xff]
      %v5219 = vld [vmem:[%s3 + $0x5f0] sm:$0xff]
      %v5220 = vld [vmem:[%s3 + $0x5f8] sm:$0xff]
      %v5221 = vld [vmem:[%s3 + $0x610] sm:$0xff]
      %v5222 = vld [vmem:[%s3 + $0x618] sm:$0xff]
      %v5223 = vld [vmem:[%s3 + $0x630] sm:$0xff]
      %v5224 = vld [vmem:[%s3 + $0x638] sm:$0xff]
      %v5225 = vld [vmem:[%s3 + $0x650] sm:$0xff]
      %v5226 = vld [vmem:[%s3 + $0x658] sm:$0xff]
      %v5227 = vld [vmem:[%s3 + $0x670] sm:$0xff]
      %v5228 = vld [vmem:[%s3 + $0x678] sm:$0xff]
      %v5229 = vld [vmem:[%s3 + $0x690] sm:$0xff]
      %v5230 = vld [vmem:[%s3 + $0x698] sm:$0xff]
      %v5231 = vld [vmem:[%s3 + $0x6b0] sm:$0xff]
      %v5232 = vld [vmem:[%s3 + $0x6b8] sm:$0xff]
      %v5233 = vld [vmem:[%s3 + $0x6d0] sm:$0xff]
      %v5234 = vld [vmem:[%s3 + $0x6d8] sm:$0xff]
      %v5235 = vld [vmem:[%s3 + $0x6f0] sm:$0xff]
      %v5236 = vld [vmem:[%s3 + $0x6f8] sm:$0xff]
      %v5237 = vld [vmem:[%s3 + $0x710] sm:$0xff]
      %v5238 = vld [vmem:[%s3 + $0x718] sm:$0xff]
      %v5239 = vld [vmem:[%s3 + $0x730] sm:$0xff]
      %v5240 = vld [vmem:[%s3 + $0x738] sm:$0xff]
      %v5241 = vld [vmem:[%s3 + $0x750] sm:$0xff]
      %v5242 = vld [vmem:[%s3 + $0x758] sm:$0xff]
      %v5243 = vld [vmem:[%s3 + $0x770] sm:$0xff]
      %v5244 = vld [vmem:[%s3 + $0x778] sm:$0xff]
      %v5245 = vld [vmem:[%s3 + $0x790] sm:$0xff]
      %v5246 = vld [vmem:[%s3 + $0x798] sm:$0xff]
      %v5247 = vld [vmem:[%s3 + $0x7b0] sm:$0xff]
      %v5248 = vld [vmem:[%s3 + $0x7b8] sm:$0xff]
      %v5249 = vld [vmem:[%s3 + $0x7d0] sm:$0xff]
      %v5250 = vld [vmem:[%s3 + $0x7d8] sm:$0xff]
      %v5251 = vld [vmem:[%s3 + $0x7f0] sm:$0xff]
      %v5252 = vld [vmem:[%s3 + $0x7f8] sm:$0xff]
      %v5381 = vunpack.c.l.b16 %v5125
      %v5382 = vunpack.c.h.b16 %v5125
      %v5383 = vunpack.c.l.b16 %v5126
      %v5384 = vunpack.c.h.b16 %v5126
      %v5385 = vunpack.c.l.b16 %v5127
      %v5386 = vunpack.c.h.b16 %v5127
      %v5387 = vunpack.c.l.b16 %v5128
      %v5388 = vunpack.c.h.b16 %v5128
      %v5389 = vunpack.c.l.b16 %v5129
      %v5390 = vunpack.c.h.b16 %v5129
      %v5391 = vunpack.c.l.b16 %v5130
      %v5392 = vunpack.c.h.b16 %v5130
      %v5393 = vunpack.c.l.b16 %v5131
      %v5394 = vunpack.c.h.b16 %v5131
      %v5395 = vunpack.c.l.b16 %v5132
      %v5396 = vunpack.c.h.b16 %v5132
      %v5397 = vunpack.c.l.b16 %v5133
      %v5398 = vunpack.c.h.b16 %v5133
      %v5399 = vunpack.c.l.b16 %v5134
      %v5400 = vunpack.c.h.b16 %v5134
      %v5401 = vunpack.c.l.b16 %v5135
      %v5402 = vunpack.c.h.b16 %v5135
      %v5403 = vunpack.c.l.b16 %v5136
      %v5404 = vunpack.c.h.b16 %v5136
      %v5405 = vunpack.c.l.b16 %v5137
      %v5406 = vunpack.c.h.b16 %v5137
      %v5407 = vunpack.c.l.b16 %v5138
      %v5408 = vunpack.c.h.b16 %v5138
      %v5409 = vunpack.c.l.b16 %v5139
      %v5410 = vunpack.c.h.b16 %v5139
      %v5411 = vunpack.c.l.b16 %v5140
      %v5412 = vunpack.c.h.b16 %v5140
      %v5413 = vunpack.c.l.b16 %v5141
      %v5414 = vunpack.c.h.b16 %v5141
      %v5415 = vunpack.c.l.b16 %v5142
      %v5416 = vunpack.c.h.b16 %v5142
      %v5417 = vunpack.c.l.b16 %v5143
      %v5418 = vunpack.c.h.b16 %v5143
      %v5419 = vunpack.c.l.b16 %v5144
      %v5420 = vunpack.c.h.b16 %v5144
      %v5421 = vunpack.c.l.b16 %v5145
      %v5422 = vunpack.c.h.b16 %v5145
      %v5423 = vunpack.c.l.b16 %v5146
      %v5424 = vunpack.c.h.b16 %v5146
      %v5425 = vunpack.c.l.b16 %v5147
      %v5426 = vunpack.c.h.b16 %v5147
      %v5427 = vunpack.c.l.b16 %v5148
      %v5428 = vunpack.c.h.b16 %v5148
      %v5429 = vunpack.c.l.b16 %v5149
      %v5430 = vunpack.c.h.b16 %v5149
      %v5431 = vunpack.c.l.b16 %v5150
      %v5432 = vunpack.c.h.b16 %v5150
      %v5433 = vunpack.c.l.b16 %v5151
      %v5434 = vunpack.c.h.b16 %v5151
      %v5435 = vunpack.c.l.b16 %v5152
      %v5436 = vunpack.c.h.b16 %v5152
      %v5437 = vunpack.c.l.b16 %v5153
      %v5438 = vunpack.c.h.b16 %v5153
      %v5439 = vunpack.c.l.b16 %v5154
      %v5440 = vunpack.c.h.b16 %v5154
      %v5441 = vunpack.c.l.b16 %v5155
      %v5442 = vunpack.c.h.b16 %v5155
      %v5443 = vunpack.c.l.b16 %v5156
      %v5444 = vunpack.c.h.b16 %v5156
      %v5445 = vunpack.c.l.b16 %v5157
      %v5446 = vunpack.c.h.b16 %v5157
      %v5447 = vunpack.c.l.b16 %v5158
      %v5448 = vunpack.c.h.b16 %v5158
      %v5449 = vunpack.c.l.b16 %v5159
      %v5450 = vunpack.c.h.b16 %v5159
      %v5451 = vunpack.c.l.b16 %v5160
      %v5452 = vunpack.c.h.b16 %v5160
      %v5453 = vunpack.c.l.b16 %v5161
      %v5454 = vunpack.c.h.b16 %v5161
      %v5455 = vunpack.c.l.b16 %v5162
      %v5456 = vunpack.c.h.b16 %v5162
      %v5457 = vunpack.c.l.b16 %v5163
      %v5458 = vunpack.c.h.b16 %v5163
      %v5459 = vunpack.c.l.b16 %v5164
      %v5460 = vunpack.c.h.b16 %v5164
      %v5461 = vunpack.c.l.b16 %v5165
      %v5462 = vunpack.c.h.b16 %v5165
      %v5463 = vunpack.c.l.b16 %v5166
      %v5464 = vunpack.c.h.b16 %v5166
      %v5465 = vunpack.c.l.b16 %v5167
      %v5466 = vunpack.c.h.b16 %v5167
      %v5467 = vunpack.c.l.b16 %v5168
      %v5468 = vunpack.c.h.b16 %v5168
      %v5469 = vunpack.c.l.b16 %v5169
      %v5470 = vunpack.c.h.b16 %v5169
      %v5471 = vunpack.c.l.b16 %v5170
      %v5472 = vunpack.c.h.b16 %v5170
      %v5473 = vunpack.c.l.b16 %v5171
      %v5474 = vunpack.c.h.b16 %v5171
      %v5475 = vunpack.c.l.b16 %v5172
      %v5476 = vunpack.c.h.b16 %v5172
      %v5477 = vunpack.c.l.b16 %v5173
      %v5478 = vunpack.c.h.b16 %v5173
      %v5479 = vunpack.c.l.b16 %v5174
      %v5480 = vunpack.c.h.b16 %v5174
      %v5481 = vunpack.c.l.b16 %v5175
      %v5482 = vunpack.c.h.b16 %v5175
      %v5483 = vunpack.c.l.b16 %v5176
      %v5484 = vunpack.c.h.b16 %v5176
      %v5485 = vunpack.c.l.b16 %v5177
      %v5486 = vunpack.c.h.b16 %v5177
      %v5487 = vunpack.c.l.b16 %v5178
      %v5488 = vunpack.c.h.b16 %v5178
      %v5489 = vunpack.c.l.b16 %v5179
      %v5490 = vunpack.c.h.b16 %v5179
      %v5491 = vunpack.c.l.b16 %v5180
      %v5492 = vunpack.c.h.b16 %v5180
      %v5493 = vunpack.c.l.b16 %v5181
      %v5494 = vunpack.c.h.b16 %v5181
      %v5495 = vunpack.c.l.b16 %v5182
      %v5496 = vunpack.c.h.b16 %v5182
      %v5497 = vunpack.c.l.b16 %v5183
      %v5498 = vunpack.c.h.b16 %v5183
      %v5499 = vunpack.c.l.b16 %v5184
      %v5500 = vunpack.c.h.b16 %v5184
      %v5501 = vunpack.c.l.b16 %v5185
      %v5502 = vunpack.c.h.b16 %v5185
      %v5503 = vunpack.c.l.b16 %v5186
      %v5504 = vunpack.c.h.b16 %v5186
      %v5505 = vunpack.c.l.b16 %v5187
      %v5506 = vunpack.c.h.b16 %v5187
      %v5507 = vunpack.c.l.b16 %v5188
      %v5508 = vunpack.c.h.b16 %v5188
      %v5509 = vunpack.c.l.b16 %v5189
      %v5510 = vunpack.c.h.b16 %v5189
      %v5511 = vunpack.c.l.b16 %v5190
      %v5512 = vunpack.c.h.b16 %v5190
      %v5513 = vunpack.c.l.b16 %v5191
      %v5514 = vunpack.c.h.b16 %v5191
      %v5515 = vunpack.c.l.b16 %v5192
      %v5516 = vunpack.c.h.b16 %v5192
      %v5517 = vunpack.c.l.b16 %v5193
      %v5518 = vunpack.c.h.b16 %v5193
      %v5519 = vunpack.c.l.b16 %v5194
      %v5520 = vunpack.c.h.b16 %v5194
      %v5521 = vunpack.c.l.b16 %v5195
      %v5522 = vunpack.c.h.b16 %v5195
      %v5523 = vunpack.c.l.b16 %v5196
      %v5524 = vunpack.c.h.b16 %v5196
      %v5525 = vunpack.c.l.b16 %v5197
      %v5526 = vunpack.c.h.b16 %v5197
      %v5527 = vunpack.c.l.b16 %v5198
      %v5528 = vunpack.c.h.b16 %v5198
      %v5529 = vunpack.c.l.b16 %v5199
      %v5530 = vunpack.c.h.b16 %v5199
      %v5531 = vunpack.c.l.b16 %v5200
      %v5532 = vunpack.c.h.b16 %v5200
      %v5533 = vunpack.c.l.b16 %v5201
      %v5534 = vunpack.c.h.b16 %v5201
      %v5535 = vunpack.c.l.b16 %v5202
      %v5536 = vunpack.c.h.b16 %v5202
      %v5537 = vunpack.c.l.b16 %v5203
      %v5538 = vunpack.c.h.b16 %v5203
      %v5539 = vunpack.c.l.b16 %v5204
      %v5540 = vunpack.c.h.b16 %v5204
      %v5541 = vunpack.c.l.b16 %v5205
      %v5542 = vunpack.c.h.b16 %v5205
      %v5543 = vunpack.c.l.b16 %v5206
      %v5544 = vunpack.c.h.b16 %v5206
      %v5545 = vunpack.c.l.b16 %v5207
      %v5546 = vunpack.c.h.b16 %v5207
      %v5547 = vunpack.c.l.b16 %v5208
      %v5548 = vunpack.c.h.b16 %v5208
      %v5549 = vunpack.c.l.b16 %v5209
      %v5550 = vunpack.c.h.b16 %v5209
      %v5551 = vunpack.c.l.b16 %v5210
      %v5552 = vunpack.c.h.b16 %v5210
      %v5553 = vunpack.c.l.b16 %v5211
      %v5554 = vunpack.c.h.b16 %v5211
      %v5555 = vunpack.c.l.b16 %v5212
      %v5556 = vunpack.c.h.b16 %v5212
      %v5557 = vunpack.c.l.b16 %v5213
      %v5558 = vunpack.c.h.b16 %v5213
      %v5559 = vunpack.c.l.b16 %v5214
      %v5560 = vunpack.c.h.b16 %v5214
      %v5561 = vunpack.c.l.b16 %v5215
      %v5562 = vunpack.c.h.b16 %v5215
      %v5563 = vunpack.c.l.b16 %v5216
      %v5564 = vunpack.c.h.b16 %v5216
      %v5565 = vunpack.c.l.b16 %v5217
      %v5566 = vunpack.c.h.b16 %v5217
      %v5567 = vunpack.c.l.b16 %v5218
      %v5568 = vunpack.c.h.b16 %v5218
      %v5569 = vunpack.c.l.b16 %v5219
      %v5570 = vunpack.c.h.b16 %v5219
      %v5571 = vunpack.c.l.b16 %v5220
      %v5572 = vunpack.c.h.b16 %v5220
      %v5573 = vunpack.c.l.b16 %v5221
      %v5574 = vunpack.c.h.b16 %v5221
      %v5575 = vunpack.c.l.b16 %v5222
      %v5576 = vunpack.c.h.b16 %v5222
      %v5577 = vunpack.c.l.b16 %v5223
      %v5578 = vunpack.c.h.b16 %v5223
      %v5579 = vunpack.c.l.b16 %v5224
      %v5580 = vunpack.c.h.b16 %v5224
      %v5581 = vunpack.c.l.b16 %v5225
      %v5582 = vunpack.c.h.b16 %v5225
      %v5583 = vunpack.c.l.b16 %v5226
      %v5584 = vunpack.c.h.b16 %v5226
      %v5585 = vunpack.c.l.b16 %v5227
      %v5586 = vunpack.c.h.b16 %v5227
      %v5587 = vunpack.c.l.b16 %v5228
      %v5588 = vunpack.c.h.b16 %v5228
      %v5589 = vunpack.c.l.b16 %v5229
      %v5590 = vunpack.c.h.b16 %v5229
      %v5591 = vunpack.c.l.b16 %v5230
      %v5592 = vunpack.c.h.b16 %v5230
      %v5593 = vunpack.c.l.b16 %v5231
      %v5594 = vunpack.c.h.b16 %v5231
      %v5595 = vunpack.c.l.b16 %v5232
      %v5596 = vunpack.c.h.b16 %v5232
      %v5597 = vunpack.c.l.b16 %v5233
      %v5598 = vunpack.c.h.b16 %v5233
      %v5599 = vunpack.c.l.b16 %v5234
      %v5600 = vunpack.c.h.b16 %v5234
      %v5601 = vunpack.c.l.b16 %v5235
      %v5602 = vunpack.c.h.b16 %v5235
      %v5603 = vunpack.c.l.b16 %v5236
      %v5604 = vunpack.c.h.b16 %v5236
      %v5605 = vunpack.c.l.b16 %v5237
      %v5606 = vunpack.c.h.b16 %v5237
      %v5607 = vunpack.c.l.b16 %v5238
      %v5608 = vunpack.c.h.b16 %v5238
      %v5609 = vunpack.c.l.b16 %v5239
      %v5610 = vunpack.c.h.b16 %v5239
      %v5611 = vunpack.c.l.b16 %v5240
      %v5612 = vunpack.c.h.b16 %v5240
      %v5613 = vunpack.c.l.b16 %v5241
      %v5614 = vunpack.c.h.b16 %v5241
      %v5615 = vunpack.c.l.b16 %v5242
      %v5616 = vunpack.c.h.b16 %v5242
      %v5617 = vunpack.c.l.b16 %v5243
      %v5618 = vunpack.c.h.b16 %v5243
      %v5619 = vunpack.c.l.b16 %v5244
      %v5620 = vunpack.c.h.b16 %v5244
      %v5621 = vunpack.c.l.b16 %v5245
      %v5622 = vunpack.c.h.b16 %v5245
      %v5623 = vunpack.c.l.b16 %v5246
      %v5624 = vunpack.c.h.b16 %v5246
      %v5625 = vunpack.c.l.b16 %v5247
      %v5626 = vunpack.c.h.b16 %v5247
      %v5627 = vunpack.c.l.b16 %v5248
      %v5628 = vunpack.c.h.b16 %v5248
      %v5629 = vunpack.c.l.b16 %v5249
      %v5630 = vunpack.c.h.b16 %v5249
      %v5631 = vunpack.c.l.b16 %v5250
      %v5632 = vunpack.c.h.b16 %v5250
      %v5633 = vunpack.c.l.b16 %v5251
      %v5634 = vunpack.c.h.b16 %v5251
      %v5635 = vunpack.c.l.b16 %v5252
      %v5636 = vunpack.c.h.b16 %v5252
      %v5637 = vpack.c.b16 %v5385, %v5381
      %v5638 = vpack.c.b16 %v5386, %v5382
      %v5639 = vpack.c.b16 %v5387, %v5383
      %v5640 = vpack.c.b16 %v5388, %v5384
      %v5641 = vpack.c.b16 %v5393, %v5389
      %v5642 = vpack.c.b16 %v5394, %v5390
      %v5643 = vpack.c.b16 %v5395, %v5391
      %v5644 = vpack.c.b16 %v5396, %v5392
      %v5645 = vpack.c.b16 %v5401, %v5397
      %v5646 = vpack.c.b16 %v5402, %v5398
      %v5647 = vpack.c.b16 %v5403, %v5399
      %v5648 = vpack.c.b16 %v5404, %v5400
      %v5649 = vpack.c.b16 %v5409, %v5405
      %v5650 = vpack.c.b16 %v5410, %v5406
      %v5651 = vpack.c.b16 %v5411, %v5407
      %v5652 = vpack.c.b16 %v5412, %v5408
      %v5653 = vpack.c.b16 %v5417, %v5413
      %v5654 = vpack.c.b16 %v5418, %v5414
      %v5655 = vpack.c.b16 %v5419, %v5415
      %v5656 = vpack.c.b16 %v5420, %v5416
      %v5657 = vpack.c.b16 %v5425, %v5421
      %v5658 = vpack.c.b16 %v5426, %v5422
      %v5659 = vpack.c.b16 %v5427, %v5423
      %v5660 = vpack.c.b16 %v5428, %v5424
      %v5661 = vpack.c.b16 %v5433, %v5429
      %v5662 = vpack.c.b16 %v5434, %v5430
      %v5663 = vpack.c.b16 %v5435, %v5431
      %v5664 = vpack.c.b16 %v5436, %v5432
      %v5665 = vpack.c.b16 %v5441, %v5437
      %v5666 = vpack.c.b16 %v5442, %v5438
      %v5667 = vpack.c.b16 %v5443, %v5439
      %v5668 = vpack.c.b16 %v5444, %v5440
      %v5669 = vpack.c.b16 %v5449, %v5445
      %v5670 = vpack.c.b16 %v5450, %v5446
      %v5671 = vpack.c.b16 %v5451, %v5447
      %v5672 = vpack.c.b16 %v5452, %v5448
      %v5673 = vpack.c.b16 %v5457, %v5453
      %v5674 = vpack.c.b16 %v5458, %v5454
      %v5675 = vpack.c.b16 %v5459, %v5455
      %v5676 = vpack.c.b16 %v5460, %v5456
      %v5677 = vpack.c.b16 %v5465, %v5461
      %v5678 = vpack.c.b16 %v5466, %v5462
      %v5679 = vpack.c.b16 %v5467, %v5463
      %v5680 = vpack.c.b16 %v5468, %v5464
      %v5681 = vpack.c.b16 %v5473, %v5469
      %v5682 = vpack.c.b16 %v5474, %v5470
      %v5683 = vpack.c.b16 %v5475, %v5471
      %v5684 = vpack.c.b16 %v5476, %v5472
      %v5685 = vpack.c.b16 %v5481, %v5477
      %v5686 = vpack.c.b16 %v5482, %v5478
      %v5687 = vpack.c.b16 %v5483, %v5479
      %v5688 = vpack.c.b16 %v5484, %v5480
      %v5689 = vpack.c.b16 %v5489, %v5485
      %v5690 = vpack.c.b16 %v5490, %v5486
      %v5691 = vpack.c.b16 %v5491, %v5487
      %v5692 = vpack.c.b16 %v5492, %v5488
      %v5693 = vpack.c.b16 %v5497, %v5493
      %v5694 = vpack.c.b16 %v5498, %v5494
      %v5695 = vpack.c.b16 %v5499, %v5495
      %v5696 = vpack.c.b16 %v5500, %v5496
      %v5697 = vpack.c.b16 %v5505, %v5501
      %v5698 = vpack.c.b16 %v5506, %v5502
      %v5699 = vpack.c.b16 %v5507, %v5503
      %v5700 = vpack.c.b16 %v5508, %v5504
      %v5701 = vpack.c.b16 %v5513, %v5509
      %v5702 = vpack.c.b16 %v5514, %v5510
      %v5703 = vpack.c.b16 %v5515, %v5511
      %v5704 = vpack.c.b16 %v5516, %v5512
      %v5705 = vpack.c.b16 %v5521, %v5517
      %v5706 = vpack.c.b16 %v5522, %v5518
      %v5707 = vpack.c.b16 %v5523, %v5519
      %v5708 = vpack.c.b16 %v5524, %v5520
      %v5709 = vpack.c.b16 %v5529, %v5525
      %v5710 = vpack.c.b16 %v5530, %v5526
      %v5711 = vpack.c.b16 %v5531, %v5527
      %v5712 = vpack.c.b16 %v5532, %v5528
      %v5713 = vpack.c.b16 %v5537, %v5533
      %v5714 = vpack.c.b16 %v5538, %v5534
      %v5715 = vpack.c.b16 %v5539, %v5535
      %v5716 = vpack.c.b16 %v5540, %v5536
      %v5717 = vpack.c.b16 %v5545, %v5541
      %v5718 = vpack.c.b16 %v5546, %v5542
      %v5719 = vpack.c.b16 %v5547, %v5543
      %v5720 = vpack.c.b16 %v5548, %v5544
      %v5721 = vpack.c.b16 %v5553, %v5549
      %v5722 = vpack.c.b16 %v5554, %v5550
      %v5723 = vpack.c.b16 %v5555, %v5551
      %v5724 = vpack.c.b16 %v5556, %v5552
      %v5725 = vpack.c.b16 %v5561, %v5557
      %v5726 = vpack.c.b16 %v5562, %v5558
      %v5727 = vpack.c.b16 %v5563, %v5559
      %v5728 = vpack.c.b16 %v5564, %v5560
      %v5729 = vpack.c.b16 %v5569, %v5565
      %v5730 = vpack.c.b16 %v5570, %v5566
      %v5731 = vpack.c.b16 %v5571, %v5567
      %v5732 = vpack.c.b16 %v5572, %v5568
      %v5733 = vpack.c.b16 %v5577, %v5573
      %v5734 = vpack.c.b16 %v5578, %v5574
      %v5735 = vpack.c.b16 %v5579, %v5575
      %v5736 = vpack.c.b16 %v5580, %v5576
      %v5737 = vpack.c.b16 %v5585, %v5581
      %v5738 = vpack.c.b16 %v5586, %v5582
      %v5739 = vpack.c.b16 %v5587, %v5583
      %v5740 = vpack.c.b16 %v5588, %v5584
      %v5741 = vpack.c.b16 %v5593, %v5589
      %v5742 = vpack.c.b16 %v5594, %v5590
      %v5743 = vpack.c.b16 %v5595, %v5591
      %v5744 = vpack.c.b16 %v5596, %v5592
      %v5745 = vpack.c.b16 %v5601, %v5597
      %v5746 = vpack.c.b16 %v5602, %v5598
      %v5747 = vpack.c.b16 %v5603, %v5599
      %v5748 = vpack.c.b16 %v5604, %v5600
      %v5749 = vpack.c.b16 %v5609, %v5605
      %v5750 = vpack.c.b16 %v5610, %v5606
      %v5751 = vpack.c.b16 %v5611, %v5607
      %v5752 = vpack.c.b16 %v5612, %v5608
      %v5753 = vpack.c.b16 %v5617, %v5613
      %v5754 = vpack.c.b16 %v5618, %v5614
      %v5755 = vpack.c.b16 %v5619, %v5615
      %v5756 = vpack.c.b16 %v5620, %v5616
      %v5757 = vpack.c.b16 %v5625, %v5621
      %v5758 = vpack.c.b16 %v5626, %v5622
      %v5759 = vpack.c.b16 %v5627, %v5623
      %v5760 = vpack.c.b16 %v5628, %v5624
      %v5761 = vpack.c.b16 %v5633, %v5629
      %v5762 = vpack.c.b16 %v5634, %v5630
      %v5763 = vpack.c.b16 %v5635, %v5631
      %v5764 = vpack.c.b16 %v5636, %v5632
      %5893 = vmatprep.subr.bf16.mxu0 %v5666
      %5894 = vmatpush1.bf16.msra.mxu0 %v5665
      %5895 = vmatprep.subr.bf16.mxu0 %v5662
      %5896 = vmatpush1.bf16.msra.mxu0 %v5661
      %5897 = vmatprep.subr.bf16.mxu0 %v5658
      %5898 = vmatpush1.bf16.msra.mxu0 %v5657
      %5899 = vmatprep.subr.bf16.mxu0 %v5654
      %5900 = vmatpush1.bf16.msra.mxu0 %v5653
      %5901 = vmatprep.subr.bf16.mxu0 %v5650
      %5902 = vmatpush1.bf16.msra.mxu0 %v5649
      %5903 = vmatprep.subr.bf16.mxu0 %v5646
      %5904 = vmatpush1.bf16.msra.mxu0 %v5645
      %5905 = vmatprep.subr.bf16.mxu0 %v5642
      %5906 = vmatpush1.bf16.msra.mxu0 %v5641
      %5907 = vmatprep.subr.bf16.mxu0 %v5638
      %5908 = vmatpush1.bf16.msra.mxu0 %v5637
      %5909 = vmatprep.subr.bf16.mxu0 %v5698
      %5910 = vmatpush2.bf16.msra.mxu0 %v5697
      %5911 = vmatprep.subr.bf16.mxu0 %v5694
      %5912 = vmatpush2.bf16.msra.mxu0 %v5693
      %5913 = vmatprep.subr.bf16.mxu0 %v5690
      %5914 = vmatpush2.bf16.msra.mxu0 %v5689
      %5915 = vmatprep.subr.bf16.mxu0 %v5686
      %5916 = vmatpush2.bf16.msra.mxu0 %v5685
      %5917 = vmatprep.subr.bf16.mxu0 %v5682
      %5918 = vmatpush2.bf16.msra.mxu0 %v5681
      %5919 = vmatprep.subr.bf16.mxu0 %v5678
      %5920 = vmatpush2.bf16.msra.mxu0 %v5677
      %5921 = vmatprep.subr.bf16.mxu0 %v5674
      %5922 = vmatpush2.bf16.msra.mxu0 %v5673
      %5923 = vmatprep.subr.bf16.mxu0 %v5670
      %5924 = vmatpush2.bf16.msra.mxu0 %v5669
      %5925 = vmatprep.mubr.bf16.mxu0 %v4190
      %5926 = vmatmul.mubr.bf16.gmra.mxu0 %v4189
      %v5927 = vpop.f32.mrf.mxu0
      %v5928 = vadd.f32 0.0, %v5927
      %v5929 = vpop.f32.mrf.mxu0
      %v5930 = vadd.f32 0.0, %v5929
      %v5931 = vpop.f32.mrf.mxu0
      %v5932 = vpop.f32.mrf.mxu0
      %5933 = vdwg.mxu0
      %5934 = vmatprep.subr.bf16.mxu0 %v5730
      %5935 = vmatpush1.bf16.msra.mxu0 %v5729
      %5936 = vmatprep.subr.bf16.mxu0 %v5726
      %5937 = vmatpush1.bf16.msra.mxu0 %v5725
      %5938 = vmatprep.subr.bf16.mxu0 %v5722
      %5939 = vmatpush1.bf16.msra.mxu0 %v5721
      %5940 = vmatprep.subr.bf16.mxu0 %v5718
      %5941 = vmatpush1.bf16.msra.mxu0 %v5717
      %5942 = vmatprep.subr.bf16.mxu0 %v5714
      %5943 = vmatpush1.bf16.msra.mxu0 %v5713
      %5944 = vmatprep.subr.bf16.mxu0 %v5710
      %5945 = vmatpush1.bf16.msra.mxu0 %v5709
      %5946 = vmatprep.subr.bf16.mxu0 %v5706
      %5947 = vmatpush1.bf16.msra.mxu0 %v5705
      %5948 = vmatprep.subr.bf16.mxu0 %v5702
      %5949 = vmatpush1.bf16.msra.mxu0 %v5701
      %5950 = vmatprep.subr.bf16.mxu0 %v5762
      %5951 = vmatpush2.bf16.msra.mxu0 %v5761
      %5952 = vmatprep.subr.bf16.mxu0 %v5758
      %5953 = vmatpush2.bf16.msra.mxu0 %v5757
      %5954 = vmatprep.subr.bf16.mxu0 %v5754
      %5955 = vmatpush2.bf16.msra.mxu0 %v5753
      %5956 = vmatprep.subr.bf16.mxu0 %v5750
      %5957 = vmatpush2.bf16.msra.mxu0 %v5749
      %5958 = vmatprep.subr.bf16.mxu0 %v5746
      %5959 = vmatpush2.bf16.msra.mxu0 %v5745
      %5960 = vmatprep.subr.bf16.mxu0 %v5742
      %5961 = vmatpush2.bf16.msra.mxu0 %v5741
      %5962 = vmatprep.subr.bf16.mxu0 %v5738
      %5963 = vmatpush2.bf16.msra.mxu0 %v5737
      %5964 = vmatprep.subr.bf16.mxu0 %v5734
      %5965 = vmatpush2.bf16.msra.mxu0 %v5733
      %5966 = vmatprep.mubr.bf16.mxu0 %v4192
      %5967 = vmatmul.mubr.bf16.gmra.mxu0 %v4191
      %v5968 = vpop.f32.mrf.mxu0
      %v5969 = vadd.f32 %v5928, %v5968
      %v5970 = vpop.f32.mrf.mxu0
      %v5971 = vadd.f32 %v5930, %v5970
      %v5972 = vpop.f32.mrf.mxu0
      %v5973 = vpop.f32.mrf.mxu0
      %5974 = vdwg.mxu0
      %5975 = vmatprep.subr.bf16.mxu0 %v5668
      %5976 = vmatpush1.bf16.msra.mxu0 %v5667
      %5977 = vmatprep.subr.bf16.mxu0 %v5664
      %5978 = vmatpush1.bf16.msra.mxu0 %v5663
      %5979 = vmatprep.subr.bf16.mxu0 %v5660
      %5980 = vmatpush1.bf16.msra.mxu0 %v5659
      %5981 = vmatprep.subr.bf16.mxu0 %v5656
      %5982 = vmatpush1.bf16.msra.mxu0 %v5655
      %5983 = vmatprep.subr.bf16.mxu0 %v5652
      %5984 = vmatpush1.bf16.msra.mxu0 %v5651
      %5985 = vmatprep.subr.bf16.mxu0 %v5648
      %5986 = vmatpush1.bf16.msra.mxu0 %v5647
      %5987 = vmatprep.subr.bf16.mxu0 %v5644
      %5988 = vmatpush1.bf16.msra.mxu0 %v5643
      %5989 = vmatprep.subr.bf16.mxu0 %v5640
      %5990 = vmatpush1.bf16.msra.mxu0 %v5639
      %5991 = vmatprep.subr.bf16.mxu0 %v5700
      %5992 = vmatpush2.bf16.msra.mxu0 %v5699
      %5993 = vmatprep.subr.bf16.mxu0 %v5696
      %5994 = vmatpush2.bf16.msra.mxu0 %v5695
      %5995 = vmatprep.subr.bf16.mxu0 %v5692
      %5996 = vmatpush2.bf16.msra.mxu0 %v5691
      %5997 = vmatprep.subr.bf16.mxu0 %v5688
      %5998 = vmatpush2.bf16.msra.mxu0 %v5687
      %5999 = vmatprep.subr.bf16.mxu0 %v5684
      %6000 = vmatpush2.bf16.msra.mxu0 %v5683
      %6001 = vmatprep.subr.bf16.mxu0 %v5680
      %6002 = vmatpush2.bf16.msra.mxu0 %v5679
      %6003 = vmatprep.subr.bf16.mxu0 %v5676
      %6004 = vmatpush2.bf16.msra.mxu0 %v5675
      %6005 = vmatprep.subr.bf16.mxu0 %v5672
      %6006 = vmatpush2.bf16.msra.mxu0 %v5671
      %6007 = vmatprep.mubr.bf16.mxu0 %v4190
      %6008 = vmatmul.mubr.bf16.gmra.mxu0 %v4189
      %v6009 = vpop.f32.mrf.mxu0
      %v6010 = vadd.f32 0.0, %v6009
      %v6011 = vpop.f32.mrf.mxu0
      %v6012 = vadd.f32 0.0, %v6011
      %v6013 = vpop.f32.mrf.mxu0
      %v6014 = vpop.f32.mrf.mxu0
      %6015 = vdwg.mxu0
      %6016 = vmatprep.subr.bf16.mxu0 %v5732
      %6017 = vmatpush1.bf16.msra.mxu0 %v5731
      %6018 = vmatprep.subr.bf16.mxu0 %v5728
      %6019 = vmatpush1.bf16.msra.mxu0 %v5727
      %6020 = vmatprep.subr.bf16.mxu0 %v5724
      %6021 = vmatpush1.bf16.msra.mxu0 %v5723
      %6022 = vmatprep.subr.bf16.mxu0 %v5720
      %6023 = vmatpush1.bf16.msra.mxu0 %v5719
      %6024 = vmatprep.subr.bf16.mxu0 %v5716
      %6025 = vmatpush1.bf16.msra.mxu0 %v5715
      %6026 = vmatprep.subr.bf16.mxu0 %v5712
      %6027 = vmatpush1.bf16.msra.mxu0 %v5711
      %6028 = vmatprep.subr.bf16.mxu0 %v5708
      %6029 = vmatpush1.bf16.msra.mxu0 %v5707
      %6030 = vmatprep.subr.bf16.mxu0 %v5704
      %6031 = vmatpush1.bf16.msra.mxu0 %v5703
      %6032 = vmatprep.subr.bf16.mxu0 %v5764
      %6033 = vmatpush2.bf16.msra.mxu0 %v5763
      %6034 = vmatprep.subr.bf16.mxu0 %v5760
      %6035 = vmatpush2.bf16.msra.mxu0 %v5759
      %6036 = vmatprep.subr.bf16.mxu0 %v5756
      %6037 = vmatpush2.bf16.msra.mxu0 %v5755
      %6038 = vmatprep.subr.bf16.mxu0 %v5752
      %6039 = vmatpush2.bf16.msra.mxu0 %v5751
      %6040 = vmatprep.subr.bf16.mxu0 %v5748
      %6041 = vmatpush2.bf16.msra.mxu0 %v5747
      %6042 = vmatprep.subr.bf16.mxu0 %v5744
      %6043 = vmatpush2.bf16.msra.mxu0 %v5743
      %6044 = vmatprep.subr.bf16.mxu0 %v5740
      %6045 = vmatpush2.bf16.msra.mxu0 %v5739
      %6046 = vmatprep.subr.bf16.mxu0 %v5736
      %6047 = vmatpush2.bf16.msra.mxu0 %v5735
      %6048 = vmatprep.mubr.bf16.mxu0 %v4192
      %6049 = vmatmul.mubr.bf16.gmra.mxu0 %v4191
      %v6050 = vpop.f32.mrf.mxu0
      %v6051 = vadd.f32 %v6010, %v6050
      %v6052 = vpop.f32.mrf.mxu0
      %v6053 = vadd.f32 %v6012, %v6052
      %v6054 = vpop.f32.mrf.mxu0
      %v6055 = vpop.f32.mrf.mxu0
      %6056 = vdwg.mxu0
      %v6057 = vld [vmem:[%s4] sm:$0xf]
      %v6059 = vlaneseq
      %v6060 = vshrl.u32 %v6059, 7
      %v6061 = vsub.s32 0, %v6060
      %v6062 = vrot.slane %v6057, %v6061
      %v6063 = vlaneseq
      %v6064 = vshrl.u32 %v6063, 7
      %v6065 = vsub.s32 1, %v6064
      %v6066 = vrot.slane %v6057, %v6065
      %v6067 = vlaneseq
      %v6068 = vshrl.u32 %v6067, 7
      %v6069 = vsub.s32 2, %v6068
      %v6070 = vrot.slane %v6057, %v6069
      %v6071 = vlaneseq
      %v6072 = vshrl.u32 %v6071, 7
      %v6073 = vsub.s32 3, %v6072
      %v6074 = vrot.slane %v6057, %v6073
      %v6079 = vmul.f32 %v5037, %v6062
      %v6080 = vmul.f32 %v5039, %v6066
      %v6081 = vmul.f32 %v5119, %v6070
      %v6082 = vmul.f32 %v5121, %v6074
      %v6083 = vld [vmem:[%s288] sm:$0xff]
      %v6084 = vld [vmem:[%s288 + $0x8] sm:$0xff]
      %v6085 = vld [vmem:[%s288 + $0x10] sm:$0xff]
      %v6086 = vld [vmem:[%s288 + $0x18] sm:$0xff]
      %v6087 = vld [vmem:[%s288 + $0x20] sm:$0xff]
      %v6088 = vld [vmem:[%s288 + $0x28] sm:$0xff]
      %v6089 = vld [vmem:[%s288 + $0x30] sm:$0xff]
      %v6090 = vld [vmem:[%s288 + $0x38] sm:$0xff]
      %v6091 = vld [vmem:[%s293] sm:$0xff]
      %v6092 = vld [vmem:[%s293 + $0x8] sm:$0xff]
      %v6093 = vlaneseq
      %v6094 = vshrl.u32 %v6093, 7
      %v6095 = vsub.s32 0, %v6094
      %v6096 = vrot.slane %v6079, %v6095
      %v6097 = vlaneseq
      %v6098 = vshrl.u32 %v6097, 7
      %v6099 = vsub.s32 0, %v6098
      %v6100 = vrot.slane %v6080, %v6099
      %v6101 = vlaneseq
      %v6102 = vshrl.u32 %v6101, 7
      %v6103 = vsub.s32 0, %v6102
      %v6104 = vrot.slane %v6081, %v6103
      %v6105 = vlaneseq
      %v6106 = vshrl.u32 %v6105, 7
      %v6107 = vsub.s32 0, %v6106
      %v6108 = vrot.slane %v6082, %v6107
      %6110 = vset.pattern.permute.xlu0 0
      %6111 = vperm.xlu0 %6110, %v6091
      %v6112 = vpop.permute.xlu0 %6111
      %6115 = vset.pattern.permute.xlu0 0
      %6116 = vperm.xlu0 %6115, %v6092
      %v6117 = vpop.permute.xlu0 %6116
      %v6119 = vmul.f32 %v6096, %v6112
      %v6120 = vmul.f32 %v6100, %v6112
      %v6121 = vmul.f32 %v6104, %v6112
      %v6122 = vmul.f32 %v6108, %v6112
      %v6123 = vmul.f32 %v6096, %v6117
      %v6124 = vmul.f32 %v6100, %v6117
      %v6125 = vmul.f32 %v6104, %v6117
      %v6126 = vmul.f32 %v6108, %v6117
      %v6127 = vadd.f32 %v6083, %v6119
      %v6128 = vadd.f32 %v6084, %v6120
      %v6129 = vadd.f32 %v6085, %v6121
      %v6130 = vadd.f32 %v6086, %v6122
      %v6131 = vadd.f32 %v6087, %v6123
      %v6132 = vadd.f32 %v6088, %v6124
      %v6133 = vadd.f32 %v6089, %v6125
      %v6134 = vadd.f32 %v6090, %v6126
      %v6135 = vlaneseq
      %v6136 = vshrl.u32 %v6135, 7
      %v6137 = vsub.s32 0, %v6136
      %v6138 = vrot.slane %v5969, %v6137
      %v6139 = vlaneseq
      %v6140 = vshrl.u32 %v6139, 7
      %v6141 = vsub.s32 0, %v6140
      %v6142 = vrot.slane %v5971, %v6141
      %v6143 = vlaneseq
      %v6144 = vshrl.u32 %v6143, 7
      %v6145 = vsub.s32 0, %v6144
      %v6146 = vrot.slane %v6051, %v6145
      %v6147 = vlaneseq
      %v6148 = vshrl.u32 %v6147, 7
      %v6149 = vsub.s32 0, %v6148
      %v6150 = vrot.slane %v6053, %v6149
      %v6151 = vadd.f32 %v6127, %v6138
      %v6152 = vadd.f32 %v6128, %v6142
      %v6153 = vadd.f32 %v6129, %v6146
      %v6154 = vadd.f32 %v6130, %v6150
      %v6155 = vadd.f32 %v6131, %v6138
      %v6156 = vadd.f32 %v6132, %v6142
      %v6157 = vadd.f32 %v6133, %v6146
      %v6158 = vadd.f32 %v6134, %v6150
      %vm6159 = vcmp.ge.f32.partialorder %v6151, 0.0
      %vm6160 = vcmp.ge.f32.partialorder %v6152, 0.0
      %vm6161 = vcmp.ge.f32.partialorder %v6153, 0.0
      %vm6162 = vcmp.ge.f32.partialorder %v6154, 0.0
      %vm6163 = vcmp.ge.f32.partialorder %v6155, 0.0
      %vm6164 = vcmp.ge.f32.partialorder %v6156, 0.0
      %vm6165 = vcmp.ge.f32.partialorder %v6157, 0.0
      %vm6166 = vcmp.ge.f32.partialorder %v6158, 0.0
      %v6167 = vmul.f32 %v6151, 0.2
      %v6168 = vmul.f32 %v6152, 0.2
      %v6169 = vmul.f32 %v6153, 0.2
      %v6170 = vmul.f32 %v6154, 0.2
      %v6171 = vmul.f32 %v6155, 0.2
      %v6172 = vmul.f32 %v6156, 0.2
      %v6173 = vmul.f32 %v6157, 0.2
      %v6174 = vmul.f32 %v6158, 0.2
      %v6175 = vsel %vm6159, %v6151, %v6167
      %v6176 = vsel %vm6160, %v6152, %v6168
      %v6177 = vsel %vm6161, %v6153, %v6169
      %v6178 = vsel %vm6162, %v6154, %v6170
      %v6179 = vsel %vm6163, %v6155, %v6171
      %v6180 = vsel %vm6164, %v6156, %v6172
      %v6181 = vsel %vm6165, %v6157, %v6173
      %v6182 = vsel %vm6166, %v6158, %v6174
      %v6183 = vmul.f32 %v6175, %v6175
      %v6184 = vmul.f32 %v6176, %v6176
      %v6185 = vmul.f32 %v6177, %v6177
      %v6186 = vmul.f32 %v6178, %v6178
      %v6187 = vmul.f32 %v6179, %v6179
      %v6188 = vmul.f32 %v6180, %v6180
      %v6189 = vmul.f32 %v6181, %v6181
      %v6190 = vmul.f32 %v6182, %v6182
      %v6191 = vadd.f32 %v6183, %v6184
      %v6192 = vadd.f32 %v6191, %v6185
      %v6193 = vadd.f32 %v6192, %v6186
      %6194 = vadd.xlane.f32.xlu0 %v6193
      %v6195 = vpop.xlane.xlu0 %6194
      %v6196 = vadd.f32 %v6187, %v6188
      %v6197 = vadd.f32 %v6196, %v6189
      %v6198 = vadd.f32 %v6197, %v6190
      %6199 = vadd.xlane.f32.xlu0 %v6198
      %v6200 = vpop.xlane.xlu0 %6199
      %v6201 = vrcp.pop 512.0
      %v6202 = vmul.f32 %v6195, %v6201
      %v6203 = vmul.f32 %v6200, %v6201
      %v6204 = vadd.f32 %v6202, 1e-08
      %v6205 = vadd.f32 %v6203, 1e-08
      %v6206 = vrsqrt.pop %v6204
      %v6207 = vrsqrt.pop %v6205
      %v6208 = vmul.f32 %v6175, %v6206
      %v6209 = vmul.f32 %v6176, %v6206
      %v6210 = vmul.f32 %v6177, %v6206
      %v6211 = vmul.f32 %v6178, %v6206
      %v6212 = vmul.f32 %v6179, %v6207
      %v6213 = vmul.f32 %v6180, %v6207
      %v6214 = vmul.f32 %v6181, %v6207
      %v6215 = vmul.f32 %v6182, %v6207
      %v6216 = vadd.f32 %v6208, %v6212
      %v6217 = vrot.slane %v6216, 4
      %v6218 = vadd.f32 %v6216, %v6217
      %v6219 = vrot.slane %v6218, 2
      %v6220 = vadd.f32 %v6218, %v6219
      %v6221 = vrot.slane %v6220, 1
      %v6222 = vadd.f32 %v6220, %v6221
      %v6223 = vadd.f32 %v6209, %v6213
      %v6224 = vrot.slane %v6223, 4
      %v6225 = vadd.f32 %v6223, %v6224
      %v6226 = vrot.slane %v6225, 2
      %v6227 = vadd.f32 %v6225, %v6226
      %v6228 = vrot.slane %v6227, 1
      %v6229 = vadd.f32 %v6227, %v6228
      %v6230 = vadd.f32 %v6210, %v6214
      %v6231 = vrot.slane %v6230, 4
      %v6232 = vadd.f32 %v6230, %v6231
      %v6233 = vrot.slane %v6232, 2
      %v6234 = vadd.f32 %v6232, %v6233
      %v6235 = vrot.slane %v6234, 1
      %v6236 = vadd.f32 %v6234, %v6235
      %v6237 = vadd.f32 %v6211, %v6215
      %v6238 = vrot.slane %v6237, 4
      %v6239 = vadd.f32 %v6237, %v6238
      %v6240 = vrot.slane %v6239, 2
      %v6241 = vadd.f32 %v6239, %v6240
      %v6242 = vrot.slane %v6241, 1
      %v6243 = vadd.f32 %v6241, %v6242
      %v6244 = vrcp.pop 16.0
      %v6245 = vmul.f32 %v6222, %v6244
      %v6246 = vmul.f32 %v6229, %v6244
      %v6247 = vmul.f32 %v6236, %v6244
      %v6248 = vmul.f32 %v6243, %v6244
      %v6249 = vsub.f32 %v6208, %v6245
      %v6250 = vsub.f32 %v6209, %v6246
      %v6251 = vsub.f32 %v6210, %v6247
      %v6252 = vsub.f32 %v6211, %v6248
      %v6253 = vsub.f32 %v6212, %v6245
      %v6254 = vsub.f32 %v6213, %v6246
      %v6255 = vsub.f32 %v6214, %v6247
      %v6256 = vsub.f32 %v6215, %v6248
      %v6257 = vmul.f32 %v6249, %v6249
      %v6258 = vmul.f32 %v6250, %v6250
      %v6259 = vmul.f32 %v6251, %v6251
      %v6260 = vmul.f32 %v6252, %v6252
      %v6261 = vmul.f32 %v6253, %v6253
      %v6262 = vmul.f32 %v6254, %v6254
      %v6263 = vmul.f32 %v6255, %v6255
      %v6264 = vmul.f32 %v6256, %v6256
      %v6265 = vadd.f32 %v6257, %v6261
      %v6266 = vrot.slane %v6265, 4
      %v6267 = vadd.f32 %v6265, %v6266
      %v6268 = vrot.slane %v6267, 2
      %v6269 = vadd.f32 %v6267, %v6268
      %v6270 = vrot.slane %v6269, 1
      %v6271 = vadd.f32 %v6269, %v6270
      %v6272 = vadd.f32 %v6258, %v6262
      %v6273 = vrot.slane %v6272, 4
      %v6274 = vadd.f32 %v6272, %v6273
      %v6275 = vrot.slane %v6274, 2
      %v6276 = vadd.f32 %v6274, %v6275
      %v6277 = vrot.slane %v6276, 1
      %v6278 = vadd.f32 %v6276, %v6277
      %v6279 = vadd.f32 %v6259, %v6263
      %v6280 = vrot.slane %v6279, 4
      %v6281 = vadd.f32 %v6279, %v6280
      %v6282 = vrot.slane %v6281, 2
      %v6283 = vadd.f32 %v6281, %v6282
      %v6284 = vrot.slane %v6283, 1
      %v6285 = vadd.f32 %v6283, %v6284
      %v6286 = vadd.f32 %v6260, %v6264
      %v6287 = vrot.slane %v6286, 4
      %v6288 = vadd.f32 %v6286, %v6287
      %v6289 = vrot.slane %v6288, 2
      %v6290 = vadd.f32 %v6288, %v6289
      %v6291 = vrot.slane %v6290, 1
      %v6292 = vadd.f32 %v6290, %v6291
      %v6293 = vmul.f32 %v6271, %v6244
      %v6294 = vmul.f32 %v6278, %v6244
      %v6295 = vmul.f32 %v6285, %v6244
      %v6296 = vmul.f32 %v6292, %v6244
      %v6297 = vadd.f32 %v6293, 1e-08
      %v6298 = vadd.f32 %v6294, 1e-08
      %v6299 = vadd.f32 %v6295, 1e-08
      %v6300 = vadd.f32 %v6296, 1e-08
      %v6301 = vrsqrt.pop %v6297
      %v6302 = vrsqrt.pop %v6298
      %v6303 = vrsqrt.pop %v6299
      %v6304 = vrsqrt.pop %v6300
      %v6305 = vmul.f32 %v6249, %v6301
      %v6306 = vmul.f32 %v6250, %v6302
      %v6307 = vmul.f32 %v6251, %v6303
      %v6308 = vmul.f32 %v6252, %v6304
      %v6309 = vmul.f32 %v6253, %v6301
      %v6310 = vmul.f32 %v6254, %v6302
      %v6311 = vmul.f32 %v6255, %v6303
      %v6312 = vmul.f32 %v6256, %v6304
      %v6313 = vadd.f32 %v4177, 1.0
      %v6314 = vadd.f32 %v4178, 1.0
      %v6315 = vadd.f32 %v4179, 1.0
      %v6316 = vadd.f32 %v4180, 1.0
      %v6317 = vlaneseq
      %v6318 = vshrl.u32 %v6317, 7
      %v6319 = vsub.s32 0, %v6318
      %v6320 = vrot.slane %v6313, %v6319
      %v6321 = vlaneseq
      %v6322 = vshrl.u32 %v6321, 7
      %v6323 = vsub.s32 0, %v6322
      %v6324 = vrot.slane %v6314, %v6323
      %v6325 = vlaneseq
      %v6326 = vshrl.u32 %v6325, 7
      %v6327 = vsub.s32 0, %v6326
      %v6328 = vrot.slane %v6315, %v6327
      %v6329 = vlaneseq
      %v6330 = vshrl.u32 %v6329, 7
      %v6331 = vsub.s32 0, %v6330
      %v6332 = vrot.slane %v6316, %v6331
      %v6333 = vmul.f32 %v6305, %v6320
      %v6334 = vmul.f32 %v6306, %v6324
      %v6335 = vmul.f32 %v6307, %v6328
      %v6336 = vmul.f32 %v6308, %v6332
      %v6337 = vmul.f32 %v6309, %v6320
      %v6338 = vmul.f32 %v6310, %v6324
      %v6339 = vmul.f32 %v6311, %v6328
      %v6340 = vmul.f32 %v6312, %v6332
      %v6341 = vlaneseq
      %v6342 = vshrl.u32 %v6341, 7
      %v6343 = vsub.s32 0, %v6342
      %v6344 = vrot.slane %v4181, %v6343
      %v6345 = vlaneseq
      %v6346 = vshrl.u32 %v6345, 7
      %v6347 = vsub.s32 0, %v6346
      %v6348 = vrot.slane %v4182, %v6347
      %v6349 = vlaneseq
      %v6350 = vshrl.u32 %v6349, 7
      %v6351 = vsub.s32 0, %v6350
      %v6352 = vrot.slane %v4183, %v6351
      %v6353 = vlaneseq
      %v6354 = vshrl.u32 %v6353, 7
      %v6355 = vsub.s32 0, %v6354
      %v6356 = vrot.slane %v4184, %v6355
      %v6357 = vadd.f32 %v6333, %v6344
      %v6358 = vadd.f32 %v6334, %v6348
      %v6359 = vadd.f32 %v6335, %v6352
      %v6360 = vadd.f32 %v6336, %v6356
      %v6361 = vadd.f32 %v6337, %v6344
      %v6362 = vadd.f32 %v6338, %v6348
      %v6363 = vadd.f32 %v6339, %v6352
      %v6364 = vadd.f32 %v6340, %v6356
      %6365 = vst [vmem:[%s298] sm:$0xff] %v6357
      %6366 = vst [vmem:[%s298 + $0x8] sm:$0xff] %v6358
      %6367 = vst [vmem:[%s298 + $0x10] sm:$0xff] %v6359
      %6368 = vst [vmem:[%s298 + $0x18] sm:$0xff] %v6360
      %6369 = vst [vmem:[%s298 + $0x20] sm:$0xff] %v6361
      %6370 = vst [vmem:[%s298 + $0x28] sm:$0xff] %v6362
      %6371 = vst [vmem:[%s298 + $0x30] sm:$0xff] %v6363
      %6372 = vst [vmem:[%s298 + $0x38] sm:$0xff] %v6364
      %p6373 = scmp.lt.s32.totalorder %s18, 1
      %s6374 = scalar_select %p6373, %s18, 1
      %s6375 = smul.addr %s6374, 8
      %s6376 = smul.addr %s6375, 8
      %s6377 = scalar_lea.vmem %s7, %s6376
      // Predicated region
      $region49: #{layer_epilogue.1} parent=47 // pred_check
        %p6378 = pneg %p193
      $region50: #{layer_epilogue.1} parent=47 // pred_check_branch
        %6380 = sbr.rel (%p6378) target = $region52
      $region51: #{layer_epilogue.1} parent=47 // pred_region
        _
      $region52: #{layer_epilogue.1} parent=47 // pred_fallthru
        _
    $region48: #{layer_epilogue.1} parent=5 // pred_fallthru
      _
    %p6381 = scmp.le.s32.totalorder 2, %s13
    // Predicated region
    $region53: #{layer_epilogue.1} parent=5 // pred_check
      %p6382 = pneg %p6381
    $region54: #{layer_epilogue.1} parent=5 // pred_check_branch
      %6384 = sbr.rel (%p6382) target = $region56
    $region55: #{layer_epilogue.1} parent=5 // pred_region
      %s6385 = ssub.s32 %s13, 2
      // Predicated region
      $region57: #{layer_epilogue.1} parent=55 // pred_check
        %p6386 = pneg %p199
      $region58: #{layer_epilogue.1} parent=55 // pred_check_branch
        %6388 = sbr.rel (%p6386) target = $region60
      $region59: #{layer_epilogue.1} parent=55 // pred_region
        %p6389 = scmp.lt.s32.totalorder %s19, 1
        %s6390 = scalar_select %p6389, %s19, 1
        %s6391 = smul.addr %s6390, 8
        %s6392 = smul.addr %s6391, 8
        %s6393 = scalar_lea.vmem %s7, %s6392
      $region60: #{layer_epilogue.1} parent=55 // pred_fallthru
        _
    $region56: #{layer_epilogue.1} parent=5 // pred_fallthru
      _
  $region6: #{layer_epilogue.1} parent=0 // loop_footer
    %s17 = sadd.s32 1, %s13
  $region7: #{layer_epilogue.1} parent=0 // loop_footer_branch
    %12 = sbr.rel target = $region3
  $region8: #{layer_epilogue.1} parent=0 // loop_exit
    _

</llo_original>
